<compile_context>
chip_gen: v6e
topology: v6e:2x2x1
jax: 0.10.0
libtpu: 0.0.40
codegen_flags: <defaults>
</compile_context>

<pallas_src>
import functools

import jax
import jax.numpy as jnp
from jax.experimental import pallas as pl
from jax.experimental.pallas import tpu as pltpu


def _resblock_kernel(W, cin, cmid, cout, b_blk, project, *refs):
    if project:
        x_ref, masks_ref, pp_ref, w1_ref, w2_ref, w3_ref, ws_ref, o_ref = refs
    else:
        x_ref, masks_ref, pp_ref, w1_ref, w2_ref, w3_ref, o_ref = refs

    HW = x_ref.shape[-1]
    cdt = w1_ref.dtype                       # MXU operand dtype (bf16 default)
    zero = jnp.zeros((), cdt)

    # Packed per-channel params (columns: s1, t1, b1f, b2f, b3, bs).
    s1 = pp_ref[0:cin, 0:1]
    t1 = pp_ref[0:cin, 1:2]
    b1 = pp_ref[0:cmid, 2:3]
    b2 = pp_ref[0:cmid, 3:4]
    b3 = pp_ref[0:cout, 4:5]

    # Host-precomputed boundary masks as (1, HW) booleans (sublane broadcast
    # inside jnp.where).  No in-kernel iota / % / // on full slabs.
    m_cm = masks_ref[0:1, :] > 0.5           # x - 1 >= 0      (dx = -1 valid)
    m_cp = masks_ref[1:2, :] > 0.5           # x + 1 <  W      (dx = +1 valid)
    m_rm = masks_ref[2:3, :] > 0.5           # y - 1 >= 0      (dy = -1 valid)
    m_rp = masks_ref[3:4, :] > 0.5           # y + 1 <  H      (dy = +1 valid)

    # Resident weights, loaded once per grid step.
    w1 = w1_ref[...]
    w3 = w3_ref[...]
    w2 = [w2_ref[k] for k in range(9)]       # k = (dy+1)*3 + (dx+1)
    if project:
        ws = ws_ref[...]
        bs = pp_ref[0:cout, 5:6]

    for b in range(b_blk):                   # static, small block of images
        x = x_ref[b]                         # (Cin, HW) f32, spatial on lanes

        # BN1 + ReLU (f32 VPU math).
        h1 = jnp.maximum(x * s1 + t1, 0.0)

        # conv1 (1x1, BN2 folded) + ReLU: (Cmid, Cin) @ (Cin, HW) on the MXU.
        y1 = jnp.dot(w1, h1.astype(cdt), preferred_element_type=jnp.float32) + b1
        h2 = jnp.maximum(y1, 0.0)            # (Cmid, HW) f32

        # conv2 (3x3, padding=1, BN3 folded).  Single hoisted cast, 2 row-rolls
        # + per-row +/-1 column rolls (XLU), 8 broadcast masks, 9 MXU matmuls
        # accumulated in f32 (center tap initializes the accumulator).
        h2c = h2.astype(cdt)
        rowm = jnp.where(m_rm, pltpu.roll(h2c, W, axis=1), zero)        # dy=-1
        rowp = jnp.where(m_rp, pltpu.roll(h2c, HW - W, axis=1), zero)   # dy=+1

        def dotw(k, tap):
            return jnp.dot(w2[k], tap, preferred_element_type=jnp.float32)

        y2 = dotw(4, h2c)                                               # dy=0, dx=0
        y2 = y2 + dotw(3, jnp.where(m_cm, pltpu.roll(h2c, 1, axis=1), zero))
        y2 = y2 + dotw(5, jnp.where(m_cp, pltpu.roll(h2c, HW - 1, axis=1), zero))
        y2 = y2 + dotw(1, rowm)
        y2 = y2 + dotw(0, jnp.where(m_cm, pltpu.roll(rowm, 1, axis=1), zero))
        y2 = y2 + dotw(2, jnp.where(m_cp, pltpu.roll(rowm, HW - 1, axis=1), zero))
        y2 = y2 + dotw(7, rowp)
        y2 = y2 + dotw(6, jnp.where(m_cm, pltpu.roll(rowp, 1, axis=1), zero))
        y2 = y2 + dotw(8, jnp.where(m_cp, pltpu.roll(rowp, HW - 1, axis=1), zero))

        h3 = jnp.maximum(y2 + b2, 0.0)

        # conv3 (1x1): (Cout, Cmid) @ (Cmid, HW).
        y3 = jnp.dot(w3, h3.astype(cdt), preferred_element_type=jnp.float32) + b3

        if project:                          # real 1x1 projection skip
            skip = jnp.dot(ws, x.astype(cdt), preferred_element_type=jnp.float32) + bs
        else:                                # identity skip: no matmul
            skip = x

        o_ref[b] = (skip + y3).astype(o_ref.dtype)   # lane-dense unmasked store


def prepare_params(p, cin, cmid, cout, compute_dtype):
    """Fold BN2 into conv1, BN3 into conv2; transpose weights for the
    channels-on-sublane layout; pack all per-channel vectors into one slab."""
    w1f = p["w1"] * p["s2"][None, :]                        # (Cin, Cmid)
    b1f = p["b1"] * p["s2"] + p["t2"]                       # (Cmid,)
    w2f = p["w2"] * p["s3"][None, None, None, :]            # (3,3,Cmid,Cmid) HWIO
    b2f = p["b2"] * p["s3"] + p["t3"]                       # (Cmid,)

    w1t = jnp.transpose(w1f).astype(compute_dtype)                       # (Cmid, Cin)
    w2t9 = jnp.transpose(w2f, (0, 1, 3, 2)).reshape(9, cmid, cmid)       # [k, o, i]
    w2t9 = w2t9.astype(compute_dtype)
    w3t = jnp.transpose(p["w3"]).astype(compute_dtype)                   # (Cout, Cmid)

    cmax = max(cin, cmid, cout)
    pp = jnp.zeros((cmax, 8), jnp.float32)
    pp = pp.at[:cin, 0].set(p["s1"]).at[:cin, 1].set(p["t1"])
    pp = pp.at[:cmid, 2].set(b1f).at[:cmid, 3].set(b2f)
    pp = pp.at[:cout, 4].set(p["b3"])

    wst = None
    if "ws" in p:
        wst = jnp.transpose(p["ws"]).astype(compute_dtype)               # (Cout, Cin)
        pp = pp.at[:cout, 5].set(p["bs"])
    return pp, w1t, w2t9, w3t, wst


def _make_boundary_masks(H, W):
    """4 single-term boundary masks for the 3x3 conv, as an (8, H*W) f32 slab
    (rows: x>=1, x<=W-2, y>=1, y<=H-2; remaining rows zero)."""
    HW = H * W
    lane = jnp.arange(HW, dtype=jnp.int32)
    xpos = lane % W
    masks = jnp.zeros((8, HW), jnp.float32)
    masks = masks.at[0].set((xpos >= 1).astype(jnp.float32))
    masks = masks.at[1].set((xpos <= W - 2).astype(jnp.float32))
    masks = masks.at[2].set((lane >= W).astype(jnp.float32))
    masks = masks.at[3].set((lane < HW - W).astype(jnp.float32))
    return masks


def _nbytes(a):
    return int(a.size) * a.dtype.itemsize


def _vmem_capacity_bytes():
    try:
        return int(pltpu.get_tpu_info().vmem_capacity_bytes)
    except Exception:
        return 64 << 20        # conservative (v7x per-TC VMEM)


def resblock_apply(x_nchw, p, *, compute_dtype=jnp.bfloat16):
    N, Cin, H, W = x_nchw.shape
    Cmid = p["w1"].shape[-1]
    Cout = p["w3"].shape[-1]
    HW = H * W
    project = "ws" in p

    pp, w1t, w2t9, w3t, wst = prepare_params(p, Cin, Cmid, Cout, compute_dtype)
    masks = _make_boundary_masks(H, W)
    x = x_nchw.reshape(N, Cin, HW)           # NCHW -> (N, C, H*W): pure reshape

    # Block small images B_blk per grid step to amortize per-step overhead.
    per_img_io = (Cin + Cout) * HW * 4
    b_blk = 1
    small_io_budget = 1 << 20                # 1 MiB of per-image pipelined I/O
    if per_img_io <= small_io_budget:
        cap = max(1, min(8, small_io_budget // max(per_img_io, 1)))
        for d in range(min(cap, N), 0, -1):
            if N % d == 0:
                b_blk = d
                break
    grid = (N // b_blk,)

    # Explicit VMEM budget from the per-step footprint (with headroom),
    # capped below physical VMEM of the detected chip generation.
    const_bytes = (_nbytes(pp) + _nbytes(masks) + _nbytes(w1t) + _nbytes(w2t9)
                   + _nbytes(w3t) + (_nbytes(wst) if project else 0))
    io_block = 2 * b_blk * (Cin + Cout) * HW * 4            # double-buffered I/O
    interm = (Cin + Cout + 6 * Cmid) * HW * 4               # live intermediates
    vmem_est = io_block + 2 * const_bytes + interm + (1 << 20)
    vmem_cap = _vmem_capacity_bytes()
    vmem_limit = int(min(vmem_cap * 7 // 8, max(2 * vmem_est, 32 << 20)))

    kernel = functools.partial(_resblock_kernel, W, Cin, Cmid, Cout, b_blk, project)

    def build_and_call(use_buffered):
        extra = {"pipeline_mode": pl.Buffered(1)} if use_buffered else {}

        def const_spec(shape):               # resident across grid, const index
            nd = len(shape)
            return pl.BlockSpec(shape, lambda n, _nd=nd: (0,) * _nd, **extra)

        in_specs = [
            pl.BlockSpec((b_blk, Cin, HW), lambda n: (n, 0, 0)),
            const_spec(masks.shape), const_spec(pp.shape),
            const_spec(w1t.shape), const_spec(w2t9.shape), const_spec(w3t.shape),
        ]
        args = [x, masks, pp, w1t, w2t9, w3t]
        if project:
            in_specs.append(const_spec(wst.shape))
            args.append(wst)

        out = pl.pallas_call(
            kernel,
            out_shape=jax.ShapeDtypeStruct((N, Cout, HW), x_nchw.dtype),
            grid=grid,
            in_specs=in_specs,
            out_specs=pl.BlockSpec((b_blk, Cout, HW), lambda n: (n, 0, 0)),
            compiler_params=pltpu.CompilerParams(
                dimension_semantics=("parallel",),   # shard batch across TCs
                vmem_limit_bytes=vmem_limit,
            ),
        )(*args)
        return jax.block_until_ready(out)

    try:
        out = build_and_call(True)           # single-buffered constant operands
    except Exception:
        out = build_and_call(False)          # fallback: default pipelining
    return out.reshape(N, Cout, H, W)


def make_params(key, cin, cout):
    """Deterministic synthetic parameters (BN folded to per-channel scale/shift,
    1x1 conv weights as (Cin, Cout), 3x3 as HWIO)."""
    cmid = cout // 2
    eps = 1e-5
    ks = list(jax.random.split(key, 32))

    def nrm(shape, scale=0.1):
        return scale * jax.random.normal(ks.pop(), shape, jnp.float32)

    def bn_affine(c):
        gamma = 1.0 + nrm((c,))
        beta = nrm((c,))
        mean = nrm((c,))
        var = 0.5 + jnp.abs(nrm((c,)))
        scale = gamma * jax.lax.rsqrt(var + eps)
        shift = beta - mean * scale
        return scale, shift

    p = {}
    p["s1"], p["t1"] = bn_affine(cin)
    p["w1"] = nrm((cin, cmid), 0.3)
    p["b1"] = nrm((cmid,))
    p["s2"], p["t2"] = bn_affine(cmid)
    p["w2"] = nrm((3, 3, cmid, cmid), 0.3)
    p["b2"] = nrm((cmid,))
    p["s3"], p["t3"] = bn_affine(cmid)
    p["w3"] = nrm((cmid, cout), 0.3)
    p["b3"] = nrm((cout,))
    if cin != cout:
        p["ws"] = nrm((cin, cout), 0.3)
        p["bs"] = nrm((cout,))
    return p


def resblock_ref(x_nchw, p):
    """Pure-JAX f32 reference mirroring the PyTorch forward (BN in eval mode)."""
    x = jnp.transpose(x_nchw, (0, 2, 3, 1))  # NHWC

    def bn_relu(v, s, t):
        return jnp.maximum(v * s + t, 0.0)

    h = bn_relu(x, p["s1"], p["t1"])
    h = jnp.einsum("nhwc,cd->nhwd", h, p["w1"], precision="highest") + p["b1"]
    h = bn_relu(h, p["s2"], p["t2"])
    h = jax.lax.conv_general_dilated(
        h, p["w2"], window_strides=(1, 1), padding="SAME",
        dimension_numbers=("NHWC", "HWIO", "NHWC"),
        precision=jax.lax.Precision.HIGHEST) + p["b2"]
    h = bn_relu(h, p["s3"], p["t3"])
    h = jnp.einsum("nhwc,cd->nhwd", h, p["w3"], precision="highest") + p["b3"]
    if "ws" in p:
        skip = jnp.einsum("nhwc,cd->nhwd", x, p["ws"], precision="highest") + p["bs"]
    else:
        skip = x
    return jnp.transpose(skip + h, (0, 3, 1, 2))


def resblock_ref_quantized(x_nchw, p, compute_dtype):
    """Reference matching the kernel's folding + low-precision MXU-operand casts
    (f32 accumulation), built from trusted lax/jnp ops."""
    N, Cin, H, W = x_nchw.shape
    Cmid = p["w1"].shape[-1]
    Cout = p["w3"].shape[-1]
    pp, w1t, w2t9, w3t, wst = prepare_params(p, Cin, Cmid, Cout, compute_dtype)

    def q(v):
        return v.astype(compute_dtype).astype(jnp.float32)

    w1f = q(w1t).T                                            # (Cin, Cmid)
    w3f = q(w3t).T                                            # (Cmid, Cout)
    w2f = jnp.transpose(q(w2t9).reshape(3, 3, Cmid, Cmid), (0, 1, 3, 2))  # HWIO
    b1f, b2f = pp[:Cmid, 2], pp[:Cmid, 3]
    b3 = pp[:Cout, 4]

    x = jnp.transpose(x_nchw, (0, 2, 3, 1))                   # NHWC
    h = jnp.maximum(x * p["s1"] + p["t1"], 0.0)
    h = jnp.einsum("nhwc,cd->nhwd", q(h), w1f, precision="highest") + b1f
    h = jnp.maximum(h, 0.0)
    h = jax.lax.conv_general_dilated(
        q(h), w2f, window_strides=(1, 1), padding="SAME",
        dimension_numbers=("NHWC", "HWIO", "NHWC"),
        precision=jax.lax.Precision.HIGHEST) + b2f
    h = jnp.maximum(h, 0.0)
    h = jnp.einsum("nhwc,cd->nhwd", q(h), w3f, precision="highest") + b3
    if "ws" in p:
        skip = jnp.einsum("nhwc,cd->nhwd", q(x), q(wst).T,
                          precision="highest") + pp[:Cout, 5]
    else:
        skip = x
    return jnp.transpose(skip + h, (0, 3, 1, 2))


if __name__ == "__main__":
    key = jax.random.PRNGKey(0)
    kx, kp, kx2, kp2 = jax.random.split(key, 4)

    # Projection-skip case (Cin != Cout).
    N, Cin, Cout, H, W = 2, 4, 8, 16, 16
    x = jax.random.normal(kx, (N, Cin, H, W), jnp.float32)
    params = make_params(kp, Cin, Cout)

    # 1) f32 compute path vs PyTorch-semantics reference (tight check).
    out_f32 = jax.block_until_ready(resblock_apply(x, params, compute_dtype=jnp.float32))
    assert out_f32.shape == (N, Cout, H, W)
    ref = resblock_ref(x, params)
    if not jnp.allclose(out_f32, ref, atol=2e-3, rtol=2e-3):
        err = float(jnp.max(jnp.abs(out_f32 - ref)))
        raise AssertionError(f"f32 kernel mismatch vs reference, max abs err = {err}")

    # 2) default bf16 MXU-operand path vs matching quantized reference.
    out_bf16 = jax.block_until_ready(resblock_apply(x, params))
    ref_q = resblock_ref_quantized(x, params, jnp.bfloat16)
    if not jnp.allclose(out_bf16, ref_q, atol=5e-3, rtol=5e-3):
        err = float(jnp.max(jnp.abs(out_bf16 - ref_q)))
        raise AssertionError(f"bf16 kernel mismatch vs quantized reference, max abs err = {err}")

    # 3) identity-skip specialization (Cin == Cout): no projection matmul.
    x2 = jax.random.normal(kx2, (N, Cout, H, W), jnp.float32)
    params2 = make_params(kp2, Cout, Cout)
    out_id = jax.block_until_ready(resblock_apply(x2, params2, compute_dtype=jnp.float32))
    ref_id = resblock_ref(x2, params2)
    if not jnp.allclose(out_id, ref_id, atol=2e-3, rtol=2e-3):
        err = float(jnp.max(jnp.abs(out_id - ref_id)))
        raise AssertionError(f"identity-skip kernel mismatch vs reference, max abs err = {err}")

    print("KERNEL_OK")
</pallas_src>

<mosaic_0001>
module attributes {stable_mosaic.version = 11 : i64} {
  func.func @_resblock_kernel(%arg0: i32, %arg1: memref<2x4x256xf32, #tpu.memory_space<vmem>>, %arg2: memref<8x256xf32, #tpu.memory_space<vmem>>, %arg3: memref<8x8xf32, #tpu.memory_space<vmem>>, %arg4: memref<4x4xf32, #tpu.memory_space<vmem>>, %arg5: memref<9x4x4xf32, #tpu.memory_space<vmem>>, %arg6: memref<8x4xf32, #tpu.memory_space<vmem>>, %arg7: memref<8x4xf32, #tpu.memory_space<vmem>>, %arg8: memref<2x8x256xf32, #tpu.memory_space<vmem>>) attributes {dimension_semantics = [#tpu.dimension_semantics<parallel>], iteration_bounds = array<i64: 1>, scalar_prefetch = 0 : i64, scratch_operands = 0 : i64, tpu.core_type = #tpu.core_type<tc>, window_params = [{transform_indices = @transform_0, window_bounds = array<i64: 2, 4, 256>}, {pipeline_mode = #tpu.pipeline_mode<synchronous>, transform_indices = @transform_1, window_bounds = array<i64: 8, 256>}, {pipeline_mode = #tpu.pipeline_mode<synchronous>, transform_indices = @transform_2, window_bounds = array<i64: 8, 8>}, {pipeline_mode = #tpu.pipeline_mode<synchronous>, transform_indices = @transform_3, window_bounds = array<i64: 4, 4>}, {pipeline_mode = #tpu.pipeline_mode<synchronous>, transform_indices = @transform_4, window_bounds = array<i64: 9, 4, 4>}, {pipeline_mode = #tpu.pipeline_mode<synchronous>, transform_indices = @transform_5, window_bounds = array<i64: 8, 4>}, {pipeline_mode = #tpu.pipeline_mode<synchronous>, transform_indices = @transform_6, window_bounds = array<i64: 8, 4>}, {transform_indices = @transform_7, window_bounds = array<i64: 2, 8, 256>}]} {
    %c0 = arith.constant 0 : index
    %c0_0 = arith.constant 0 : index
    %0 = vector.load %arg3[%c0, %c0_0] : memref<8x8xf32, #tpu.memory_space<vmem>>, vector<4x1xf32>
    %c0_1 = arith.constant 0 : index
    %c1 = arith.constant 1 : index
    %1 = vector.load %arg3[%c0_1, %c1] : memref<8x8xf32, #tpu.memory_space<vmem>>, vector<4x1xf32>
    %c0_2 = arith.constant 0 : index
    %c2 = arith.constant 2 : index
    %2 = vector.load %arg3[%c0_2, %c2] : memref<8x8xf32, #tpu.memory_space<vmem>>, vector<4x1xf32>
    %c0_3 = arith.constant 0 : index
    %c3 = arith.constant 3 : index
    %3 = vector.load %arg3[%c0_3, %c3] : memref<8x8xf32, #tpu.memory_space<vmem>>, vector<4x1xf32>
    %c0_4 = arith.constant 0 : index
    %c4 = arith.constant 4 : index
    %4 = vector.load %arg3[%c0_4, %c4] : memref<8x8xf32, #tpu.memory_space<vmem>>, vector<8x1xf32>
    %c0_5 = arith.constant 0 : index
    %c0_6 = arith.constant 0 : index
    %5 = vector.load %arg2[%c0_5, %c0_6] : memref<8x256xf32, #tpu.memory_space<vmem>>, vector<1x256xf32>
    %cst = arith.constant 5.000000e-01 : f32
    %6 = vector.broadcast %cst : f32 to vector<1x256xf32>
    %7 = arith.cmpf ogt, %5, %6 : vector<1x256xf32>
    %c1_7 = arith.constant 1 : index
    %c0_8 = arith.constant 0 : index
    %8 = vector.load %arg2[%c1_7, %c0_8] : memref<8x256xf32, #tpu.memory_space<vmem>>, vector<1x256xf32>
    %cst_9 = arith.constant 5.000000e-01 : f32
    %9 = vector.broadcast %cst_9 : f32 to vector<1x256xf32>
    %10 = arith.cmpf ogt, %8, %9 : vector<1x256xf32>
    %c2_10 = arith.constant 2 : index
    %c0_11 = arith.constant 0 : index
    %11 = vector.load %arg2[%c2_10, %c0_11] : memref<8x256xf32, #tpu.memory_space<vmem>>, vector<1x256xf32>
    %cst_12 = arith.constant 5.000000e-01 : f32
    %12 = vector.broadcast %cst_12 : f32 to vector<1x256xf32>
    %13 = arith.cmpf ogt, %11, %12 : vector<1x256xf32>
    %c3_13 = arith.constant 3 : index
    %c0_14 = arith.constant 0 : index
    %14 = vector.load %arg2[%c3_13, %c0_14] : memref<8x256xf32, #tpu.memory_space<vmem>>, vector<1x256xf32>
    %cst_15 = arith.constant 5.000000e-01 : f32
    %15 = vector.broadcast %cst_15 : f32 to vector<1x256xf32>
    %16 = arith.cmpf ogt, %14, %15 : vector<1x256xf32>
    %c0_16 = arith.constant 0 : index
    %c0_17 = arith.constant 0 : index
    %17 = vector.load %arg4[%c0_16, %c0_17] : memref<4x4xf32, #tpu.memory_space<vmem>>, vector<4x4xf32>
    %c0_18 = arith.constant 0 : index
    %c0_19 = arith.constant 0 : index
    %18 = vector.load %arg6[%c0_18, %c0_19] : memref<8x4xf32, #tpu.memory_space<vmem>>, vector<8x4xf32>
    %c0_20 = arith.constant 0 : index
    %c0_21 = arith.constant 0 : index
    %c0_22 = arith.constant 0 : index
    %19 = vector.load %arg5[%c0_20, %c0_21, %c0_22] : memref<9x4x4xf32, #tpu.memory_space<vmem>>, vector<1x4x4xf32>
    %20 = vector.shape_cast %19 : vector<1x4x4xf32> to vector<4x4xf32>
    %c1_23 = arith.constant 1 : index
    %c0_24 = arith.constant 0 : index
    %c0_25 = arith.constant 0 : index
    %21 = vector.load %arg5[%c1_23, %c0_24, %c0_25] : memref<9x4x4xf32, #tpu.memory_space<vmem>>, vector<1x4x4xf32>
    %22 = vector.shape_cast %21 : vector<1x4x4xf32> to vector<4x4xf32>
    %c2_26 = arith.constant 2 : index
    %c0_27 = arith.constant 0 : index
    %c0_28 = arith.constant 0 : index
    %23 = vector.load %arg5[%c2_26, %c0_27, %c0_28] : memref<9x4x4xf32, #tpu.memory_space<vmem>>, vector<1x4x4xf32>
    %24 = vector.shape_cast %23 : vector<1x4x4xf32> to vector<4x4xf32>
    %c3_29 = arith.constant 3 : index
    %c0_30 = arith.constant 0 : index
    %c0_31 = arith.constant 0 : index
    %25 = vector.load %arg5[%c3_29, %c0_30, %c0_31] : memref<9x4x4xf32, #tpu.memory_space<vmem>>, vector<1x4x4xf32>
    %26 = vector.shape_cast %25 : vector<1x4x4xf32> to vector<4x4xf32>
    %c4_32 = arith.constant 4 : index
    %c0_33 = arith.constant 0 : index
    %c0_34 = arith.constant 0 : index
    %27 = vector.load %arg5[%c4_32, %c0_33, %c0_34] : memref<9x4x4xf32, #tpu.memory_space<vmem>>, vector<1x4x4xf32>
    %28 = vector.shape_cast %27 : vector<1x4x4xf32> to vector<4x4xf32>
    %c5 = arith.constant 5 : index
    %c0_35 = arith.constant 0 : index
    %c0_36 = arith.constant 0 : index
    %29 = vector.load %arg5[%c5, %c0_35, %c0_36] : memref<9x4x4xf32, #tpu.memory_space<vmem>>, vector<1x4x4xf32>
    %30 = vector.shape_cast %29 : vector<1x4x4xf32> to vector<4x4xf32>
    %c6 = arith.constant 6 : index
    %c0_37 = arith.constant 0 : index
    %c0_38 = arith.constant 0 : index
    %31 = vector.load %arg5[%c6, %c0_37, %c0_38] : memref<9x4x4xf32, #tpu.memory_space<vmem>>, vector<1x4x4xf32>
    %32 = vector.shape_cast %31 : vector<1x4x4xf32> to vector<4x4xf32>
    %c7 = arith.constant 7 : index
    %c0_39 = arith.constant 0 : index
    %c0_40 = arith.constant 0 : index
    %33 = vector.load %arg5[%c7, %c0_39, %c0_40] : memref<9x4x4xf32, #tpu.memory_space<vmem>>, vector<1x4x4xf32>
    %34 = vector.shape_cast %33 : vector<1x4x4xf32> to vector<4x4xf32>
    %c8 = arith.constant 8 : index
    %c0_41 = arith.constant 0 : index
    %c0_42 = arith.constant 0 : index
    %35 = vector.load %arg5[%c8, %c0_41, %c0_42] : memref<9x4x4xf32, #tpu.memory_space<vmem>>, vector<1x4x4xf32>
    %36 = vector.shape_cast %35 : vector<1x4x4xf32> to vector<4x4xf32>
    %c0_43 = arith.constant 0 : index
    %c0_44 = arith.constant 0 : index
    %37 = vector.load %arg7[%c0_43, %c0_44] : memref<8x4xf32, #tpu.memory_space<vmem>>, vector<8x4xf32>
    %c0_45 = arith.constant 0 : index
    %c5_46 = arith.constant 5 : index
    %38 = vector.load %arg3[%c0_45, %c5_46] : memref<8x8xf32, #tpu.memory_space<vmem>>, vector<8x1xf32>
    %c0_47 = arith.constant 0 : index
    %c0_48 = arith.constant 0 : index
    %c0_49 = arith.constant 0 : index
    %39 = vector.load %arg1[%c0_47, %c0_48, %c0_49] : memref<2x4x256xf32, #tpu.memory_space<vmem>>, vector<1x4x256xf32>
    %40 = vector.shape_cast %39 : vector<1x4x256xf32> to vector<4x256xf32>
    %41 = vector.broadcast %0 : vector<4x1xf32> to vector<4x256xf32>
    %42 = arith.mulf %40, %41 : vector<4x256xf32>
    %43 = vector.broadcast %1 : vector<4x1xf32> to vector<4x256xf32>
    %44 = arith.addf %42, %43 : vector<4x256xf32>
    %cst_50 = arith.constant 0.000000e+00 : f32
    %45 = vector.broadcast %cst_50 : f32 to vector<4x256xf32>
    %46 = arith.maximumf %44, %45 : vector<4x256xf32>
    %cst_51 = arith.constant dense<0.000000e+00> : vector<4x256xf32>
    %47 = tpu.matmul %17, %46, %cst_51 {dimension_numbers = #tpu.dot_dimension_numbers<[1], [0], [0], [1], [0, 0, 1, 1], [], []>} : vector<4x4xf32>, vector<4x256xf32>, vector<4x256xf32> -> vector<4x256xf32>
    %48 = vector.broadcast %2 : vector<4x1xf32> to vector<4x256xf32>
    %49 = arith.addf %47, %48 : vector<4x256xf32>
    %cst_52 = arith.constant 0.000000e+00 : f32
    %50 = vector.broadcast %cst_52 : f32 to vector<4x256xf32>
    %51 = arith.maximumf %49, %50 : vector<4x256xf32>
    %c16_i32 = arith.constant 16 : i32
    %52 = tpu.dynamic_rotate %51 by %c16_i32 dim 1 : vector<4x256xf32>, i32 -> vector<4x256xf32>
    %cst_53 = arith.constant 0.000000e+00 : f32
    %53 = vector.shape_cast %13 : vector<1x256xi1> to vector<1x256xi1>
    %54 = vector.broadcast %53 : vector<1x256xi1> to vector<4x256xi1>
    %55 = vector.broadcast %cst_53 : f32 to vector<4x256xf32>
    %56 = arith.select %54, %52, %55 : vector<4x256xi1>, vector<4x256xf32>
    %c240_i32 = arith.constant 240 : i32
    %57 = tpu.dynamic_rotate %51 by %c240_i32 dim 1 : vector<4x256xf32>, i32 -> vector<4x256xf32>
    %cst_54 = arith.constant 0.000000e+00 : f32
    %58 = vector.shape_cast %16 : vector<1x256xi1> to vector<1x256xi1>
    %59 = vector.broadcast %58 : vector<1x256xi1> to vector<4x256xi1>
    %60 = vector.broadcast %cst_54 : f32 to vector<4x256xf32>
    %61 = arith.select %59, %57, %60 : vector<4x256xi1>, vector<4x256xf32>
    %cst_55 = arith.constant dense<0.000000e+00> : vector<4x256xf32>
    %62 = tpu.matmul %28, %51, %cst_55 {dimension_numbers = #tpu.dot_dimension_numbers<[1], [0], [0], [1], [0, 0, 1, 1], [], []>} : vector<4x4xf32>, vector<4x256xf32>, vector<4x256xf32> -> vector<4x256xf32>
    %c1_i32 = arith.constant 1 : i32
    %63 = tpu.dynamic_rotate %51 by %c1_i32 dim 1 : vector<4x256xf32>, i32 -> vector<4x256xf32>
    %cst_56 = arith.constant 0.000000e+00 : f32
    %64 = vector.shape_cast %7 : vector<1x256xi1> to vector<1x256xi1>
    %65 = vector.broadcast %64 : vector<1x256xi1> to vector<4x256xi1>
    %66 = vector.broadcast %cst_56 : f32 to vector<4x256xf32>
    %67 = arith.select %65, %63, %66 : vector<4x256xi1>, vector<4x256xf32>
    %cst_57 = arith.constant dense<0.000000e+00> : vector<4x256xf32>
    %68 = tpu.matmul %26, %67, %cst_57 {dimension_numbers = #tpu.dot_dimension_numbers<[1], [0], [0], [1], [0, 0, 1, 1], [], []>} : vector<4x4xf32>, vector<4x256xf32>, vector<4x256xf32> -> vector<4x256xf32>
    %69 = arith.addf %62, %68 : vector<4x256xf32>
    %c255_i32 = arith.constant 255 : i32
    %70 = tpu.dynamic_rotate %51 by %c255_i32 dim 1 : vector<4x256xf32>, i32 -> vector<4x256xf32>
    %cst_58 = arith.constant 0.000000e+00 : f32
    %71 = vector.shape_cast %10 : vector<1x256xi1> to vector<1x256xi1>
    %72 = vector.broadcast %71 : vector<1x256xi1> to vector<4x256xi1>
    %73 = vector.broadcast %cst_58 : f32 to vector<4x256xf32>
    %74 = arith.select %72, %70, %73 : vector<4x256xi1>, vector<4x256xf32>
    %cst_59 = arith.constant dense<0.000000e+00> : vector<4x256xf32>
    %75 = tpu.matmul %30, %74, %cst_59 {dimension_numbers = #tpu.dot_dimension_numbers<[1], [0], [0], [1], [0, 0, 1, 1], [], []>} : vector<4x4xf32>, vector<4x256xf32>, vector<4x256xf32> -> vector<4x256xf32>
    %76 = arith.addf %69, %75 : vector<4x256xf32>
    %cst_60 = arith.constant dense<0.000000e+00> : vector<4x256xf32>
    %77 = tpu.matmul %22, %56, %cst_60 {dimension_numbers = #tpu.dot_dimension_numbers<[1], [0], [0], [1], [0, 0, 1, 1], [], []>} : vector<4x4xf32>, vector<4x256xf32>, vector<4x256xf32> -> vector<4x256xf32>
    %78 = arith.addf %76, %77 : vector<4x256xf32>
    %c1_i32_61 = arith.constant 1 : i32
    %79 = tpu.dynamic_rotate %56 by %c1_i32_61 dim 1 : vector<4x256xf32>, i32 -> vector<4x256xf32>
    %cst_62 = arith.constant 0.000000e+00 : f32
    %80 = vector.shape_cast %7 : vector<1x256xi1> to vector<1x256xi1>
    %81 = vector.broadcast %80 : vector<1x256xi1> to vector<4x256xi1>
    %82 = vector.broadcast %cst_62 : f32 to vector<4x256xf32>
    %83 = arith.select %81, %79, %82 : vector<4x256xi1>, vector<4x256xf32>
    %cst_63 = arith.constant dense<0.000000e+00> : vector<4x256xf32>
    %84 = tpu.matmul %20, %83, %cst_63 {dimension_numbers = #tpu.dot_dimension_numbers<[1], [0], [0], [1], [0, 0, 1, 1], [], []>} : vector<4x4xf32>, vector<4x256xf32>, vector<4x256xf32> -> vector<4x256xf32>
    %85 = arith.addf %78, %84 : vector<4x256xf32>
    %c255_i32_64 = arith.constant 255 : i32
    %86 = tpu.dynamic_rotate %56 by %c255_i32_64 dim 1 : vector<4x256xf32>, i32 -> vector<4x256xf32>
    %cst_65 = arith.constant 0.000000e+00 : f32
    %87 = vector.shape_cast %10 : vector<1x256xi1> to vector<1x256xi1>
    %88 = vector.broadcast %87 : vector<1x256xi1> to vector<4x256xi1>
    %89 = vector.broadcast %cst_65 : f32 to vector<4x256xf32>
    %90 = arith.select %88, %86, %89 : vector<4x256xi1>, vector<4x256xf32>
    %cst_66 = arith.constant dense<0.000000e+00> : vector<4x256xf32>
    %91 = tpu.matmul %24, %90, %cst_66 {dimension_numbers = #tpu.dot_dimension_numbers<[1], [0], [0], [1], [0, 0, 1, 1], [], []>} : vector<4x4xf32>, vector<4x256xf32>, vector<4x256xf32> -> vector<4x256xf32>
    %92 = arith.addf %85, %91 : vector<4x256xf32>
    %cst_67 = arith.constant dense<0.000000e+00> : vector<4x256xf32>
    %93 = tpu.matmul %34, %61, %cst_67 {dimension_numbers = #tpu.dot_dimension_numbers<[1], [0], [0], [1], [0, 0, 1, 1], [], []>} : vector<4x4xf32>, vector<4x256xf32>, vector<4x256xf32> -> vector<4x256xf32>
    %94 = arith.addf %92, %93 : vector<4x256xf32>
    %c1_i32_68 = arith.constant 1 : i32
    %95 = tpu.dynamic_rotate %61 by %c1_i32_68 dim 1 : vector<4x256xf32>, i32 -> vector<4x256xf32>
    %cst_69 = arith.constant 0.000000e+00 : f32
    %96 = vector.shape_cast %7 : vector<1x256xi1> to vector<1x256xi1>
    %97 = vector.broadcast %96 : vector<1x256xi1> to vector<4x256xi1>
    %98 = vector.broadcast %cst_69 : f32 to vector<4x256xf32>
    %99 = arith.select %97, %95, %98 : vector<4x256xi1>, vector<4x256xf32>
    %cst_70 = arith.constant dense<0.000000e+00> : vector<4x256xf32>
    %100 = tpu.matmul %32, %99, %cst_70 {dimension_numbers = #tpu.dot_dimension_numbers<[1], [0], [0], [1], [0, 0, 1, 1], [], []>} : vector<4x4xf32>, vector<4x256xf32>, vector<4x256xf32> -> vector<4x256xf32>
    %101 = arith.addf %94, %100 : vector<4x256xf32>
    %c255_i32_71 = arith.constant 255 : i32
    %102 = tpu.dynamic_rotate %61 by %c255_i32_71 dim 1 : vector<4x256xf32>, i32 -> vector<4x256xf32>
    %cst_72 = arith.constant 0.000000e+00 : f32
    %103 = vector.shape_cast %10 : vector<1x256xi1> to vector<1x256xi1>
    %104 = vector.broadcast %103 : vector<1x256xi1> to vector<4x256xi1>
    %105 = vector.broadcast %cst_72 : f32 to vector<4x256xf32>
    %106 = arith.select %104, %102, %105 : vector<4x256xi1>, vector<4x256xf32>
    %cst_73 = arith.constant dense<0.000000e+00> : vector<4x256xf32>
    %107 = tpu.matmul %36, %106, %cst_73 {dimension_numbers = #tpu.dot_dimension_numbers<[1], [0], [0], [1], [0, 0, 1, 1], [], []>} : vector<4x4xf32>, vector<4x256xf32>, vector<4x256xf32> -> vector<4x256xf32>
    %108 = arith.addf %101, %107 : vector<4x256xf32>
    %109 = vector.broadcast %3 : vector<4x1xf32> to vector<4x256xf32>
    %110 = arith.addf %108, %109 : vector<4x256xf32>
    %cst_74 = arith.constant 0.000000e+00 : f32
    %111 = vector.broadcast %cst_74 : f32 to vector<4x256xf32>
    %112 = arith.maximumf %110, %111 : vector<4x256xf32>
    %cst_75 = arith.constant dense<0.000000e+00> : vector<8x256xf32>
    %113 = tpu.matmul %18, %112, %cst_75 {dimension_numbers = #tpu.dot_dimension_numbers<[1], [0], [0], [1], [0, 0, 1, 1], [], []>} : vector<8x4xf32>, vector<4x256xf32>, vector<8x256xf32> -> vector<8x256xf32>
    %114 = vector.broadcast %4 : vector<8x1xf32> to vector<8x256xf32>
    %115 = arith.addf %113, %114 : vector<8x256xf32>
    %cst_76 = arith.constant dense<0.000000e+00> : vector<8x256xf32>
    %116 = tpu.matmul %37, %40, %cst_76 {dimension_numbers = #tpu.dot_dimension_numbers<[1], [0], [0], [1], [0, 0, 1, 1], [], []>} : vector<8x4xf32>, vector<4x256xf32>, vector<8x256xf32> -> vector<8x256xf32>
    %117 = vector.broadcast %38 : vector<8x1xf32> to vector<8x256xf32>
    %118 = arith.addf %116, %117 : vector<8x256xf32>
    %119 = arith.addf %118, %115 : vector<8x256xf32>
    %c0_77 = arith.constant 0 : index
    %c0_78 = arith.constant 0 : index
    %c0_79 = arith.constant 0 : index
    %120 = vector.load %arg8[%c0_77, %c0_78, %c0_79] : memref<2x8x256xf32, #tpu.memory_space<vmem>>, vector<1x8x256xf32>
    %121 = vector.shape_cast %120 : vector<1x8x256xf32> to vector<8x256xf32>
    %122 = vector.shape_cast %119 : vector<8x256xf32> to vector<1x8x256xf32>
    tpu.vector_store %arg8[%c0_77, %c0_78, %c0_79], %122 {strides = array<i32>} : memref<2x8x256xf32, #tpu.memory_space<vmem>>, vector<1x8x256xf32>,
    %c1_80 = arith.constant 1 : index
    %c0_81 = arith.constant 0 : index
    %c0_82 = arith.constant 0 : index
    %123 = vector.load %arg1[%c1_80, %c0_81, %c0_82] : memref<2x4x256xf32, #tpu.memory_space<vmem>>, vector<1x4x256xf32>
    %124 = vector.shape_cast %123 : vector<1x4x256xf32> to vector<4x256xf32>
    %125 = vector.broadcast %0 : vector<4x1xf32> to vector<4x256xf32>
    %126 = arith.mulf %124, %125 : vector<4x256xf32>
    %127 = vector.broadcast %1 : vector<4x1xf32> to vector<4x256xf32>
    %128 = arith.addf %126, %127 : vector<4x256xf32>
    %cst_83 = arith.constant 0.000000e+00 : f32
    %129 = vector.broadcast %cst_83 : f32 to vector<4x256xf32>
    %130 = arith.maximumf %128, %129 : vector<4x256xf32>
    %cst_84 = arith.constant dense<0.000000e+00> : vector<4x256xf32>
    %131 = tpu.matmul %17, %130, %cst_84 {dimension_numbers = #tpu.dot_dimension_numbers<[1], [0], [0], [1], [0, 0, 1, 1], [], []>} : vector<4x4xf32>, vector<4x256xf32>, vector<4x256xf32> -> vector<4x256xf32>
    %132 = vector.broadcast %2 : vector<4x1xf32> to vector<4x256xf32>
    %133 = arith.addf %131, %132 : vector<4x256xf32>
    %cst_85 = arith.constant 0.000000e+00 : f32
    %134 = vector.broadcast %cst_85 : f32 to vector<4x256xf32>
    %135 = arith.maximumf %133, %134 : vector<4x256xf32>
    %c16_i32_86 = arith.constant 16 : i32
    %136 = tpu.dynamic_rotate %135 by %c16_i32_86 dim 1 : vector<4x256xf32>, i32 -> vector<4x256xf32>
    %cst_87 = arith.constant 0.000000e+00 : f32
    %137 = vector.shape_cast %13 : vector<1x256xi1> to vector<1x256xi1>
    %138 = vector.broadcast %137 : vector<1x256xi1> to vector<4x256xi1>
    %139 = vector.broadcast %cst_87 : f32 to vector<4x256xf32>
    %140 = arith.select %138, %136, %139 : vector<4x256xi1>, vector<4x256xf32>
    %c240_i32_88 = arith.constant 240 : i32
    %141 = tpu.dynamic_rotate %135 by %c240_i32_88 dim 1 : vector<4x256xf32>, i32 -> vector<4x256xf32>
    %cst_89 = arith.constant 0.000000e+00 : f32
    %142 = vector.shape_cast %16 : vector<1x256xi1> to vector<1x256xi1>
    %143 = vector.broadcast %142 : vector<1x256xi1> to vector<4x256xi1>
    %144 = vector.broadcast %cst_89 : f32 to vector<4x256xf32>
    %145 = arith.select %143, %141, %144 : vector<4x256xi1>, vector<4x256xf32>
    %cst_90 = arith.constant dense<0.000000e+00> : vector<4x256xf32>
    %146 = tpu.matmul %28, %135, %cst_90 {dimension_numbers = #tpu.dot_dimension_numbers<[1], [0], [0], [1], [0, 0, 1, 1], [], []>} : vector<4x4xf32>, vector<4x256xf32>, vector<4x256xf32> -> vector<4x256xf32>
    %c1_i32_91 = arith.constant 1 : i32
    %147 = tpu.dynamic_rotate %135 by %c1_i32_91 dim 1 : vector<4x256xf32>, i32 -> vector<4x256xf32>
    %cst_92 = arith.constant 0.000000e+00 : f32
    %148 = vector.shape_cast %7 : vector<1x256xi1> to vector<1x256xi1>
    %149 = vector.broadcast %148 : vector<1x256xi1> to vector<4x256xi1>
    %150 = vector.broadcast %cst_92 : f32 to vector<4x256xf32>
    %151 = arith.select %149, %147, %150 : vector<4x256xi1>, vector<4x256xf32>
    %cst_93 = arith.constant dense<0.000000e+00> : vector<4x256xf32>
    %152 = tpu.matmul %26, %151, %cst_93 {dimension_numbers = #tpu.dot_dimension_numbers<[1], [0], [0], [1], [0, 0, 1, 1], [], []>} : vector<4x4xf32>, vector<4x256xf32>, vector<4x256xf32> -> vector<4x256xf32>
    %153 = arith.addf %146, %152 : vector<4x256xf32>
    %c255_i32_94 = arith.constant 255 : i32
    %154 = tpu.dynamic_rotate %135 by %c255_i32_94 dim 1 : vector<4x256xf32>, i32 -> vector<4x256xf32>
    %cst_95 = arith.constant 0.000000e+00 : f32
    %155 = vector.shape_cast %10 : vector<1x256xi1> to vector<1x256xi1>
    %156 = vector.broadcast %155 : vector<1x256xi1> to vector<4x256xi1>
    %157 = vector.broadcast %cst_95 : f32 to vector<4x256xf32>
    %158 = arith.select %156, %154, %157 : vector<4x256xi1>, vector<4x256xf32>
    %cst_96 = arith.constant dense<0.000000e+00> : vector<4x256xf32>
    %159 = tpu.matmul %30, %158, %cst_96 {dimension_numbers = #tpu.dot_dimension_numbers<[1], [0], [0], [1], [0, 0, 1, 1], [], []>} : vector<4x4xf32>, vector<4x256xf32>, vector<4x256xf32> -> vector<4x256xf32>
    %160 = arith.addf %153, %159 : vector<4x256xf32>
    %cst_97 = arith.constant dense<0.000000e+00> : vector<4x256xf32>
    %161 = tpu.matmul %22, %140, %cst_97 {dimension_numbers = #tpu.dot_dimension_numbers<[1], [0], [0], [1], [0, 0, 1, 1], [], []>} : vector<4x4xf32>, vector<4x256xf32>, vector<4x256xf32> -> vector<4x256xf32>
    %162 = arith.addf %160, %161 : vector<4x256xf32>
    %c1_i32_98 = arith.constant 1 : i32
    %163 = tpu.dynamic_rotate %140 by %c1_i32_98 dim 1 : vector<4x256xf32>, i32 -> vector<4x256xf32>
    %cst_99 = arith.constant 0.000000e+00 : f32
    %164 = vector.shape_cast %7 : vector<1x256xi1> to vector<1x256xi1>
    %165 = vector.broadcast %164 : vector<1x256xi1> to vector<4x256xi1>
    %166 = vector.broadcast %cst_99 : f32 to vector<4x256xf32>
    %167 = arith.select %165, %163, %166 : vector<4x256xi1>, vector<4x256xf32>
    %cst_100 = arith.constant dense<0.000000e+00> : vector<4x256xf32>
    %168 = tpu.matmul %20, %167, %cst_100 {dimension_numbers = #tpu.dot_dimension_numbers<[1], [0], [0], [1], [0, 0, 1, 1], [], []>} : vector<4x4xf32>, vector<4x256xf32>, vector<4x256xf32> -> vector<4x256xf32>
    %169 = arith.addf %162, %168 : vector<4x256xf32>
    %c255_i32_101 = arith.constant 255 : i32
    %170 = tpu.dynamic_rotate %140 by %c255_i32_101 dim 1 : vector<4x256xf32>, i32 -> vector<4x256xf32>
    %cst_102 = arith.constant 0.000000e+00 : f32
    %171 = vector.shape_cast %10 : vector<1x256xi1> to vector<1x256xi1>
    %172 = vector.broadcast %171 : vector<1x256xi1> to vector<4x256xi1>
    %173 = vector.broadcast %cst_102 : f32 to vector<4x256xf32>
    %174 = arith.select %172, %170, %173 : vector<4x256xi1>, vector<4x256xf32>
    %cst_103 = arith.constant dense<0.000000e+00> : vector<4x256xf32>
    %175 = tpu.matmul %24, %174, %cst_103 {dimension_numbers = #tpu.dot_dimension_numbers<[1], [0], [0], [1], [0, 0, 1, 1], [], []>} : vector<4x4xf32>, vector<4x256xf32>, vector<4x256xf32> -> vector<4x256xf32>
    %176 = arith.addf %169, %175 : vector<4x256xf32>
    %cst_104 = arith.constant dense<0.000000e+00> : vector<4x256xf32>
    %177 = tpu.matmul %34, %145, %cst_104 {dimension_numbers = #tpu.dot_dimension_numbers<[1], [0], [0], [1], [0, 0, 1, 1], [], []>} : vector<4x4xf32>, vector<4x256xf32>, vector<4x256xf32> -> vector<4x256xf32>
    %178 = arith.addf %176, %177 : vector<4x256xf32>
    %c1_i32_105 = arith.constant 1 : i32
    %179 = tpu.dynamic_rotate %145 by %c1_i32_105 dim 1 : vector<4x256xf32>, i32 -> vector<4x256xf32>
    %cst_106 = arith.constant 0.000000e+00 : f32
    %180 = vector.shape_cast %7 : vector<1x256xi1> to vector<1x256xi1>
    %181 = vector.broadcast %180 : vector<1x256xi1> to vector<4x256xi1>
    %182 = vector.broadcast %cst_106 : f32 to vector<4x256xf32>
    %183 = arith.select %181, %179, %182 : vector<4x256xi1>, vector<4x256xf32>
    %cst_107 = arith.constant dense<0.000000e+00> : vector<4x256xf32>
    %184 = tpu.matmul %32, %183, %cst_107 {dimension_numbers = #tpu.dot_dimension_numbers<[1], [0], [0], [1], [0, 0, 1, 1], [], []>} : vector<4x4xf32>, vector<4x256xf32>, vector<4x256xf32> -> vector<4x256xf32>
    %185 = arith.addf %178, %184 : vector<4x256xf32>
    %c255_i32_108 = arith.constant 255 : i32
    %186 = tpu.dynamic_rotate %145 by %c255_i32_108 dim 1 : vector<4x256xf32>, i32 -> vector<4x256xf32>
    %cst_109 = arith.constant 0.000000e+00 : f32
    %187 = vector.shape_cast %10 : vector<1x256xi1> to vector<1x256xi1>
    %188 = vector.broadcast %187 : vector<1x256xi1> to vector<4x256xi1>
    %189 = vector.broadcast %cst_109 : f32 to vector<4x256xf32>
    %190 = arith.select %188, %186, %189 : vector<4x256xi1>, vector<4x256xf32>
    %cst_110 = arith.constant dense<0.000000e+00> : vector<4x256xf32>
    %191 = tpu.matmul %36, %190, %cst_110 {dimension_numbers = #tpu.dot_dimension_numbers<[1], [0], [0], [1], [0, 0, 1, 1], [], []>} : vector<4x4xf32>, vector<4x256xf32>, vector<4x256xf32> -> vector<4x256xf32>
    %192 = arith.addf %185, %191 : vector<4x256xf32>
    %193 = vector.broadcast %3 : vector<4x1xf32> to vector<4x256xf32>
    %194 = arith.addf %192, %193 : vector<4x256xf32>
    %cst_111 = arith.constant 0.000000e+00 : f32
    %195 = vector.broadcast %cst_111 : f32 to vector<4x256xf32>
    %196 = arith.maximumf %194, %195 : vector<4x256xf32>
    %cst_112 = arith.constant dense<0.000000e+00> : vector<8x256xf32>
    %197 = tpu.matmul %18, %196, %cst_112 {dimension_numbers = #tpu.dot_dimension_numbers<[1], [0], [0], [1], [0, 0, 1, 1], [], []>} : vector<8x4xf32>, vector<4x256xf32>, vector<8x256xf32> -> vector<8x256xf32>
    %198 = vector.broadcast %4 : vector<8x1xf32> to vector<8x256xf32>
    %199 = arith.addf %197, %198 : vector<8x256xf32>
    %cst_113 = arith.constant dense<0.000000e+00> : vector<8x256xf32>
    %200 = tpu.matmul %37, %124, %cst_113 {dimension_numbers = #tpu.dot_dimension_numbers<[1], [0], [0], [1], [0, 0, 1, 1], [], []>} : vector<8x4xf32>, vector<4x256xf32>, vector<8x256xf32> -> vector<8x256xf32>
    %201 = vector.broadcast %38 : vector<8x1xf32> to vector<8x256xf32>
    %202 = arith.addf %200, %201 : vector<8x256xf32>
    %203 = arith.addf %202, %199 : vector<8x256xf32>
    %c1_114 = arith.constant 1 : index
    %c0_115 = arith.constant 0 : index
    %c0_116 = arith.constant 0 : index
    %204 = vector.load %arg8[%c1_114, %c0_115, %c0_116] : memref<2x8x256xf32, #tpu.memory_space<vmem>>, vector<1x8x256xf32>
    %205 = vector.shape_cast %204 : vector<1x8x256xf32> to vector<8x256xf32>
    %206 = vector.shape_cast %203 : vector<8x256xf32> to vector<1x8x256xf32>
    tpu.vector_store %arg8[%c1_114, %c0_115, %c0_116], %206 {strides = array<i32>} : memref<2x8x256xf32, #tpu.memory_space<vmem>>, vector<1x8x256xf32>,
    return
  }
  func.func @transform_0(%arg0: i32) -> (i32, i32, i32) {
    %c0_i32 = arith.constant 0 : i32
    %c0_i32_0 = arith.constant 0 : i32
    %c0_i32_1 = arith.constant 0 : i32
    return %arg0, %c0_i32, %c0_i32_0 : i32, i32, i32
  }
  func.func @transform_1(%arg0: i32) -> (i32, i32) {
    %c0_i32 = arith.constant 0 : i32
    %c0_i32_0 = arith.constant 0 : i32
    %c0_i32_1 = arith.constant 0 : i32
    return %c0_i32, %c0_i32_0 : i32, i32
  }
  func.func @transform_2(%arg0: i32) -> (i32, i32) {
    %c0_i32 = arith.constant 0 : i32
    %c0_i32_0 = arith.constant 0 : i32
    %c0_i32_1 = arith.constant 0 : i32
    return %c0_i32, %c0_i32_0 : i32, i32
  }
  func.func @transform_3(%arg0: i32) -> (i32, i32) {
    %c0_i32 = arith.constant 0 : i32
    %c0_i32_0 = arith.constant 0 : i32
    %c0_i32_1 = arith.constant 0 : i32
    return %c0_i32, %c0_i32_0 : i32, i32
  }
  func.func @transform_4(%arg0: i32) -> (i32, i32, i32) {
    %c0_i32 = arith.constant 0 : i32
    %c0_i32_0 = arith.constant 0 : i32
    %c0_i32_1 = arith.constant 0 : i32
    %c0_i32_2 = arith.constant 0 : i32
    return %c0_i32, %c0_i32_0, %c0_i32_1 : i32, i32, i32
  }
  func.func @transform_5(%arg0: i32) -> (i32, i32) {
    %c0_i32 = arith.constant 0 : i32
    %c0_i32_0 = arith.constant 0 : i32
    %c0_i32_1 = arith.constant 0 : i32
    return %c0_i32, %c0_i32_0 : i32, i32
  }
  func.func @transform_6(%arg0: i32) -> (i32, i32) {
    %c0_i32 = arith.constant 0 : i32
    %c0_i32_0 = arith.constant 0 : i32
    %c0_i32_1 = arith.constant 0 : i32
    return %c0_i32, %c0_i32_0 : i32, i32
  }
  func.func @transform_7(%arg0: i32) -> (i32, i32, i32) {
    %c0_i32 = arith.constant 0 : i32
    %c0_i32_0 = arith.constant 0 : i32
    %c0_i32_1 = arith.constant 0 : i32
    return %arg0, %c0_i32, %c0_i32_0 : i32, i32, i32
  }
}

module attributes {stable_mosaic.version = 11 : i64} {
  func.func @_resblock_kernel(%arg0: i32, %arg1: memref<2x4x256xf32, #tpu.memory_space<vmem>>, %arg2: memref<8x256xf32, #tpu.memory_space<vmem>>, %arg3: memref<8x8xf32, #tpu.memory_space<vmem>>, %arg4: memref<4x4xf32, #tpu.memory_space<vmem>>, %arg5: memref<9x4x4xf32, #tpu.memory_space<vmem>>, %arg6: memref<8x4xf32, #tpu.memory_space<vmem>>, %arg7: memref<8x4xf32, #tpu.memory_space<vmem>>, %arg8: memref<2x8x256xf32, #tpu.memory_space<vmem>>) attributes {dimension_semantics = [#tpu.dimension_semantics<parallel>], iteration_bounds = array<i64: 1>, scalar_prefetch = 0 : i64, scratch_operands = 0 : i64, tpu.core_type = #tpu.core_type<tc>, window_params = [{transform_indices = @transform_0, window_bounds = array<i64: 2, 4, 256>}, {pipeline_mode = #tpu.pipeline_mode<synchronous>, transform_indices = @transform_1, window_bounds = array<i64: 8, 256>}, {pipeline_mode = #tpu.pipeline_mode<synchronous>, transform_indices = @transform_2, window_bounds = array<i64: 8, 8>}, {pipeline_mode = #tpu.pipeline_mode<synchronous>, transform_indices = @transform_3, window_bounds = array<i64: 4, 4>}, {pipeline_mode = #tpu.pipeline_mode<synchronous>, transform_indices = @transform_4, window_bounds = array<i64: 9, 4, 4>}, {pipeline_mode = #tpu.pipeline_mode<synchronous>, transform_indices = @transform_5, window_bounds = array<i64: 8, 4>}, {pipeline_mode = #tpu.pipeline_mode<synchronous>, transform_indices = @transform_6, window_bounds = array<i64: 8, 4>}, {transform_indices = @transform_7, window_bounds = array<i64: 2, 8, 256>}]} {
    %c0 = arith.constant 0 : index
    %c0_0 = arith.constant 0 : index
    %0 = vector.load %arg3[%c0, %c0_0] : memref<8x8xf32, #tpu.memory_space<vmem>>, vector<4x1xf32>
    %c0_1 = arith.constant 0 : index
    %c1 = arith.constant 1 : index
    %1 = vector.load %arg3[%c0_1, %c1] : memref<8x8xf32, #tpu.memory_space<vmem>>, vector<4x1xf32>
    %c0_2 = arith.constant 0 : index
    %c2 = arith.constant 2 : index
    %2 = vector.load %arg3[%c0_2, %c2] : memref<8x8xf32, #tpu.memory_space<vmem>>, vector<4x1xf32>
    %c0_3 = arith.constant 0 : index
    %c3 = arith.constant 3 : index
    %3 = vector.load %arg3[%c0_3, %c3] : memref<8x8xf32, #tpu.memory_space<vmem>>, vector<4x1xf32>
    %c0_4 = arith.constant 0 : index
    %c4 = arith.constant 4 : index
    %4 = vector.load %arg3[%c0_4, %c4] : memref<8x8xf32, #tpu.memory_space<vmem>>, vector<8x1xf32>
    %c0_5 = arith.constant 0 : index
    %c0_6 = arith.constant 0 : index
    %5 = vector.load %arg2[%c0_5, %c0_6] : memref<8x256xf32, #tpu.memory_space<vmem>>, vector<1x256xf32>
    %cst = arith.constant 5.000000e-01 : f32
    %6 = vector.broadcast %cst : f32 to vector<1x256xf32>
    %7 = arith.cmpf ogt, %5, %6 : vector<1x256xf32>
    %c1_7 = arith.constant 1 : index
    %c0_8 = arith.constant 0 : index
    %8 = vector.load %arg2[%c1_7, %c0_8] : memref<8x256xf32, #tpu.memory_space<vmem>>, vector<1x256xf32>
    %cst_9 = arith.constant 5.000000e-01 : f32
    %9 = vector.broadcast %cst_9 : f32 to vector<1x256xf32>
    %10 = arith.cmpf ogt, %8, %9 : vector<1x256xf32>
    %c2_10 = arith.constant 2 : index
    %c0_11 = arith.constant 0 : index
    %11 = vector.load %arg2[%c2_10, %c0_11] : memref<8x256xf32, #tpu.memory_space<vmem>>, vector<1x256xf32>
    %cst_12 = arith.constant 5.000000e-01 : f32
    %12 = vector.broadcast %cst_12 : f32 to vector<1x256xf32>
    %13 = arith.cmpf ogt, %11, %12 : vector<1x256xf32>
    %c3_13 = arith.constant 3 : index
    %c0_14 = arith.constant 0 : index
    %14 = vector.load %arg2[%c3_13, %c0_14] : memref<8x256xf32, #tpu.memory_space<vmem>>, vector<1x256xf32>
    %cst_15 = arith.constant 5.000000e-01 : f32
    %15 = vector.broadcast %cst_15 : f32 to vector<1x256xf32>
    %16 = arith.cmpf ogt, %14, %15 : vector<1x256xf32>
    %c0_16 = arith.constant 0 : index
    %c0_17 = arith.constant 0 : index
    %17 = vector.load %arg4[%c0_16, %c0_17] : memref<4x4xf32, #tpu.memory_space<vmem>>, vector<4x4xf32>
    %c0_18 = arith.constant 0 : index
    %c0_19 = arith.constant 0 : index
    %18 = vector.load %arg6[%c0_18, %c0_19] : memref<8x4xf32, #tpu.memory_space<vmem>>, vector<8x4xf32>
    %c0_20 = arith.constant 0 : index
    %c0_21 = arith.constant 0 : index
    %c0_22 = arith.constant 0 : index
    %19 = vector.load %arg5[%c0_20, %c0_21, %c0_22] : memref<9x4x4xf32, #tpu.memory_space<vmem>>, vector<1x4x4xf32>
    %20 = vector.shape_cast %19 : vector<1x4x4xf32> to vector<4x4xf32>
    %c1_23 = arith.constant 1 : index
    %c0_24 = arith.constant 0 : index
    %c0_25 = arith.constant 0 : index
    %21 = vector.load %arg5[%c1_23, %c0_24, %c0_25] : memref<9x4x4xf32, #tpu.memory_space<vmem>>, vector<1x4x4xf32>
    %22 = vector.shape_cast %21 : vector<1x4x4xf32> to vector<4x4xf32>
    %c2_26 = arith.constant 2 : index
    %c0_27 = arith.constant 0 : index
    %c0_28 = arith.constant 0 : index
    %23 = vector.load %arg5[%c2_26, %c0_27, %c0_28] : memref<9x4x4xf32, #tpu.memory_space<vmem>>, vector<1x4x4xf32>
    %24 = vector.shape_cast %23 : vector<1x4x4xf32> to vector<4x4xf32>
    %c3_29 = arith.constant 3 : index
    %c0_30 = arith.constant 0 : index
    %c0_31 = arith.constant 0 : index
    %25 = vector.load %arg5[%c3_29, %c0_30, %c0_31] : memref<9x4x4xf32, #tpu.memory_space<vmem>>, vector<1x4x4xf32>
    %26 = vector.shape_cast %25 : vector<1x4x4xf32> to vector<4x4xf32>
    %c4_32 = arith.constant 4 : index
    %c0_33 = arith.constant 0 : index
    %c0_34 = arith.constant 0 : index
    %27 = vector.load %arg5[%c4_32, %c0_33, %c0_34] : memref<9x4x4xf32, #tpu.memory_space<vmem>>, vector<1x4x4xf32>
    %28 = vector.shape_cast %27 : vector<1x4x4xf32> to vector<4x4xf32>
    %c5 = arith.constant 5 : index
    %c0_35 = arith.constant 0 : index
    %c0_36 = arith.constant 0 : index
    %29 = vector.load %arg5[%c5, %c0_35, %c0_36] : memref<9x4x4xf32, #tpu.memory_space<vmem>>, vector<1x4x4xf32>
    %30 = vector.shape_cast %29 : vector<1x4x4xf32> to vector<4x4xf32>
    %c6 = arith.constant 6 : index
    %c0_37 = arith.constant 0 : index
    %c0_38 = arith.constant 0 : index
    %31 = vector.load %arg5[%c6, %c0_37, %c0_38] : memref<9x4x4xf32, #tpu.memory_space<vmem>>, vector<1x4x4xf32>
    %32 = vector.shape_cast %31 : vector<1x4x4xf32> to vector<4x4xf32>
    %c7 = arith.constant 7 : index
    %c0_39 = arith.constant 0 : index
    %c0_40 = arith.constant 0 : index
    %33 = vector.load %arg5[%c7, %c0_39, %c0_40] : memref<9x4x4xf32, #tpu.memory_space<vmem>>, vector<1x4x4xf32>
    %34 = vector.shape_cast %33 : vector<1x4x4xf32> to vector<4x4xf32>
    %c8 = arith.constant 8 : index
    %c0_41 = arith.constant 0 : index
    %c0_42 = arith.constant 0 : index
    %35 = vector.load %arg5[%c8, %c0_41, %c0_42] : memref<9x4x4xf32, #tpu.memory_space<vmem>>, vector<1x4x4xf32>
    %36 = vector.shape_cast %35 : vector<1x4x4xf32> to vector<4x4xf32>
    %c0_43 = arith.constant 0 : index
    %c0_44 = arith.constant 0 : index
    %37 = vector.load %arg7[%c0_43, %c0_44] : memref<8x4xf32, #tpu.memory_space<vmem>>, vector<8x4xf32>
    %c0_45 = arith.constant 0 : index
    %c5_46 = arith.constant 5 : index
    %38 = vector.load %arg3[%c0_45, %c5_46] : memref<8x8xf32, #tpu.memory_space<vmem>>, vector<8x1xf32>
    %c0_47 = arith.constant 0 : index
    %c0_48 = arith.constant 0 : index
    %c0_49 = arith.constant 0 : index
    %39 = vector.load %arg1[%c0_47, %c0_48, %c0_49] : memref<2x4x256xf32, #tpu.memory_space<vmem>>, vector<1x4x256xf32>
    %40 = vector.shape_cast %39 : vector<1x4x256xf32> to vector<4x256xf32>
    %41 = vector.broadcast %0 : vector<4x1xf32> to vector<4x256xf32>
    %42 = arith.mulf %40, %41 : vector<4x256xf32>
    %43 = vector.broadcast %1 : vector<4x1xf32> to vector<4x256xf32>
    %44 = arith.addf %42, %43 : vector<4x256xf32>
    %cst_50 = arith.constant 0.000000e+00 : f32
    %45 = vector.broadcast %cst_50 : f32 to vector<4x256xf32>
    %46 = arith.maximumf %44, %45 : vector<4x256xf32>
    %cst_51 = arith.constant dense<0.000000e+00> : vector<4x256xf32>
    %47 = tpu.matmul %17, %46, %cst_51 {dimension_numbers = #tpu.dot_dimension_numbers<[1], [0], [0], [1], [0, 0, 1, 1], [], []>} : vector<4x4xf32>, vector<4x256xf32>, vector<4x256xf32> -> vector<4x256xf32>
    %48 = vector.broadcast %2 : vector<4x1xf32> to vector<4x256xf32>
    %49 = arith.addf %47, %48 : vector<4x256xf32>
    %cst_52 = arith.constant 0.000000e+00 : f32
    %50 = vector.broadcast %cst_52 : f32 to vector<4x256xf32>
    %51 = arith.maximumf %49, %50 : vector<4x256xf32>
    %c16_i32 = arith.constant 16 : i32
    %52 = tpu.dynamic_rotate %51 by %c16_i32 dim 1 : vector<4x256xf32>, i32 -> vector<4x256xf32>
    %cst_53 = arith.constant 0.000000e+00 : f32
    %53 = vector.shape_cast %13 : vector<1x256xi1> to vector<1x256xi1>
    %54 = vector.broadcast %53 : vector<1x256xi1> to vector<4x256xi1>
    %55 = vector.broadcast %cst_53 : f32 to vector<4x256xf32>
    %56 = arith.select %54, %52, %55 : vector<4x256xi1>, vector<4x256xf32>
    %c240_i32 = arith.constant 240 : i32
    %57 = tpu.dynamic_rotate %51 by %c240_i32 dim 1 : vector<4x256xf32>, i32 -> vector<4x256xf32>
    %cst_54 = arith.constant 0.000000e+00 : f32
    %58 = vector.shape_cast %16 : vector<1x256xi1> to vector<1x256xi1>
    %59 = vector.broadcast %58 : vector<1x256xi1> to vector<4x256xi1>
    %60 = vector.broadcast %cst_54 : f32 to vector<4x256xf32>
    %61 = arith.select %59, %57, %60 : vector<4x256xi1>, vector<4x256xf32>
    %cst_55 = arith.constant dense<0.000000e+00> : vector<4x256xf32>
    %62 = tpu.matmul %28, %51, %cst_55 {dimension_numbers = #tpu.dot_dimension_numbers<[1], [0], [0], [1], [0, 0, 1, 1], [], []>} : vector<4x4xf32>, vector<4x256xf32>, vector<4x256xf32> -> vector<4x256xf32>
    %c1_i32 = arith.constant 1 : i32
    %63 = tpu.dynamic_rotate %51 by %c1_i32 dim 1 : vector<4x256xf32>, i32 -> vector<4x256xf32>
    %cst_56 = arith.constant 0.000000e+00 : f32
    %64 = vector.shape_cast %7 : vector<1x256xi1> to vector<1x256xi1>
    %65 = vector.broadcast %64 : vector<1x256xi1> to vector<4x256xi1>
    %66 = vector.broadcast %cst_56 : f32 to vector<4x256xf32>
    %67 = arith.select %65, %63, %66 : vector<4x256xi1>, vector<4x256xf32>
    %cst_57 = arith.constant dense<0.000000e+00> : vector<4x256xf32>
    %68 = tpu.matmul %26, %67, %cst_57 {dimension_numbers = #tpu.dot_dimension_numbers<[1], [0], [0], [1], [0, 0, 1, 1], [], []>} : vector<4x4xf32>, vector<4x256xf32>, vector<4x256xf32> -> vector<4x256xf32>
    %69 = arith.addf %62, %68 : vector<4x256xf32>
    %c255_i32 = arith.constant 255 : i32
    %70 = tpu.dynamic_rotate %51 by %c255_i32 dim 1 : vector<4x256xf32>, i32 -> vector<4x256xf32>
    %cst_58 = arith.constant 0.000000e+00 : f32
    %71 = vector.shape_cast %10 : vector<1x256xi1> to vector<1x256xi1>
    %72 = vector.broadcast %71 : vector<1x256xi1> to vector<4x256xi1>
    %73 = vector.broadcast %cst_58 : f32 to vector<4x256xf32>
    %74 = arith.select %72, %70, %73 : vector<4x256xi1>, vector<4x256xf32>
    %cst_59 = arith.constant dense<0.000000e+00> : vector<4x256xf32>
    %75 = tpu.matmul %30, %74, %cst_59 {dimension_numbers = #tpu.dot_dimension_numbers<[1], [0], [0], [1], [0, 0, 1, 1], [], []>} : vector<4x4xf32>, vector<4x256xf32>, vector<4x256xf32> -> vector<4x256xf32>
    %76 = arith.addf %69, %75 : vector<4x256xf32>
    %cst_60 = arith.constant dense<0.000000e+00> : vector<4x256xf32>
    %77 = tpu.matmul %22, %56, %cst_60 {dimension_numbers = #tpu.dot_dimension_numbers<[1], [0], [0], [1], [0, 0, 1, 1], [], []>} : vector<4x4xf32>, vector<4x256xf32>, vector<4x256xf32> -> vector<4x256xf32>
    %78 = arith.addf %76, %77 : vector<4x256xf32>
    %c1_i32_61 = arith.constant 1 : i32
    %79 = tpu.dynamic_rotate %56 by %c1_i32_61 dim 1 : vector<4x256xf32>, i32 -> vector<4x256xf32>
    %cst_62 = arith.constant 0.000000e+00 : f32
    %80 = vector.shape_cast %7 : vector<1x256xi1> to vector<1x256xi1>
    %81 = vector.broadcast %80 : vector<1x256xi1> to vector<4x256xi1>
    %82 = vector.broadcast %cst_62 : f32 to vector<4x256xf32>
    %83 = arith.select %81, %79, %82 : vector<4x256xi1>, vector<4x256xf32>
    %cst_63 = arith.constant dense<0.000000e+00> : vector<4x256xf32>
    %84 = tpu.matmul %20, %83, %cst_63 {dimension_numbers = #tpu.dot_dimension_numbers<[1], [0], [0], [1], [0, 0, 1, 1], [], []>} : vector<4x4xf32>, vector<4x256xf32>, vector<4x256xf32> -> vector<4x256xf32>
    %85 = arith.addf %78, %84 : vector<4x256xf32>
    %c255_i32_64 = arith.constant 255 : i32
    %86 = tpu.dynamic_rotate %56 by %c255_i32_64 dim 1 : vector<4x256xf32>, i32 -> vector<4x256xf32>
    %cst_65 = arith.constant 0.000000e+00 : f32
    %87 = vector.shape_cast %10 : vector<1x256xi1> to vector<1x256xi1>
    %88 = vector.broadcast %87 : vector<1x256xi1> to vector<4x256xi1>
    %89 = vector.broadcast %cst_65 : f32 to vector<4x256xf32>
    %90 = arith.select %88, %86, %89 : vector<4x256xi1>, vector<4x256xf32>
    %cst_66 = arith.constant dense<0.000000e+00> : vector<4x256xf32>
    %91 = tpu.matmul %24, %90, %cst_66 {dimension_numbers = #tpu.dot_dimension_numbers<[1], [0], [0], [1], [0, 0, 1, 1], [], []>} : vector<4x4xf32>, vector<4x256xf32>, vector<4x256xf32> -> vector<4x256xf32>
    %92 = arith.addf %85, %91 : vector<4x256xf32>
    %cst_67 = arith.constant dense<0.000000e+00> : vector<4x256xf32>
    %93 = tpu.matmul %34, %61, %cst_67 {dimension_numbers = #tpu.dot_dimension_numbers<[1], [0], [0], [1], [0, 0, 1, 1], [], []>} : vector<4x4xf32>, vector<4x256xf32>, vector<4x256xf32> -> vector<4x256xf32>
    %94 = arith.addf %92, %93 : vector<4x256xf32>
    %c1_i32_68 = arith.constant 1 : i32
    %95 = tpu.dynamic_rotate %61 by %c1_i32_68 dim 1 : vector<4x256xf32>, i32 -> vector<4x256xf32>
    %cst_69 = arith.constant 0.000000e+00 : f32
    %96 = vector.shape_cast %7 : vector<1x256xi1> to vector<1x256xi1>
    %97 = vector.broadcast %96 : vector<1x256xi1> to vector<4x256xi1>
    %98 = vector.broadcast %cst_69 : f32 to vector<4x256xf32>
    %99 = arith.select %97, %95, %98 : vector<4x256xi1>, vector<4x256xf32>
    %cst_70 = arith.constant dense<0.000000e+00> : vector<4x256xf32>
    %100 = tpu.matmul %32, %99, %cst_70 {dimension_numbers = #tpu.dot_dimension_numbers<[1], [0], [0], [1], [0, 0, 1, 1], [], []>} : vector<4x4xf32>, vector<4x256xf32>, vector<4x256xf32> -> vector<4x256xf32>
    %101 = arith.addf %94, %100 : vector<4x256xf32>
    %c255_i32_71 = arith.constant 255 : i32
    %102 = tpu.dynamic_rotate %61 by %c255_i32_71 dim 1 : vector<4x256xf32>, i32 -> vector<4x256xf32>
    %cst_72 = arith.constant 0.000000e+00 : f32
    %103 = vector.shape_cast %10 : vector<1x256xi1> to vector<1x256xi1>
    %104 = vector.broadcast %103 : vector<1x256xi1> to vector<4x256xi1>
    %105 = vector.broadcast %cst_72 : f32 to vector<4x256xf32>
    %106 = arith.select %104, %102, %105 : vector<4x256xi1>, vector<4x256xf32>
    %cst_73 = arith.constant dense<0.000000e+00> : vector<4x256xf32>
    %107 = tpu.matmul %36, %106, %cst_73 {dimension_numbers = #tpu.dot_dimension_numbers<[1], [0], [0], [1], [0, 0, 1, 1], [], []>} : vector<4x4xf32>, vector<4x256xf32>, vector<4x256xf32> -> vector<4x256xf32>
    %108 = arith.addf %101, %107 : vector<4x256xf32>
    %109 = vector.broadcast %3 : vector<4x1xf32> to vector<4x256xf32>
    %110 = arith.addf %108, %109 : vector<4x256xf32>
    %cst_74 = arith.constant 0.000000e+00 : f32
    %111 = vector.broadcast %cst_74 : f32 to vector<4x256xf32>
    %112 = arith.maximumf %110, %111 : vector<4x256xf32>
    %cst_75 = arith.constant dense<0.000000e+00> : vector<8x256xf32>
    %113 = tpu.matmul %18, %112, %cst_75 {dimension_numbers = #tpu.dot_dimension_numbers<[1], [0], [0], [1], [0, 0, 1, 1], [], []>} : vector<8x4xf32>, vector<4x256xf32>, vector<8x256xf32> -> vector<8x256xf32>
    %114 = vector.broadcast %4 : vector<8x1xf32> to vector<8x256xf32>
    %115 = arith.addf %113, %114 : vector<8x256xf32>
    %cst_76 = arith.constant dense<0.000000e+00> : vector<8x256xf32>
    %116 = tpu.matmul %37, %40, %cst_76 {dimension_numbers = #tpu.dot_dimension_numbers<[1], [0], [0], [1], [0, 0, 1, 1], [], []>} : vector<8x4xf32>, vector<4x256xf32>, vector<8x256xf32> -> vector<8x256xf32>
    %117 = vector.broadcast %38 : vector<8x1xf32> to vector<8x256xf32>
    %118 = arith.addf %116, %117 : vector<8x256xf32>
    %119 = arith.addf %118, %115 : vector<8x256xf32>
    %c0_77 = arith.constant 0 : index
    %c0_78 = arith.constant 0 : index
    %c0_79 = arith.constant 0 : index
    %120 = vector.load %arg8[%c0_77, %c0_78, %c0_79] : memref<2x8x256xf32, #tpu.memory_space<vmem>>, vector<1x8x256xf32>
    %121 = vector.shape_cast %120 : vector<1x8x256xf32> to vector<8x256xf32>
    %122 = vector.shape_cast %119 : vector<8x256xf32> to vector<1x8x256xf32>
    tpu.vector_store %arg8[%c0_77, %c0_78, %c0_79], %122 {strides = array<i32>} : memref<2x8x256xf32, #tpu.memory_space<vmem>>, vector<1x8x256xf32>,
    %c1_80 = arith.constant 1 : index
    %c0_81 = arith.constant 0 : index
    %c0_82 = arith.constant 0 : index
    %123 = vector.load %arg1[%c1_80, %c0_81, %c0_82] : memref<2x4x256xf32, #tpu.memory_space<vmem>>, vector<1x4x256xf32>
    %124 = vector.shape_cast %123 : vector<1x4x256xf32> to vector<4x256xf32>
    %125 = vector.broadcast %0 : vector<4x1xf32> to vector<4x256xf32>
    %126 = arith.mulf %124, %125 : vector<4x256xf32>
    %127 = vector.broadcast %1 : vector<4x1xf32> to vector<4x256xf32>
    %128 = arith.addf %126, %127 : vector<4x256xf32>
    %cst_83 = arith.constant 0.000000e+00 : f32
    %129 = vector.broadcast %cst_83 : f32 to vector<4x256xf32>
    %130 = arith.maximumf %128, %129 : vector<4x256xf32>
    %cst_84 = arith.constant dense<0.000000e+00> : vector<4x256xf32>
    %131 = tpu.matmul %17, %130, %cst_84 {dimension_numbers = #tpu.dot_dimension_numbers<[1], [0], [0], [1], [0, 0, 1, 1], [], []>} : vector<4x4xf32>, vector<4x256xf32>, vector<4x256xf32> -> vector<4x256xf32>
    %132 = vector.broadcast %2 : vector<4x1xf32> to vector<4x256xf32>
    %133 = arith.addf %131, %132 : vector<4x256xf32>
    %cst_85 = arith.constant 0.000000e+00 : f32
    %134 = vector.broadcast %cst_85 : f32 to vector<4x256xf32>
    %135 = arith.maximumf %133, %134 : vector<4x256xf32>
    %c16_i32_86 = arith.constant 16 : i32
    %136 = tpu.dynamic_rotate %135 by %c16_i32_86 dim 1 : vector<4x256xf32>, i32 -> vector<4x256xf32>
    %cst_87 = arith.constant 0.000000e+00 : f32
    %137 = vector.shape_cast %13 : vector<1x256xi1> to vector<1x256xi1>
    %138 = vector.broadcast %137 : vector<1x256xi1> to vector<4x256xi1>
    %139 = vector.broadcast %cst_87 : f32 to vector<4x256xf32>
    %140 = arith.select %138, %136, %139 : vector<4x256xi1>, vector<4x256xf32>
    %c240_i32_88 = arith.constant 240 : i32
    %141 = tpu.dynamic_rotate %135 by %c240_i32_88 dim 1 : vector<4x256xf32>, i32 -> vector<4x256xf32>
    %cst_89 = arith.constant 0.000000e+00 : f32
    %142 = vector.shape_cast %16 : vector<1x256xi1> to vector<1x256xi1>
    %143 = vector.broadcast %142 : vector<1x256xi1> to vector<4x256xi1>
    %144 = vector.broadcast %cst_89 : f32 to vector<4x256xf32>
    %145 = arith.select %143, %141, %144 : vector<4x256xi1>, vector<4x256xf32>
    %cst_90 = arith.constant dense<0.000000e+00> : vector<4x256xf32>
    %146 = tpu.matmul %28, %135, %cst_90 {dimension_numbers = #tpu.dot_dimension_numbers<[1], [0], [0], [1], [0, 0, 1, 1], [], []>} : vector<4x4xf32>, vector<4x256xf32>, vector<4x256xf32> -> vector<4x256xf32>
    %c1_i32_91 = arith.constant 1 : i32
    %147 = tpu.dynamic_rotate %135 by %c1_i32_91 dim 1 : vector<4x256xf32>, i32 -> vector<4x256xf32>
    %cst_92 = arith.constant 0.000000e+00 : f32
    %148 = vector.shape_cast %7 : vector<1x256xi1> to vector<1x256xi1>
    %149 = vector.broadcast %148 : vector<1x256xi1> to vector<4x256xi1>
    %150 = vector.broadcast %cst_92 : f32 to vector<4x256xf32>
    %151 = arith.select %149, %147, %150 : vector<4x256xi1>, vector<4x256xf32>
    %cst_93 = arith.constant dense<0.000000e+00> : vector<4x256xf32>
    %152 = tpu.matmul %26, %151, %cst_93 {dimension_numbers = #tpu.dot_dimension_numbers<[1], [0], [0], [1], [0, 0, 1, 1], [], []>} : vector<4x4xf32>, vector<4x256xf32>, vector<4x256xf32> -> vector<4x256xf32>
    %153 = arith.addf %146, %152 : vector<4x256xf32>
    %c255_i32_94 = arith.constant 255 : i32
    %154 = tpu.dynamic_rotate %135 by %c255_i32_94 dim 1 : vector<4x256xf32>, i32 -> vector<4x256xf32>
    %cst_95 = arith.constant 0.000000e+00 : f32
    %155 = vector.shape_cast %10 : vector<1x256xi1> to vector<1x256xi1>
    %156 = vector.broadcast %155 : vector<1x256xi1> to vector<4x256xi1>
    %157 = vector.broadcast %cst_95 : f32 to vector<4x256xf32>
    %158 = arith.select %156, %154, %157 : vector<4x256xi1>, vector<4x256xf32>
    %cst_96 = arith.constant dense<0.000000e+00> : vector<4x256xf32>
    %159 = tpu.matmul %30, %158, %cst_96 {dimension_numbers = #tpu.dot_dimension_numbers<[1], [0], [0], [1], [0, 0, 1, 1], [], []>} : vector<4x4xf32>, vector<4x256xf32>, vector<4x256xf32> -> vector<4x256xf32>
    %160 = arith.addf %153, %159 : vector<4x256xf32>
    %cst_97 = arith.constant dense<0.000000e+00> : vector<4x256xf32>
    %161 = tpu.matmul %22, %140, %cst_97 {dimension_numbers = #tpu.dot_dimension_numbers<[1], [0], [0], [1], [0, 0, 1, 1], [], []>} : vector<4x4xf32>, vector<4x256xf32>, vector<4x256xf32> -> vector<4x256xf32>
    %162 = arith.addf %160, %161 : vector<4x256xf32>
    %c1_i32_98 = arith.constant 1 : i32
    %163 = tpu.dynamic_rotate %140 by %c1_i32_98 dim 1 : vector<4x256xf32>, i32 -> vector<4x256xf32>
    %cst_99 = arith.constant 0.000000e+00 : f32
    %164 = vector.shape_cast %7 : vector<1x256xi1> to vector<1x256xi1>
    %165 = vector.broadcast %164 : vector<1x256xi1> to vector<4x256xi1>
    %166 = vector.broadcast %cst_99 : f32 to vector<4x256xf32>
    %167 = arith.select %165, %163, %166 : vector<4x256xi1>, vector<4x256xf32>
    %cst_100 = arith.constant dense<0.000000e+00> : vector<4x256xf32>
    %168 = tpu.matmul %20, %167, %cst_100 {dimension_numbers = #tpu.dot_dimension_numbers<[1], [0], [0], [1], [0, 0, 1, 1], [], []>} : vector<4x4xf32>, vector<4x256xf32>, vector<4x256xf32> -> vector<4x256xf32>
    %169 = arith.addf %162, %168 : vector<4x256xf32>
    %c255_i32_101 = arith.constant 255 : i32
    %170 = tpu.dynamic_rotate %140 by %c255_i32_101 dim 1 : vector<4x256xf32>, i32 -> vector<4x256xf32>
    %cst_102 = arith.constant 0.000000e+00 : f32
    %171 = vector.shape_cast %10 : vector<1x256xi1> to vector<1x256xi1>
    %172 = vector.broadcast %171 : vector<1x256xi1> to vector<4x256xi1>
    %173 = vector.broadcast %cst_102 : f32 to vector<4x256xf32>
    %174 = arith.select %172, %170, %173 : vector<4x256xi1>, vector<4x256xf32>
    %cst_103 = arith.constant dense<0.000000e+00> : vector<4x256xf32>
    %175 = tpu.matmul %24, %174, %cst_103 {dimension_numbers = #tpu.dot_dimension_numbers<[1], [0], [0], [1], [0, 0, 1, 1], [], []>} : vector<4x4xf32>, vector<4x256xf32>, vector<4x256xf32> -> vector<4x256xf32>
    %176 = arith.addf %169, %175 : vector<4x256xf32>
    %cst_104 = arith.constant dense<0.000000e+00> : vector<4x256xf32>
    %177 = tpu.matmul %34, %145, %cst_104 {dimension_numbers = #tpu.dot_dimension_numbers<[1], [0], [0], [1], [0, 0, 1, 1], [], []>} : vector<4x4xf32>, vector<4x256xf32>, vector<4x256xf32> -> vector<4x256xf32>
    %178 = arith.addf %176, %177 : vector<4x256xf32>
    %c1_i32_105 = arith.constant 1 : i32
    %179 = tpu.dynamic_rotate %145 by %c1_i32_105 dim 1 : vector<4x256xf32>, i32 -> vector<4x256xf32>
    %cst_106 = arith.constant 0.000000e+00 : f32
    %180 = vector.shape_cast %7 : vector<1x256xi1> to vector<1x256xi1>
    %181 = vector.broadcast %180 : vector<1x256xi1> to vector<4x256xi1>
    %182 = vector.broadcast %cst_106 : f32 to vector<4x256xf32>
    %183 = arith.select %181, %179, %182 : vector<4x256xi1>, vector<4x256xf32>
    %cst_107 = arith.constant dense<0.000000e+00> : vector<4x256xf32>
    %184 = tpu.matmul %32, %183, %cst_107 {dimension_numbers = #tpu.dot_dimension_numbers<[1], [0], [0], [1], [0, 0, 1, 1], [], []>} : vector<4x4xf32>, vector<4x256xf32>, vector<4x256xf32> -> vector<4x256xf32>
    %185 = arith.addf %178, %184 : vector<4x256xf32>
    %c255_i32_108 = arith.constant 255 : i32
    %186 = tpu.dynamic_rotate %145 by %c255_i32_108 dim 1 : vector<4x256xf32>, i32 -> vector<4x256xf32>
    %cst_109 = arith.constant 0.000000e+00 : f32
    %187 = vector.shape_cast %10 : vector<1x256xi1> to vector<1x256xi1>
    %188 = vector.broadcast %187 : vector<1x256xi1> to vector<4x256xi1>
    %189 = vector.broadcast %cst_109 : f32 to vector<4x256xf32>
    %190 = arith.select %188, %186, %189 : vector<4x256xi1>, vector<4x256xf32>
    %cst_110 = arith.constant dense<0.000000e+00> : vector<4x256xf32>
    %191 = tpu.matmul %36, %190, %cst_110 {dimension_numbers = #tpu.dot_dimension_numbers<[1], [0], [0], [1], [0, 0, 1, 1], [], []>} : vector<4x4xf32>, vector<4x256xf32>, vector<4x256xf32> -> vector<4x256xf32>
    %192 = arith.addf %185, %191 : vector<4x256xf32>
    %193 = vector.broadcast %3 : vector<4x1xf32> to vector<4x256xf32>
    %194 = arith.addf %192, %193 : vector<4x256xf32>
    %cst_111 = arith.constant 0.000000e+00 : f32
    %195 = vector.broadcast %cst_111 : f32 to vector<4x256xf32>
    %196 = arith.maximumf %194, %195 : vector<4x256xf32>
    %cst_112 = arith.constant dense<0.000000e+00> : vector<8x256xf32>
    %197 = tpu.matmul %18, %196, %cst_112 {dimension_numbers = #tpu.dot_dimension_numbers<[1], [0], [0], [1], [0, 0, 1, 1], [], []>} : vector<8x4xf32>, vector<4x256xf32>, vector<8x256xf32> -> vector<8x256xf32>
    %198 = vector.broadcast %4 : vector<8x1xf32> to vector<8x256xf32>
    %199 = arith.addf %197, %198 : vector<8x256xf32>
    %cst_113 = arith.constant dense<0.000000e+00> : vector<8x256xf32>
    %200 = tpu.matmul %37, %124, %cst_113 {dimension_numbers = #tpu.dot_dimension_numbers<[1], [0], [0], [1], [0, 0, 1, 1], [], []>} : vector<8x4xf32>, vector<4x256xf32>, vector<8x256xf32> -> vector<8x256xf32>
    %201 = vector.broadcast %38 : vector<8x1xf32> to vector<8x256xf32>
    %202 = arith.addf %200, %201 : vector<8x256xf32>
    %203 = arith.addf %202, %199 : vector<8x256xf32>
    %c1_114 = arith.constant 1 : index
    %c0_115 = arith.constant 0 : index
    %c0_116 = arith.constant 0 : index
    %204 = vector.load %arg8[%c1_114, %c0_115, %c0_116] : memref<2x8x256xf32, #tpu.memory_space<vmem>>, vector<1x8x256xf32>
    %205 = vector.shape_cast %204 : vector<1x8x256xf32> to vector<8x256xf32>
    %206 = vector.shape_cast %203 : vector<8x256xf32> to vector<1x8x256xf32>
    tpu.vector_store %arg8[%c1_114, %c0_115, %c0_116], %206 {strides = array<i32>} : memref<2x8x256xf32, #tpu.memory_space<vmem>>, vector<1x8x256xf32>,
    return
  }
  func.func @transform_0(%arg0: i32) -> (i32, i32, i32) {
    %c0_i32 = arith.constant 0 : i32
    %c0_i32_0 = arith.constant 0 : i32
    %c0_i32_1 = arith.constant 0 : i32
    return %arg0, %c0_i32, %c0_i32_0 : i32, i32, i32
  }
  func.func @transform_1(%arg0: i32) -> (i32, i32) {
    %c0_i32 = arith.constant 0 : i32
    %c0_i32_0 = arith.constant 0 : i32
    %c0_i32_1 = arith.constant 0 : i32
    return %c0_i32, %c0_i32_0 : i32, i32
  }
  func.func @transform_2(%arg0: i32) -> (i32, i32) {
    %c0_i32 = arith.constant 0 : i32
    %c0_i32_0 = arith.constant 0 : i32
    %c0_i32_1 = arith.constant 0 : i32
    return %c0_i32, %c0_i32_0 : i32, i32
  }
  func.func @transform_3(%arg0: i32) -> (i32, i32) {
    %c0_i32 = arith.constant 0 : i32
    %c0_i32_0 = arith.constant 0 : i32
    %c0_i32_1 = arith.constant 0 : i32
    return %c0_i32, %c0_i32_0 : i32, i32
  }
  func.func @transform_4(%arg0: i32) -> (i32, i32, i32) {
    %c0_i32 = arith.constant 0 : i32
    %c0_i32_0 = arith.constant 0 : i32
    %c0_i32_1 = arith.constant 0 : i32
    %c0_i32_2 = arith.constant 0 : i32
    return %c0_i32, %c0_i32_0, %c0_i32_1 : i32, i32, i32
  }
  func.func @transform_5(%arg0: i32) -> (i32, i32) {
    %c0_i32 = arith.constant 0 : i32
    %c0_i32_0 = arith.constant 0 : i32
    %c0_i32_1 = arith.constant 0 : i32
    return %c0_i32, %c0_i32_0 : i32, i32
  }
  func.func @transform_6(%arg0: i32) -> (i32, i32) {
    %c0_i32 = arith.constant 0 : i32
    %c0_i32_0 = arith.constant 0 : i32
    %c0_i32_1 = arith.constant 0 : i32
    return %c0_i32, %c0_i32_0 : i32, i32
  }
  func.func @transform_7(%arg0: i32) -> (i32, i32, i32) {
    %c0_i32 = arith.constant 0 : i32
    %c0_i32_0 = arith.constant 0 : i32
    %c0_i32_1 = arith.constant 0 : i32
    return %arg0, %c0_i32, %c0_i32_0 : i32, i32, i32
  }
}

</mosaic_0001>

<llo_original>
// kernel: tpu_custom_call.1
$region0: #{tpu_custom_call.1}
  #allocation0 [shape = 'u32[]', space=smem, size = 0x4, offset = 0x4, fixed_abs, tag = 'smem constant byte address 0x4 - core index']
  #allocation1 [shape = 'u32[144,128]{1,0:T(1,128)}', space=vmem, size = 0x12000, scoped, tag = 'internal scratch']
  %s0 = inlined_call_operand.vmem [shape: f32[2,4,256], index: 0, kind: input, shape index: {}]
  %s1 = inlined_call_operand.vmem [shape: f32[8,256], index: 1, kind: input, shape index: {}]
  %s2 = inlined_call_operand.vmem [shape: f32[8,8], index: 2, kind: input, shape index: {}]
  %s3 = inlined_call_operand.vmem [shape: f32[4,4], index: 3, kind: input, shape index: {}]
  %s4 = inlined_call_operand.vmem [shape: f32[9,4,4], index: 4, kind: input, shape index: {}]
  %s5 = inlined_call_operand.vmem [shape: f32[8,4], index: 5, kind: input, shape index: {}]
  %s6 = inlined_call_operand.vmem [shape: f32[8,4], index: 6, kind: input, shape index: {}]
  %s7 = inlined_call_operand.hbm [shape: f32[2,8,256], index: 7, kind: output, shape index: {}]
  %s8 = sld [smem:[#allocation0]]
  $region38: #{tpu_custom_call.1} parent=0
    _
  %s10 = ssub.s32 1, %s8
  %s11 = scalar_select 0, %s10, %s8
  $region1: #{tpu_custom_call.1} parent=0
    #allocation2 [shape = 'u8[16384]{0}', space=vmem, size = 0x4000, scoped, tag = 'output window, operand 0, single buffered']
    #allocation3 [shape = 's32[1]{0}', space=sflag, size = 0x4, scoped, tag = 'scoped memory for tpu_custom_call.1']
    %12 = vsyncpa [#allocation3], 0
    // Predicated region
    $region2: #{tpu_custom_call.1} parent=1 // pred_check
      _
    $region3: #{tpu_custom_call.1} parent=1 // pred_check_branch
      %14 = sbr.rel (0) target = $region5
    $region4: #{tpu_custom_call.1} parent=1 // pred_region
      _
    $region5: #{tpu_custom_call.1} parent=1 // pred_fallthru
      _
    // Predicated region
    $region6: #{tpu_custom_call.1} parent=1 // pred_check
      _
    $region7: #{tpu_custom_call.1} parent=1 // pred_check_branch
      %16 = sbr.rel (0) target = $region9
    $region8: #{tpu_custom_call.1} parent=1 // pred_region
      _
    $region9: #{tpu_custom_call.1} parent=1 // pred_fallthru
      _
    // Predicated region
    $region10: #{tpu_custom_call.1} parent=1 // pred_check
      _
    $region11: #{tpu_custom_call.1} parent=1 // pred_check_branch
      %18 = sbr.rel (0) target = $region13
    $region12: #{tpu_custom_call.1} parent=1 // pred_region
      _
    $region13: #{tpu_custom_call.1} parent=1 // pred_fallthru
      _
    // Predicated region
    $region14: #{tpu_custom_call.1} parent=1 // pred_check
      _
    $region15: #{tpu_custom_call.1} parent=1 // pred_check_branch
      %20 = sbr.rel (0) target = $region17
    $region16: #{tpu_custom_call.1} parent=1 // pred_region
      _
    $region17: #{tpu_custom_call.1} parent=1 // pred_fallthru
      _
    // Predicated region
    $region18: #{tpu_custom_call.1} parent=1 // pred_check
      _
    $region19: #{tpu_custom_call.1} parent=1 // pred_check_branch
      %22 = sbr.rel (0) target = $region21
    $region20: #{tpu_custom_call.1} parent=1 // pred_region
      _
    $region21: #{tpu_custom_call.1} parent=1 // pred_fallthru
      _
    // Predicated region
    $region22: #{tpu_custom_call.1} parent=1 // pred_check
      _
    $region23: #{tpu_custom_call.1} parent=1 // pred_check_branch
      %24 = sbr.rel (0) target = $region25
    $region24: #{tpu_custom_call.1} parent=1 // pred_region
      _
    $region25: #{tpu_custom_call.1} parent=1 // pred_fallthru
      _
    // Predicated region
    $region26: #{tpu_custom_call.1} parent=1 // pred_check
      _
    $region27: #{tpu_custom_call.1} parent=1 // pred_check_branch
      %26 = sbr.rel (0) target = $region29
    $region28: #{tpu_custom_call.1} parent=1 // pred_region
      _
    $region29: #{tpu_custom_call.1} parent=1 // pred_fallthru
      _
    %v27 = vld [vmem:[%s2] sm:$0xf]
    %v28 = vld [vmem:[%s2] sm:$0xff]
    %v29 = vld [vmem:[%s1] ss:$8 sm:$0x3]
    %vm30 = vcmp.gt.f32.partialorder %v29, 0.5
    %s31 = scalar_lea.vmem %s1, 1
    %v32 = vld [vmem:[%s31] ss:$8 sm:$0x3]
    %vm33 = vcmp.gt.f32.partialorder %v32, 0.5
    %s34 = scalar_lea.vmem %s1, 2
    %v35 = vld [vmem:[%s34] ss:$8 sm:$0x3]
    %vm36 = vcmp.gt.f32.partialorder %v35, 0.5
    %s37 = scalar_lea.vmem %s1, 3
    %v38 = vld [vmem:[%s37] ss:$8 sm:$0x3]
    %vm39 = vcmp.gt.f32.partialorder %v38, 0.5
    %v40 = vld [vmem:[%s3] sm:$0xf]
    %v41 = vld [vmem:[%s5] sm:$0xff]
    %v42 = vld [vmem:[%s4] sm:$0xf]
    %s43 = scalar_lea.vmem %s4, 4
    %v44 = vld [vmem:[%s43] sm:$0xf]
    %s45 = scalar_lea.vmem %s4, 8
    %v46 = vld [vmem:[%s45] sm:$0xf]
    %s47 = scalar_lea.vmem %s4, 12
    %v48 = vld [vmem:[%s47] sm:$0xf]
    %s49 = scalar_lea.vmem %s4, 16
    %v50 = vld [vmem:[%s49] sm:$0xf]
    %s51 = scalar_lea.vmem %s4, 20
    %v52 = vld [vmem:[%s51] sm:$0xf]
    %s53 = scalar_lea.vmem %s4, 24
    %v54 = vld [vmem:[%s53] sm:$0xf]
    %s55 = scalar_lea.vmem %s4, 28
    %v56 = vld [vmem:[%s55] sm:$0xf]
    %s57 = scalar_lea.vmem %s4, 32
    %v58 = vld [vmem:[%s57] sm:$0xf]
    %v59 = vld [vmem:[%s6] sm:$0xff]
    %v60 = vld [vmem:[%s0] sm:$0xff]
    %62 = vset.pattern.permute.xlu0 0
    %63 = vperm.xlu0 %62, %v27
    %v64 = vpop.permute.xlu0 %63
    %v66 = vunpack.c.l.s4 839922192
    %v67 = vunpack.c.0.s8 %v66
    %v68 = vlaneseq
    %v69 = vshrl.u32 %v68, 7
    %v70 = vsub.s32 %v67, %v69
    %v71 = vrot.slane %v64, %v70
    %v73 = vmul.f32 %v60, %v71
    %74 = vset.pattern.permute.xlu0 1
    %75 = vperm.xlu0 %74, %v27
    %v76 = vpop.permute.xlu0 %75
    %v78 = vunpack.c.l.s4 839922192
    %v79 = vunpack.c.0.s8 %v78
    %v80 = vlaneseq
    %v81 = vshrl.u32 %v80, 7
    %v82 = vsub.s32 %v79, %v81
    %v83 = vrot.slane %v76, %v82
    %v85 = vadd.f32 %v73, %v83
    %v86 = vmax.f32 %v85, 0.0
    %87 = vset.pattern.permute.xlu0 2
    %88 = vperm.xlu0 %87, %v27
    %v89 = vpop.permute.xlu0 %88
    %v92 = vcombine.high %v86, %v86
    %vm93 = vcmask 31744
    %v95 = vsel %vm93, %v40, 0
    %vm97 = vcmask 1043456
    %v98 = vsel %vm97, %v86, 0
    %v100 = vsel %vm97, %v92, 0
    %102 = vmatprep.subr.mxu0 0.0
    %103 = vmatpush1.msra.mxu0 0.0
    %104 = vmatprep.subr.mxu0 0.0
    %105 = vmatpush1.msra.mxu0 0.0
    %106 = vmatprep.subr.mxu0 0.0
    %107 = vmatpush1.msra.mxu0 0.0
    %108 = vmatprep.subr.mxu0 0.0
    %109 = vmatpush1.msra.mxu0 0.0
    %110 = vmatprep.subr.mxu0 0.0
    %111 = vmatpush1.msra.mxu0 0.0
    %112 = vmatprep.subr.mxu0 0.0
    %113 = vmatpush1.msra.mxu0 0.0
    %114 = vmatprep.subr.mxu0 0.0
    %115 = vmatpush1.msra.mxu0 0.0
    %116 = vmatprep.subr.mxu0 0.0
    %117 = vmatpush1.msra.mxu0 0.0
    %118 = vmatprep.subr.mxu0 0.0
    %119 = vmatpush1.msra.mxu0 0.0
    %120 = vmatprep.subr.mxu0 0.0
    %121 = vmatpush1.msra.mxu0 0.0
    %122 = vmatprep.subr.mxu0 0.0
    %123 = vmatpush1.msra.mxu0 0.0
    %124 = vmatprep.subr.mxu0 0.0
    %125 = vmatpush1.msra.mxu0 0.0
    %126 = vmatprep.subr.mxu0 0.0
    %127 = vmatpush1.msra.mxu0 0.0
    %128 = vmatprep.subr.mxu0 0.0
    %129 = vmatpush1.msra.mxu0 0.0
    %130 = vmatprep.subr.mxu0 0.0
    %131 = vmatpush1.msra.mxu0 0.0
    %132 = vmatprep.subr.mxu0 %v100
    %133 = vmatpush1.msra.mxu0 %v98
    %134 = vmatprep.subr.mxu0 0.0
    %135 = vmatpush2.msra.mxu0 0.0
    %136 = vmatprep.subr.mxu0 0.0
    %137 = vmatpush2.msra.mxu0 0.0
    %138 = vmatprep.subr.mxu0 0.0
    %139 = vmatpush2.msra.mxu0 0.0
    %140 = vmatprep.subr.mxu0 0.0
    %141 = vmatpush2.msra.mxu0 0.0
    %142 = vmatprep.subr.mxu0 0.0
    %143 = vmatpush2.msra.mxu0 0.0
    %144 = vmatprep.subr.mxu0 0.0
    %145 = vmatpush2.msra.mxu0 0.0
    %146 = vmatprep.subr.mxu0 0.0
    %147 = vmatpush2.msra.mxu0 0.0
    %148 = vmatprep.subr.mxu0 0.0
    %149 = vmatpush2.msra.mxu0 0.0
    %150 = vmatprep.subr.mxu0 0.0
    %151 = vmatpush2.msra.mxu0 0.0
    %152 = vmatprep.subr.mxu0 0.0
    %153 = vmatpush2.msra.mxu0 0.0
    %154 = vmatprep.subr.mxu0 0.0
    %155 = vmatpush2.msra.mxu0 0.0
    %156 = vmatprep.subr.mxu0 0.0
    %157 = vmatpush2.msra.mxu0 0.0
    %158 = vmatprep.subr.mxu0 0.0
    %159 = vmatpush2.msra.mxu0 0.0
    %160 = vmatprep.subr.mxu0 0.0
    %161 = vmatpush2.msra.mxu0 0.0
    %162 = vmatprep.subr.mxu0 0.0
    %163 = vmatpush2.msra.mxu0 0.0
    %164 = vmatprep.subr.mxu0 0.0
    %165 = vmatpush2.msra.mxu0 0.0
    %166 = vmatprep.mubr.f32.mxu0 0.0
    %167 = vmatmul.mubr.f32.gmra.mxu0 %v95
    %v168 = vpop.f32.mrf.mxu0
    %v169 = vadd.f32 %v89, %v168
    %v170 = vpop.f32.mrf.mxu0
    %v171 = vadd.f32 %v89, %v170
    %172 = vdwg.mxu0
    %v173 = vmax.f32 %v169, 0.0
    %v174 = vmax.f32 %v171, 0.0
    %175 = vrot.lane.b32.xlu0 %v173, 16
    %v176 = vpop.permute.xlu0 %175
    %177 = vrot.lane.b32.xlu0 %v174, 16
    %v178 = vpop.permute.xlu0 %177
    %v179 = vlaneseq
    %v180 = vand.u32 %v179, 127
    %vm181 = vcmp.lt.s32.totalorder %v180, 16
    %v182 = vsel %vm181, %v176, %v178
    %v183 = vsel %vm181, %v178, %v176
    %v184 = vsel %vm36, 1, 0
    %v185 = vlaneseq
    %v186 = vshrl.u32 %v185, 7
    %v187 = vsub.s32 0, %v186
    %v188 = vrot.slane %v184, %v187
    %v189 = vlaneseq
    %v190 = vshrl.u32 %v189, 7
    %v191 = vsub.s32 1, %v190
    %v192 = vrot.slane %v184, %v191
    %vm193 = vcmp.eq.s32.totalorder %v188, 1
    %vm194 = vcmp.eq.s32.totalorder %v192, 1
    %v195 = vsel %vm193, %v183, 0.0
    %v196 = vsel %vm194, %v182, 0.0
    %197 = vrot.lane.b32.xlu0 %v173, 112
    %v198 = vpop.permute.xlu0 %197
    %199 = vrot.lane.b32.xlu0 %v174, 112
    %v200 = vpop.permute.xlu0 %199
    %vm201 = vcmp.lt.s32.totalorder %v180, 112
    %v202 = vsel %vm201, %v198, %v200
    %v203 = vsel %vm201, %v200, %v198
    %v204 = vsel %vm39, 1, 0
    %v205 = vlaneseq
    %v206 = vshrl.u32 %v205, 7
    %v207 = vsub.s32 0, %v206
    %v208 = vrot.slane %v204, %v207
    %v209 = vlaneseq
    %v210 = vshrl.u32 %v209, 7
    %v211 = vsub.s32 1, %v210
    %v212 = vrot.slane %v204, %v211
    %vm213 = vcmp.eq.s32.totalorder %v208, 1
    %vm214 = vcmp.eq.s32.totalorder %v212, 1
    %v215 = vsel %vm213, %v202, 0.0
    %v216 = vsel %vm214, %v203, 0.0
    %217 = vrot.lane.b32.xlu0 %v173, 1
    %v218 = vpop.permute.xlu0 %217
    %219 = vrot.lane.b32.xlu0 %v174, 1
    %v220 = vpop.permute.xlu0 %219
    %vm221 = vcmp.lt.s32.totalorder %v180, 1
    %v222 = vsel %vm221, %v218, %v220
    %v223 = vsel %vm221, %v220, %v218
    %v224 = vsel %vm30, 1, 0
    %v225 = vlaneseq
    %v226 = vshrl.u32 %v225, 7
    %v227 = vsub.s32 0, %v226
    %v228 = vrot.slane %v224, %v227
    %v229 = vlaneseq
    %v230 = vshrl.u32 %v229, 7
    %v231 = vsub.s32 1, %v230
    %v232 = vrot.slane %v224, %v231
    %vm233 = vcmp.eq.s32.totalorder %v228, 1
    %vm234 = vcmp.eq.s32.totalorder %v232, 1
    %v235 = vsel %vm233, %v223, 0.0
    %v236 = vsel %vm234, %v222, 0.0
    %v238 = vsel %vm93, %v48, 0
    %v241 = vsel %vm97, %v235, 0
    %v244 = vsel %vm97, %v236, 0
    %246 = vmatprep.subr.mxu0 0.0
    %247 = vmatpush1.msra.mxu0 0.0
    %248 = vmatprep.subr.mxu0 0.0
    %249 = vmatpush1.msra.mxu0 0.0
    %250 = vmatprep.subr.mxu0 0.0
    %251 = vmatpush1.msra.mxu0 0.0
    %252 = vmatprep.subr.mxu0 0.0
    %253 = vmatpush1.msra.mxu0 0.0
    %254 = vmatprep.subr.mxu0 0.0
    %255 = vmatpush1.msra.mxu0 0.0
    %256 = vmatprep.subr.mxu0 0.0
    %257 = vmatpush1.msra.mxu0 0.0
    %258 = vmatprep.subr.mxu0 0.0
    %259 = vmatpush1.msra.mxu0 0.0
    %260 = vmatprep.subr.mxu0 0.0
    %261 = vmatpush1.msra.mxu0 0.0
    %262 = vmatprep.subr.mxu0 0.0
    %263 = vmatpush1.msra.mxu0 0.0
    %264 = vmatprep.subr.mxu0 0.0
    %265 = vmatpush1.msra.mxu0 0.0
    %266 = vmatprep.subr.mxu0 0.0
    %267 = vmatpush1.msra.mxu0 0.0
    %268 = vmatprep.subr.mxu0 0.0
    %269 = vmatpush1.msra.mxu0 0.0
    %270 = vmatprep.subr.mxu0 0.0
    %271 = vmatpush1.msra.mxu0 0.0
    %272 = vmatprep.subr.mxu0 0.0
    %273 = vmatpush1.msra.mxu0 0.0
    %274 = vmatprep.subr.mxu0 0.0
    %275 = vmatpush1.msra.mxu0 0.0
    %276 = vmatprep.subr.mxu0 %v244
    %277 = vmatpush1.msra.mxu0 %v241
    %278 = vmatprep.subr.mxu0 0.0
    %279 = vmatpush2.msra.mxu0 0.0
    %280 = vmatprep.subr.mxu0 0.0
    %281 = vmatpush2.msra.mxu0 0.0
    %282 = vmatprep.subr.mxu0 0.0
    %283 = vmatpush2.msra.mxu0 0.0
    %284 = vmatprep.subr.mxu0 0.0
    %285 = vmatpush2.msra.mxu0 0.0
    %286 = vmatprep.subr.mxu0 0.0
    %287 = vmatpush2.msra.mxu0 0.0
    %288 = vmatprep.subr.mxu0 0.0
    %289 = vmatpush2.msra.mxu0 0.0
    %290 = vmatprep.subr.mxu0 0.0
    %291 = vmatpush2.msra.mxu0 0.0
    %292 = vmatprep.subr.mxu0 0.0
    %293 = vmatpush2.msra.mxu0 0.0
    %294 = vmatprep.subr.mxu0 0.0
    %295 = vmatpush2.msra.mxu0 0.0
    %296 = vmatprep.subr.mxu0 0.0
    %297 = vmatpush2.msra.mxu0 0.0
    %298 = vmatprep.subr.mxu0 0.0
    %299 = vmatpush2.msra.mxu0 0.0
    %300 = vmatprep.subr.mxu0 0.0
    %301 = vmatpush2.msra.mxu0 0.0
    %302 = vmatprep.subr.mxu0 0.0
    %303 = vmatpush2.msra.mxu0 0.0
    %304 = vmatprep.subr.mxu0 0.0
    %305 = vmatpush2.msra.mxu0 0.0
    %306 = vmatprep.subr.mxu0 0.0
    %307 = vmatpush2.msra.mxu0 0.0
    %308 = vmatprep.subr.mxu0 0.0
    %309 = vmatpush2.msra.mxu0 0.0
    %310 = vmatprep.mubr.f32.mxu0 0.0
    %311 = vmatmul.mubr.f32.gmra.mxu0 %v238
    %v312 = vpop.f32.mrf.mxu0
    %v313 = vadd.f32 0.0, %v312
    %v314 = vpop.f32.mrf.mxu0
    %v315 = vadd.f32 0.0, %v314
    %316 = vdwg.mxu0
    %v318 = vsel %vm93, %v50, 0
    %v321 = vsel %vm97, %v173, 0
    %v324 = vsel %vm97, %v174, 0
    %326 = vmatprep.subr.mxu0 0.0
    %327 = vmatpush1.msra.mxu0 0.0
    %328 = vmatprep.subr.mxu0 0.0
    %329 = vmatpush1.msra.mxu0 0.0
    %330 = vmatprep.subr.mxu0 0.0
    %331 = vmatpush1.msra.mxu0 0.0
    %332 = vmatprep.subr.mxu0 0.0
    %333 = vmatpush1.msra.mxu0 0.0
    %334 = vmatprep.subr.mxu0 0.0
    %335 = vmatpush1.msra.mxu0 0.0
    %336 = vmatprep.subr.mxu0 0.0
    %337 = vmatpush1.msra.mxu0 0.0
    %338 = vmatprep.subr.mxu0 0.0
    %339 = vmatpush1.msra.mxu0 0.0
    %340 = vmatprep.subr.mxu0 0.0
    %341 = vmatpush1.msra.mxu0 0.0
    %342 = vmatprep.subr.mxu0 0.0
    %343 = vmatpush1.msra.mxu0 0.0
    %344 = vmatprep.subr.mxu0 0.0
    %345 = vmatpush1.msra.mxu0 0.0
    %346 = vmatprep.subr.mxu0 0.0
    %347 = vmatpush1.msra.mxu0 0.0
    %348 = vmatprep.subr.mxu0 0.0
    %349 = vmatpush1.msra.mxu0 0.0
    %350 = vmatprep.subr.mxu0 0.0
    %351 = vmatpush1.msra.mxu0 0.0
    %352 = vmatprep.subr.mxu0 0.0
    %353 = vmatpush1.msra.mxu0 0.0
    %354 = vmatprep.subr.mxu0 0.0
    %355 = vmatpush1.msra.mxu0 0.0
    %356 = vmatprep.subr.mxu0 %v324
    %357 = vmatpush1.msra.mxu0 %v321
    %358 = vmatprep.subr.mxu0 0.0
    %359 = vmatpush2.msra.mxu0 0.0
    %360 = vmatprep.subr.mxu0 0.0
    %361 = vmatpush2.msra.mxu0 0.0
    %362 = vmatprep.subr.mxu0 0.0
    %363 = vmatpush2.msra.mxu0 0.0
    %364 = vmatprep.subr.mxu0 0.0
    %365 = vmatpush2.msra.mxu0 0.0
    %366 = vmatprep.subr.mxu0 0.0
    %367 = vmatpush2.msra.mxu0 0.0
    %368 = vmatprep.subr.mxu0 0.0
    %369 = vmatpush2.msra.mxu0 0.0
    %370 = vmatprep.subr.mxu0 0.0
    %371 = vmatpush2.msra.mxu0 0.0
    %372 = vmatprep.subr.mxu0 0.0
    %373 = vmatpush2.msra.mxu0 0.0
    %374 = vmatprep.subr.mxu0 0.0
    %375 = vmatpush2.msra.mxu0 0.0
    %376 = vmatprep.subr.mxu0 0.0
    %377 = vmatpush2.msra.mxu0 0.0
    %378 = vmatprep.subr.mxu0 0.0
    %379 = vmatpush2.msra.mxu0 0.0
    %380 = vmatprep.subr.mxu0 0.0
    %381 = vmatpush2.msra.mxu0 0.0
    %382 = vmatprep.subr.mxu0 0.0
    %383 = vmatpush2.msra.mxu0 0.0
    %384 = vmatprep.subr.mxu0 0.0
    %385 = vmatpush2.msra.mxu0 0.0
    %386 = vmatprep.subr.mxu0 0.0
    %387 = vmatpush2.msra.mxu0 0.0
    %388 = vmatprep.subr.mxu0 0.0
    %389 = vmatpush2.msra.mxu0 0.0
    %390 = vmatprep.mubr.f32.mxu0 0.0
    %391 = vmatmul.mubr.f32.gmra.mxu0 %v318
    %v392 = vpop.f32.mrf.mxu0
    %v393 = vadd.f32 %v313, %v392
    %v394 = vpop.f32.mrf.mxu0
    %v395 = vadd.f32 %v315, %v394
    %396 = vdwg.mxu0
    %397 = vrot.lane.b32.xlu0 %v173, 127
    %v398 = vpop.permute.xlu0 %397
    %399 = vrot.lane.b32.xlu0 %v174, 127
    %v400 = vpop.permute.xlu0 %399
    %vm401 = vcmp.lt.s32.totalorder %v180, 127
    %v402 = vsel %vm401, %v398, %v400
    %v403 = vsel %vm401, %v400, %v398
    %v404 = vsel %vm33, 1, 0
    %v405 = vlaneseq
    %v406 = vshrl.u32 %v405, 7
    %v407 = vsub.s32 0, %v406
    %v408 = vrot.slane %v404, %v407
    %v409 = vlaneseq
    %v410 = vshrl.u32 %v409, 7
    %v411 = vsub.s32 1, %v410
    %v412 = vrot.slane %v404, %v411
    %vm413 = vcmp.eq.s32.totalorder %v408, 1
    %vm414 = vcmp.eq.s32.totalorder %v412, 1
    %v415 = vsel %vm413, %v402, 0.0
    %v416 = vsel %vm414, %v403, 0.0
    %v418 = vsel %vm93, %v52, 0
    %v421 = vsel %vm97, %v415, 0
    %v424 = vsel %vm97, %v416, 0
    %426 = vmatprep.subr.mxu0 0.0
    %427 = vmatpush1.msra.mxu0 0.0
    %428 = vmatprep.subr.mxu0 0.0
    %429 = vmatpush1.msra.mxu0 0.0
    %430 = vmatprep.subr.mxu0 0.0
    %431 = vmatpush1.msra.mxu0 0.0
    %432 = vmatprep.subr.mxu0 0.0
    %433 = vmatpush1.msra.mxu0 0.0
    %434 = vmatprep.subr.mxu0 0.0
    %435 = vmatpush1.msra.mxu0 0.0
    %436 = vmatprep.subr.mxu0 0.0
    %437 = vmatpush1.msra.mxu0 0.0
    %438 = vmatprep.subr.mxu0 0.0
    %439 = vmatpush1.msra.mxu0 0.0
    %440 = vmatprep.subr.mxu0 0.0
    %441 = vmatpush1.msra.mxu0 0.0
    %442 = vmatprep.subr.mxu0 0.0
    %443 = vmatpush1.msra.mxu0 0.0
    %444 = vmatprep.subr.mxu0 0.0
    %445 = vmatpush1.msra.mxu0 0.0
    %446 = vmatprep.subr.mxu0 0.0
    %447 = vmatpush1.msra.mxu0 0.0
    %448 = vmatprep.subr.mxu0 0.0
    %449 = vmatpush1.msra.mxu0 0.0
    %450 = vmatprep.subr.mxu0 0.0
    %451 = vmatpush1.msra.mxu0 0.0
    %452 = vmatprep.subr.mxu0 0.0
    %453 = vmatpush1.msra.mxu0 0.0
    %454 = vmatprep.subr.mxu0 0.0
    %455 = vmatpush1.msra.mxu0 0.0
    %456 = vmatprep.subr.mxu0 %v424
    %457 = vmatpush1.msra.mxu0 %v421
    %458 = vmatprep.subr.mxu0 0.0
    %459 = vmatpush2.msra.mxu0 0.0
    %460 = vmatprep.subr.mxu0 0.0
    %461 = vmatpush2.msra.mxu0 0.0
    %462 = vmatprep.subr.mxu0 0.0
    %463 = vmatpush2.msra.mxu0 0.0
    %464 = vmatprep.subr.mxu0 0.0
    %465 = vmatpush2.msra.mxu0 0.0
    %466 = vmatprep.subr.mxu0 0.0
    %467 = vmatpush2.msra.mxu0 0.0
    %468 = vmatprep.subr.mxu0 0.0
    %469 = vmatpush2.msra.mxu0 0.0
    %470 = vmatprep.subr.mxu0 0.0
    %471 = vmatpush2.msra.mxu0 0.0
    %472 = vmatprep.subr.mxu0 0.0
    %473 = vmatpush2.msra.mxu0 0.0
    %474 = vmatprep.subr.mxu0 0.0
    %475 = vmatpush2.msra.mxu0 0.0
    %476 = vmatprep.subr.mxu0 0.0
    %477 = vmatpush2.msra.mxu0 0.0
    %478 = vmatprep.subr.mxu0 0.0
    %479 = vmatpush2.msra.mxu0 0.0
    %480 = vmatprep.subr.mxu0 0.0
    %481 = vmatpush2.msra.mxu0 0.0
    %482 = vmatprep.subr.mxu0 0.0
    %483 = vmatpush2.msra.mxu0 0.0
    %484 = vmatprep.subr.mxu0 0.0
    %485 = vmatpush2.msra.mxu0 0.0
    %486 = vmatprep.subr.mxu0 0.0
    %487 = vmatpush2.msra.mxu0 0.0
    %488 = vmatprep.subr.mxu0 0.0
    %489 = vmatpush2.msra.mxu0 0.0
    %490 = vmatprep.mubr.f32.mxu0 0.0
    %491 = vmatmul.mubr.f32.gmra.mxu0 %v418
    %v492 = vpop.f32.mrf.mxu0
    %v493 = vadd.f32 0.0, %v492
    %v494 = vpop.f32.mrf.mxu0
    %v495 = vadd.f32 0.0, %v494
    %496 = vdwg.mxu0
    %v497 = vadd.f32 %v393, %v493
    %v498 = vadd.f32 %v395, %v495
    %v500 = vsel %vm93, %v44, 0
    %v503 = vsel %vm97, %v195, 0
    %v506 = vsel %vm97, %v196, 0
    %508 = vmatprep.subr.mxu0 0.0
    %509 = vmatpush1.msra.mxu0 0.0
    %510 = vmatprep.subr.mxu0 0.0
    %511 = vmatpush1.msra.mxu0 0.0
    %512 = vmatprep.subr.mxu0 0.0
    %513 = vmatpush1.msra.mxu0 0.0
    %514 = vmatprep.subr.mxu0 0.0
    %515 = vmatpush1.msra.mxu0 0.0
    %516 = vmatprep.subr.mxu0 0.0
    %517 = vmatpush1.msra.mxu0 0.0
    %518 = vmatprep.subr.mxu0 0.0
    %519 = vmatpush1.msra.mxu0 0.0
    %520 = vmatprep.subr.mxu0 0.0
    %521 = vmatpush1.msra.mxu0 0.0
    %522 = vmatprep.subr.mxu0 0.0
    %523 = vmatpush1.msra.mxu0 0.0
    %524 = vmatprep.subr.mxu0 0.0
    %525 = vmatpush1.msra.mxu0 0.0
    %526 = vmatprep.subr.mxu0 0.0
    %527 = vmatpush1.msra.mxu0 0.0
    %528 = vmatprep.subr.mxu0 0.0
    %529 = vmatpush1.msra.mxu0 0.0
    %530 = vmatprep.subr.mxu0 0.0
    %531 = vmatpush1.msra.mxu0 0.0
    %532 = vmatprep.subr.mxu0 0.0
    %533 = vmatpush1.msra.mxu0 0.0
    %534 = vmatprep.subr.mxu0 0.0
    %535 = vmatpush1.msra.mxu0 0.0
    %536 = vmatprep.subr.mxu0 0.0
    %537 = vmatpush1.msra.mxu0 0.0
    %538 = vmatprep.subr.mxu0 %v506
    %539 = vmatpush1.msra.mxu0 %v503
    %540 = vmatprep.subr.mxu0 0.0
    %541 = vmatpush2.msra.mxu0 0.0
    %542 = vmatprep.subr.mxu0 0.0
    %543 = vmatpush2.msra.mxu0 0.0
    %544 = vmatprep.subr.mxu0 0.0
    %545 = vmatpush2.msra.mxu0 0.0
    %546 = vmatprep.subr.mxu0 0.0
    %547 = vmatpush2.msra.mxu0 0.0
    %548 = vmatprep.subr.mxu0 0.0
    %549 = vmatpush2.msra.mxu0 0.0
    %550 = vmatprep.subr.mxu0 0.0
    %551 = vmatpush2.msra.mxu0 0.0
    %552 = vmatprep.subr.mxu0 0.0
    %553 = vmatpush2.msra.mxu0 0.0
    %554 = vmatprep.subr.mxu0 0.0
    %555 = vmatpush2.msra.mxu0 0.0
    %556 = vmatprep.subr.mxu0 0.0
    %557 = vmatpush2.msra.mxu0 0.0
    %558 = vmatprep.subr.mxu0 0.0
    %559 = vmatpush2.msra.mxu0 0.0
    %560 = vmatprep.subr.mxu0 0.0
    %561 = vmatpush2.msra.mxu0 0.0
    %562 = vmatprep.subr.mxu0 0.0
    %563 = vmatpush2.msra.mxu0 0.0
    %564 = vmatprep.subr.mxu0 0.0
    %565 = vmatpush2.msra.mxu0 0.0
    %566 = vmatprep.subr.mxu0 0.0
    %567 = vmatpush2.msra.mxu0 0.0
    %568 = vmatprep.subr.mxu0 0.0
    %569 = vmatpush2.msra.mxu0 0.0
    %570 = vmatprep.subr.mxu0 0.0
    %571 = vmatpush2.msra.mxu0 0.0
    %572 = vmatprep.mubr.f32.mxu0 0.0
    %573 = vmatmul.mubr.f32.gmra.mxu0 %v500
    %v574 = vpop.f32.mrf.mxu0
    %v575 = vadd.f32 0.0, %v574
    %v576 = vpop.f32.mrf.mxu0
    %v577 = vadd.f32 0.0, %v576
    %578 = vdwg.mxu0
    %v579 = vadd.f32 %v497, %v575
    %v580 = vadd.f32 %v498, %v577
    %581 = vrot.lane.b32.xlu0 %v195, 1
    %v582 = vpop.permute.xlu0 %581
    %583 = vrot.lane.b32.xlu0 %v196, 1
    %v584 = vpop.permute.xlu0 %583
    %v585 = vsel %vm221, %v582, %v584
    %v586 = vsel %vm221, %v584, %v582
    %v587 = vsel %vm233, %v586, 0.0
    %v588 = vsel %vm234, %v585, 0.0
    %v590 = vsel %vm93, %v42, 0
    %v593 = vsel %vm97, %v587, 0
    %v596 = vsel %vm97, %v588, 0
    %598 = vmatprep.subr.mxu0 0.0
    %599 = vmatpush1.msra.mxu0 0.0
    %600 = vmatprep.subr.mxu0 0.0
    %601 = vmatpush1.msra.mxu0 0.0
    %602 = vmatprep.subr.mxu0 0.0
    %603 = vmatpush1.msra.mxu0 0.0
    %604 = vmatprep.subr.mxu0 0.0
    %605 = vmatpush1.msra.mxu0 0.0
    %606 = vmatprep.subr.mxu0 0.0
    %607 = vmatpush1.msra.mxu0 0.0
    %608 = vmatprep.subr.mxu0 0.0
    %609 = vmatpush1.msra.mxu0 0.0
    %610 = vmatprep.subr.mxu0 0.0
    %611 = vmatpush1.msra.mxu0 0.0
    %612 = vmatprep.subr.mxu0 0.0
    %613 = vmatpush1.msra.mxu0 0.0
    %614 = vmatprep.subr.mxu0 0.0
    %615 = vmatpush1.msra.mxu0 0.0
    %616 = vmatprep.subr.mxu0 0.0
    %617 = vmatpush1.msra.mxu0 0.0
    %618 = vmatprep.subr.mxu0 0.0
    %619 = vmatpush1.msra.mxu0 0.0
    %620 = vmatprep.subr.mxu0 0.0
    %621 = vmatpush1.msra.mxu0 0.0
    %622 = vmatprep.subr.mxu0 0.0
    %623 = vmatpush1.msra.mxu0 0.0
    %624 = vmatprep.subr.mxu0 0.0
    %625 = vmatpush1.msra.mxu0 0.0
    %626 = vmatprep.subr.mxu0 0.0
    %627 = vmatpush1.msra.mxu0 0.0
    %628 = vmatprep.subr.mxu0 %v596
    %629 = vmatpush1.msra.mxu0 %v593
    %630 = vmatprep.subr.mxu0 0.0
    %631 = vmatpush2.msra.mxu0 0.0
    %632 = vmatprep.subr.mxu0 0.0
    %633 = vmatpush2.msra.mxu0 0.0
    %634 = vmatprep.subr.mxu0 0.0
    %635 = vmatpush2.msra.mxu0 0.0
    %636 = vmatprep.subr.mxu0 0.0
    %637 = vmatpush2.msra.mxu0 0.0
    %638 = vmatprep.subr.mxu0 0.0
    %639 = vmatpush2.msra.mxu0 0.0
    %640 = vmatprep.subr.mxu0 0.0
    %641 = vmatpush2.msra.mxu0 0.0
    %642 = vmatprep.subr.mxu0 0.0
    %643 = vmatpush2.msra.mxu0 0.0
    %644 = vmatprep.subr.mxu0 0.0
    %645 = vmatpush2.msra.mxu0 0.0
    %646 = vmatprep.subr.mxu0 0.0
    %647 = vmatpush2.msra.mxu0 0.0
    %648 = vmatprep.subr.mxu0 0.0
    %649 = vmatpush2.msra.mxu0 0.0
    %650 = vmatprep.subr.mxu0 0.0
    %651 = vmatpush2.msra.mxu0 0.0
    %652 = vmatprep.subr.mxu0 0.0
    %653 = vmatpush2.msra.mxu0 0.0
    %654 = vmatprep.subr.mxu0 0.0
    %655 = vmatpush2.msra.mxu0 0.0
    %656 = vmatprep.subr.mxu0 0.0
    %657 = vmatpush2.msra.mxu0 0.0
    %658 = vmatprep.subr.mxu0 0.0
    %659 = vmatpush2.msra.mxu0 0.0
    %660 = vmatprep.subr.mxu0 0.0
    %661 = vmatpush2.msra.mxu0 0.0
    %662 = vmatprep.mubr.f32.mxu0 0.0
    %663 = vmatmul.mubr.f32.gmra.mxu0 %v590
    %v664 = vpop.f32.mrf.mxu0
    %v665 = vadd.f32 0.0, %v664
    %v666 = vpop.f32.mrf.mxu0
    %v667 = vadd.f32 0.0, %v666
    %668 = vdwg.mxu0
    %v669 = vadd.f32 %v579, %v665
    %v670 = vadd.f32 %v580, %v667
    %671 = vrot.lane.b32.xlu0 %v195, 127
    %v672 = vpop.permute.xlu0 %671
    %673 = vrot.lane.b32.xlu0 %v196, 127
    %v674 = vpop.permute.xlu0 %673
    %v675 = vsel %vm401, %v672, %v674
    %v676 = vsel %vm401, %v674, %v672
    %v677 = vsel %vm413, %v675, 0.0
    %v678 = vsel %vm414, %v676, 0.0
    %v680 = vsel %vm93, %v46, 0
    %v683 = vsel %vm97, %v677, 0
    %v686 = vsel %vm97, %v678, 0
    %688 = vmatprep.subr.mxu0 0.0
    %689 = vmatpush1.msra.mxu0 0.0
    %690 = vmatprep.subr.mxu0 0.0
    %691 = vmatpush1.msra.mxu0 0.0
    %692 = vmatprep.subr.mxu0 0.0
    %693 = vmatpush1.msra.mxu0 0.0
    %694 = vmatprep.subr.mxu0 0.0
    %695 = vmatpush1.msra.mxu0 0.0
    %696 = vmatprep.subr.mxu0 0.0
    %697 = vmatpush1.msra.mxu0 0.0
    %698 = vmatprep.subr.mxu0 0.0
    %699 = vmatpush1.msra.mxu0 0.0
    %700 = vmatprep.subr.mxu0 0.0
    %701 = vmatpush1.msra.mxu0 0.0
    %702 = vmatprep.subr.mxu0 0.0
    %703 = vmatpush1.msra.mxu0 0.0
    %704 = vmatprep.subr.mxu0 0.0
    %705 = vmatpush1.msra.mxu0 0.0
    %706 = vmatprep.subr.mxu0 0.0
    %707 = vmatpush1.msra.mxu0 0.0
    %708 = vmatprep.subr.mxu0 0.0
    %709 = vmatpush1.msra.mxu0 0.0
    %710 = vmatprep.subr.mxu0 0.0
    %711 = vmatpush1.msra.mxu0 0.0
    %712 = vmatprep.subr.mxu0 0.0
    %713 = vmatpush1.msra.mxu0 0.0
    %714 = vmatprep.subr.mxu0 0.0
    %715 = vmatpush1.msra.mxu0 0.0
    %716 = vmatprep.subr.mxu0 0.0
    %717 = vmatpush1.msra.mxu0 0.0
    %718 = vmatprep.subr.mxu0 %v686
    %719 = vmatpush1.msra.mxu0 %v683
    %720 = vmatprep.subr.mxu0 0.0
    %721 = vmatpush2.msra.mxu0 0.0
    %722 = vmatprep.subr.mxu0 0.0
    %723 = vmatpush2.msra.mxu0 0.0
    %724 = vmatprep.subr.mxu0 0.0
    %725 = vmatpush2.msra.mxu0 0.0
    %726 = vmatprep.subr.mxu0 0.0
    %727 = vmatpush2.msra.mxu0 0.0
    %728 = vmatprep.subr.mxu0 0.0
    %729 = vmatpush2.msra.mxu0 0.0
    %730 = vmatprep.subr.mxu0 0.0
    %731 = vmatpush2.msra.mxu0 0.0
    %732 = vmatprep.subr.mxu0 0.0
    %733 = vmatpush2.msra.mxu0 0.0
    %734 = vmatprep.subr.mxu0 0.0
    %735 = vmatpush2.msra.mxu0 0.0
    %736 = vmatprep.subr.mxu0 0.0
    %737 = vmatpush2.msra.mxu0 0.0
    %738 = vmatprep.subr.mxu0 0.0
    %739 = vmatpush2.msra.mxu0 0.0
    %740 = vmatprep.subr.mxu0 0.0
    %741 = vmatpush2.msra.mxu0 0.0
    %742 = vmatprep.subr.mxu0 0.0
    %743 = vmatpush2.msra.mxu0 0.0
    %744 = vmatprep.subr.mxu0 0.0
    %745 = vmatpush2.msra.mxu0 0.0
    %746 = vmatprep.subr.mxu0 0.0
    %747 = vmatpush2.msra.mxu0 0.0
    %748 = vmatprep.subr.mxu0 0.0
    %749 = vmatpush2.msra.mxu0 0.0
    %750 = vmatprep.subr.mxu0 0.0
    %751 = vmatpush2.msra.mxu0 0.0
    %752 = vmatprep.mubr.f32.mxu0 0.0
    %753 = vmatmul.mubr.f32.gmra.mxu0 %v680
    %v754 = vpop.f32.mrf.mxu0
    %v755 = vadd.f32 0.0, %v754
    %v756 = vpop.f32.mrf.mxu0
    %v757 = vadd.f32 0.0, %v756
    %758 = vdwg.mxu0
    %v759 = vadd.f32 %v669, %v755
    %v760 = vadd.f32 %v670, %v757
    %v762 = vsel %vm93, %v56, 0
    %v765 = vsel %vm97, %v215, 0
    %v768 = vsel %vm97, %v216, 0
    %770 = vmatprep.subr.mxu0 0.0
    %771 = vmatpush1.msra.mxu0 0.0
    %772 = vmatprep.subr.mxu0 0.0
    %773 = vmatpush1.msra.mxu0 0.0
    %774 = vmatprep.subr.mxu0 0.0
    %775 = vmatpush1.msra.mxu0 0.0
    %776 = vmatprep.subr.mxu0 0.0
    %777 = vmatpush1.msra.mxu0 0.0
    %778 = vmatprep.subr.mxu0 0.0
    %779 = vmatpush1.msra.mxu0 0.0
    %780 = vmatprep.subr.mxu0 0.0
    %781 = vmatpush1.msra.mxu0 0.0
    %782 = vmatprep.subr.mxu0 0.0
    %783 = vmatpush1.msra.mxu0 0.0
    %784 = vmatprep.subr.mxu0 0.0
    %785 = vmatpush1.msra.mxu0 0.0
    %786 = vmatprep.subr.mxu0 0.0
    %787 = vmatpush1.msra.mxu0 0.0
    %788 = vmatprep.subr.mxu0 0.0
    %789 = vmatpush1.msra.mxu0 0.0
    %790 = vmatprep.subr.mxu0 0.0
    %791 = vmatpush1.msra.mxu0 0.0
    %792 = vmatprep.subr.mxu0 0.0
    %793 = vmatpush1.msra.mxu0 0.0
    %794 = vmatprep.subr.mxu0 0.0
    %795 = vmatpush1.msra.mxu0 0.0
    %796 = vmatprep.subr.mxu0 0.0
    %797 = vmatpush1.msra.mxu0 0.0
    %798 = vmatprep.subr.mxu0 0.0
    %799 = vmatpush1.msra.mxu0 0.0
    %800 = vmatprep.subr.mxu0 %v768
    %801 = vmatpush1.msra.mxu0 %v765
    %802 = vmatprep.subr.mxu0 0.0
    %803 = vmatpush2.msra.mxu0 0.0
    %804 = vmatprep.subr.mxu0 0.0
    %805 = vmatpush2.msra.mxu0 0.0
    %806 = vmatprep.subr.mxu0 0.0
    %807 = vmatpush2.msra.mxu0 0.0
    %808 = vmatprep.subr.mxu0 0.0
    %809 = vmatpush2.msra.mxu0 0.0
    %810 = vmatprep.subr.mxu0 0.0
    %811 = vmatpush2.msra.mxu0 0.0
    %812 = vmatprep.subr.mxu0 0.0
    %813 = vmatpush2.msra.mxu0 0.0
    %814 = vmatprep.subr.mxu0 0.0
    %815 = vmatpush2.msra.mxu0 0.0
    %816 = vmatprep.subr.mxu0 0.0
    %817 = vmatpush2.msra.mxu0 0.0
    %818 = vmatprep.subr.mxu0 0.0
    %819 = vmatpush2.msra.mxu0 0.0
    %820 = vmatprep.subr.mxu0 0.0
    %821 = vmatpush2.msra.mxu0 0.0
    %822 = vmatprep.subr.mxu0 0.0
    %823 = vmatpush2.msra.mxu0 0.0
    %824 = vmatprep.subr.mxu0 0.0
    %825 = vmatpush2.msra.mxu0 0.0
    %826 = vmatprep.subr.mxu0 0.0
    %827 = vmatpush2.msra.mxu0 0.0
    %828 = vmatprep.subr.mxu0 0.0
    %829 = vmatpush2.msra.mxu0 0.0
    %830 = vmatprep.subr.mxu0 0.0
    %831 = vmatpush2.msra.mxu0 0.0
    %832 = vmatprep.subr.mxu0 0.0
    %833 = vmatpush2.msra.mxu0 0.0
    %834 = vmatprep.mubr.f32.mxu0 0.0
    %835 = vmatmul.mubr.f32.gmra.mxu0 %v762
    %v836 = vpop.f32.mrf.mxu0
    %v837 = vadd.f32 0.0, %v836
    %v838 = vpop.f32.mrf.mxu0
    %v839 = vadd.f32 0.0, %v838
    %840 = vdwg.mxu0
    %v841 = vadd.f32 %v759, %v837
    %v842 = vadd.f32 %v760, %v839
    %843 = vrot.lane.b32.xlu0 %v215, 1
    %v844 = vpop.permute.xlu0 %843
    %845 = vrot.lane.b32.xlu0 %v216, 1
    %v846 = vpop.permute.xlu0 %845
    %v847 = vsel %vm221, %v844, %v846
    %v848 = vsel %vm221, %v846, %v844
    %v849 = vsel %vm233, %v848, 0.0
    %v850 = vsel %vm234, %v847, 0.0
    %v852 = vsel %vm93, %v54, 0
    %v855 = vsel %vm97, %v849, 0
    %v858 = vsel %vm97, %v850, 0
    %860 = vmatprep.subr.mxu0 0.0
    %861 = vmatpush1.msra.mxu0 0.0
    %862 = vmatprep.subr.mxu0 0.0
    %863 = vmatpush1.msra.mxu0 0.0
    %864 = vmatprep.subr.mxu0 0.0
    %865 = vmatpush1.msra.mxu0 0.0
    %866 = vmatprep.subr.mxu0 0.0
    %867 = vmatpush1.msra.mxu0 0.0
    %868 = vmatprep.subr.mxu0 0.0
    %869 = vmatpush1.msra.mxu0 0.0
    %870 = vmatprep.subr.mxu0 0.0
    %871 = vmatpush1.msra.mxu0 0.0
    %872 = vmatprep.subr.mxu0 0.0
    %873 = vmatpush1.msra.mxu0 0.0
    %874 = vmatprep.subr.mxu0 0.0
    %875 = vmatpush1.msra.mxu0 0.0
    %876 = vmatprep.subr.mxu0 0.0
    %877 = vmatpush1.msra.mxu0 0.0
    %878 = vmatprep.subr.mxu0 0.0
    %879 = vmatpush1.msra.mxu0 0.0
    %880 = vmatprep.subr.mxu0 0.0
    %881 = vmatpush1.msra.mxu0 0.0
    %882 = vmatprep.subr.mxu0 0.0
    %883 = vmatpush1.msra.mxu0 0.0
    %884 = vmatprep.subr.mxu0 0.0
    %885 = vmatpush1.msra.mxu0 0.0
    %886 = vmatprep.subr.mxu0 0.0
    %887 = vmatpush1.msra.mxu0 0.0
    %888 = vmatprep.subr.mxu0 0.0
    %889 = vmatpush1.msra.mxu0 0.0
    %890 = vmatprep.subr.mxu0 %v858
    %891 = vmatpush1.msra.mxu0 %v855
    %892 = vmatprep.subr.mxu0 0.0
    %893 = vmatpush2.msra.mxu0 0.0
    %894 = vmatprep.subr.mxu0 0.0
    %895 = vmatpush2.msra.mxu0 0.0
    %896 = vmatprep.subr.mxu0 0.0
    %897 = vmatpush2.msra.mxu0 0.0
    %898 = vmatprep.subr.mxu0 0.0
    %899 = vmatpush2.msra.mxu0 0.0
    %900 = vmatprep.subr.mxu0 0.0
    %901 = vmatpush2.msra.mxu0 0.0
    %902 = vmatprep.subr.mxu0 0.0
    %903 = vmatpush2.msra.mxu0 0.0
    %904 = vmatprep.subr.mxu0 0.0
    %905 = vmatpush2.msra.mxu0 0.0
    %906 = vmatprep.subr.mxu0 0.0
    %907 = vmatpush2.msra.mxu0 0.0
    %908 = vmatprep.subr.mxu0 0.0
    %909 = vmatpush2.msra.mxu0 0.0
    %910 = vmatprep.subr.mxu0 0.0
    %911 = vmatpush2.msra.mxu0 0.0
    %912 = vmatprep.subr.mxu0 0.0
    %913 = vmatpush2.msra.mxu0 0.0
    %914 = vmatprep.subr.mxu0 0.0
    %915 = vmatpush2.msra.mxu0 0.0
    %916 = vmatprep.subr.mxu0 0.0
    %917 = vmatpush2.msra.mxu0 0.0
    %918 = vmatprep.subr.mxu0 0.0
    %919 = vmatpush2.msra.mxu0 0.0
    %920 = vmatprep.subr.mxu0 0.0
    %921 = vmatpush2.msra.mxu0 0.0
    %922 = vmatprep.subr.mxu0 0.0
    %923 = vmatpush2.msra.mxu0 0.0
    %924 = vmatprep.mubr.f32.mxu0 0.0
    %925 = vmatmul.mubr.f32.gmra.mxu0 %v852
    %v926 = vpop.f32.mrf.mxu0
    %v927 = vadd.f32 0.0, %v926
    %v928 = vpop.f32.mrf.mxu0
    %v929 = vadd.f32 0.0, %v928
    %930 = vdwg.mxu0
    %v931 = vadd.f32 %v841, %v927
    %v932 = vadd.f32 %v842, %v929
    %933 = vrot.lane.b32.xlu0 %v215, 127
    %v934 = vpop.permute.xlu0 %933
    %935 = vrot.lane.b32.xlu0 %v216, 127
    %v936 = vpop.permute.xlu0 %935
    %v937 = vsel %vm401, %v934, %v936
    %v938 = vsel %vm401, %v936, %v934
    %v939 = vsel %vm413, %v937, 0.0
    %v940 = vsel %vm414, %v938, 0.0
    %v942 = vsel %vm93, %v58, 0
    %v945 = vsel %vm97, %v939, 0
    %v948 = vsel %vm97, %v940, 0
    %950 = vmatprep.subr.mxu0 0.0
    %951 = vmatpush1.msra.mxu0 0.0
    %952 = vmatprep.subr.mxu0 0.0
    %953 = vmatpush1.msra.mxu0 0.0
    %954 = vmatprep.subr.mxu0 0.0
    %955 = vmatpush1.msra.mxu0 0.0
    %956 = vmatprep.subr.mxu0 0.0
    %957 = vmatpush1.msra.mxu0 0.0
    %958 = vmatprep.subr.mxu0 0.0
    %959 = vmatpush1.msra.mxu0 0.0
    %960 = vmatprep.subr.mxu0 0.0
    %961 = vmatpush1.msra.mxu0 0.0
    %962 = vmatprep.subr.mxu0 0.0
    %963 = vmatpush1.msra.mxu0 0.0
    %964 = vmatprep.subr.mxu0 0.0
    %965 = vmatpush1.msra.mxu0 0.0
    %966 = vmatprep.subr.mxu0 0.0
    %967 = vmatpush1.msra.mxu0 0.0
    %968 = vmatprep.subr.mxu0 0.0
    %969 = vmatpush1.msra.mxu0 0.0
    %970 = vmatprep.subr.mxu0 0.0
    %971 = vmatpush1.msra.mxu0 0.0
    %972 = vmatprep.subr.mxu0 0.0
    %973 = vmatpush1.msra.mxu0 0.0
    %974 = vmatprep.subr.mxu0 0.0
    %975 = vmatpush1.msra.mxu0 0.0
    %976 = vmatprep.subr.mxu0 0.0
    %977 = vmatpush1.msra.mxu0 0.0
    %978 = vmatprep.subr.mxu0 0.0
    %979 = vmatpush1.msra.mxu0 0.0
    %980 = vmatprep.subr.mxu0 %v948
    %981 = vmatpush1.msra.mxu0 %v945
    %982 = vmatprep.subr.mxu0 0.0
    %983 = vmatpush2.msra.mxu0 0.0
    %984 = vmatprep.subr.mxu0 0.0
    %985 = vmatpush2.msra.mxu0 0.0
    %986 = vmatprep.subr.mxu0 0.0
    %987 = vmatpush2.msra.mxu0 0.0
    %988 = vmatprep.subr.mxu0 0.0
    %989 = vmatpush2.msra.mxu0 0.0
    %990 = vmatprep.subr.mxu0 0.0
    %991 = vmatpush2.msra.mxu0 0.0
    %992 = vmatprep.subr.mxu0 0.0
    %993 = vmatpush2.msra.mxu0 0.0
    %994 = vmatprep.subr.mxu0 0.0
    %995 = vmatpush2.msra.mxu0 0.0
    %996 = vmatprep.subr.mxu0 0.0
    %997 = vmatpush2.msra.mxu0 0.0
    %998 = vmatprep.subr.mxu0 0.0
    %999 = vmatpush2.msra.mxu0 0.0
    %1000 = vmatprep.subr.mxu0 0.0
    %1001 = vmatpush2.msra.mxu0 0.0
    %1002 = vmatprep.subr.mxu0 0.0
    %1003 = vmatpush2.msra.mxu0 0.0
    %1004 = vmatprep.subr.mxu0 0.0
    %1005 = vmatpush2.msra.mxu0 0.0
    %1006 = vmatprep.subr.mxu0 0.0
    %1007 = vmatpush2.msra.mxu0 0.0
    %1008 = vmatprep.subr.mxu0 0.0
    %1009 = vmatpush2.msra.mxu0 0.0
    %1010 = vmatprep.subr.mxu0 0.0
    %1011 = vmatpush2.msra.mxu0 0.0
    %1012 = vmatprep.subr.mxu0 0.0
    %1013 = vmatpush2.msra.mxu0 0.0
    %1014 = vmatprep.mubr.f32.mxu0 0.0
    %1015 = vmatmul.mubr.f32.gmra.mxu0 %v942
    %v1016 = vpop.f32.mrf.mxu0
    %v1017 = vadd.f32 0.0, %v1016
    %v1018 = vpop.f32.mrf.mxu0
    %v1019 = vadd.f32 0.0, %v1018
    %1020 = vdwg.mxu0
    %v1021 = vadd.f32 %v931, %v1017
    %v1022 = vadd.f32 %v932, %v1019
    %1023 = vset.pattern.permute.xlu0 3
    %1024 = vperm.xlu0 %1023, %v27
    %v1025 = vpop.permute.xlu0 %1024
    %v1027 = vadd.f32 %v1021, %v1025
    %v1028 = vadd.f32 %v1022, %v1025
    %v1029 = vmax.f32 %v1027, 0.0
    %v1030 = vmax.f32 %v1028, 0.0
    %1032 = vset.pattern.permute.xlu0 4
    %1033 = vperm.xlu0 %1032, %v28
    %v1034 = vpop.permute.xlu0 %1033
    %v1037 = vsel %vm93, %v41, 0
    %v1040 = vsel %vm97, %v1029, 0
    %v1043 = vsel %vm97, %v1030, 0
    %1045 = vmatprep.subr.mxu0 0.0
    %1046 = vmatpush1.msra.mxu0 0.0
    %1047 = vmatprep.subr.mxu0 0.0
    %1048 = vmatpush1.msra.mxu0 0.0
    %1049 = vmatprep.subr.mxu0 0.0
    %1050 = vmatpush1.msra.mxu0 0.0
    %1051 = vmatprep.subr.mxu0 0.0
    %1052 = vmatpush1.msra.mxu0 0.0
    %1053 = vmatprep.subr.mxu0 0.0
    %1054 = vmatpush1.msra.mxu0 0.0
    %1055 = vmatprep.subr.mxu0 0.0
    %1056 = vmatpush1.msra.mxu0 0.0
    %1057 = vmatprep.subr.mxu0 0.0
    %1058 = vmatpush1.msra.mxu0 0.0
    %1059 = vmatprep.subr.mxu0 0.0
    %1060 = vmatpush1.msra.mxu0 0.0
    %1061 = vmatprep.subr.mxu0 0.0
    %1062 = vmatpush1.msra.mxu0 0.0
    %1063 = vmatprep.subr.mxu0 0.0
    %1064 = vmatpush1.msra.mxu0 0.0
    %1065 = vmatprep.subr.mxu0 0.0
    %1066 = vmatpush1.msra.mxu0 0.0
    %1067 = vmatprep.subr.mxu0 0.0
    %1068 = vmatpush1.msra.mxu0 0.0
    %1069 = vmatprep.subr.mxu0 0.0
    %1070 = vmatpush1.msra.mxu0 0.0
    %1071 = vmatprep.subr.mxu0 0.0
    %1072 = vmatpush1.msra.mxu0 0.0
    %1073 = vmatprep.subr.mxu0 0.0
    %1074 = vmatpush1.msra.mxu0 0.0
    %1075 = vmatprep.subr.mxu0 %v1043
    %1076 = vmatpush1.msra.mxu0 %v1040
    %1077 = vmatprep.subr.mxu0 0.0
    %1078 = vmatpush2.msra.mxu0 0.0
    %1079 = vmatprep.subr.mxu0 0.0
    %1080 = vmatpush2.msra.mxu0 0.0
    %1081 = vmatprep.subr.mxu0 0.0
    %1082 = vmatpush2.msra.mxu0 0.0
    %1083 = vmatprep.subr.mxu0 0.0
    %1084 = vmatpush2.msra.mxu0 0.0
    %1085 = vmatprep.subr.mxu0 0.0
    %1086 = vmatpush2.msra.mxu0 0.0
    %1087 = vmatprep.subr.mxu0 0.0
    %1088 = vmatpush2.msra.mxu0 0.0
    %1089 = vmatprep.subr.mxu0 0.0
    %1090 = vmatpush2.msra.mxu0 0.0
    %1091 = vmatprep.subr.mxu0 0.0
    %1092 = vmatpush2.msra.mxu0 0.0
    %1093 = vmatprep.subr.mxu0 0.0
    %1094 = vmatpush2.msra.mxu0 0.0
    %1095 = vmatprep.subr.mxu0 0.0
    %1096 = vmatpush2.msra.mxu0 0.0
    %1097 = vmatprep.subr.mxu0 0.0
    %1098 = vmatpush2.msra.mxu0 0.0
    %1099 = vmatprep.subr.mxu0 0.0
    %1100 = vmatpush2.msra.mxu0 0.0
    %1101 = vmatprep.subr.mxu0 0.0
    %1102 = vmatpush2.msra.mxu0 0.0
    %1103 = vmatprep.subr.mxu0 0.0
    %1104 = vmatpush2.msra.mxu0 0.0
    %1105 = vmatprep.subr.mxu0 0.0
    %1106 = vmatpush2.msra.mxu0 0.0
    %1107 = vmatprep.subr.mxu0 0.0
    %1108 = vmatpush2.msra.mxu0 0.0
    %1109 = vmatprep.mubr.f32.mxu0 0.0
    %1110 = vmatmul.mubr.f32.gmra.mxu0 %v1037
    %v1111 = vpop.f32.mrf.mxu0
    %v1112 = vadd.f32 %v1034, %v1111
    %v1113 = vpop.f32.mrf.mxu0
    %v1114 = vadd.f32 %v1034, %v1113
    %1115 = vdwg.mxu0
    %1116 = vset.pattern.permute.xlu0 5
    %1117 = vperm.xlu0 %1116, %v28
    %v1118 = vpop.permute.xlu0 %1117
    %v1121 = vcombine.high %v60, %v60
    %v1123 = vsel %vm93, %v59, 0
    %v1125 = vsel %vm97, %v60, 0
    %v1127 = vsel %vm97, %v1121, 0
    %1129 = vmatprep.subr.mxu0 0.0
    %1130 = vmatpush1.msra.mxu0 0.0
    %1131 = vmatprep.subr.mxu0 0.0
    %1132 = vmatpush1.msra.mxu0 0.0
    %1133 = vmatprep.subr.mxu0 0.0
    %1134 = vmatpush1.msra.mxu0 0.0
    %1135 = vmatprep.subr.mxu0 0.0
    %1136 = vmatpush1.msra.mxu0 0.0
    %1137 = vmatprep.subr.mxu0 0.0
    %1138 = vmatpush1.msra.mxu0 0.0
    %1139 = vmatprep.subr.mxu0 0.0
    %1140 = vmatpush1.msra.mxu0 0.0
    %1141 = vmatprep.subr.mxu0 0.0
    %1142 = vmatpush1.msra.mxu0 0.0
    %1143 = vmatprep.subr.mxu0 0.0
    %1144 = vmatpush1.msra.mxu0 0.0
    %1145 = vmatprep.subr.mxu0 0.0
    %1146 = vmatpush1.msra.mxu0 0.0
    %1147 = vmatprep.subr.mxu0 0.0
    %1148 = vmatpush1.msra.mxu0 0.0
    %1149 = vmatprep.subr.mxu0 0.0
    %1150 = vmatpush1.msra.mxu0 0.0
    %1151 = vmatprep.subr.mxu0 0.0
    %1152 = vmatpush1.msra.mxu0 0.0
    %1153 = vmatprep.subr.mxu0 0.0
    %1154 = vmatpush1.msra.mxu0 0.0
    %1155 = vmatprep.subr.mxu0 0.0
    %1156 = vmatpush1.msra.mxu0 0.0
    %1157 = vmatprep.subr.mxu0 0.0
    %1158 = vmatpush1.msra.mxu0 0.0
    %1159 = vmatprep.subr.mxu0 %v1127
    %1160 = vmatpush1.msra.mxu0 %v1125
    %1161 = vmatprep.subr.mxu0 0.0
    %1162 = vmatpush2.msra.mxu0 0.0
    %1163 = vmatprep.subr.mxu0 0.0
    %1164 = vmatpush2.msra.mxu0 0.0
    %1165 = vmatprep.subr.mxu0 0.0
    %1166 = vmatpush2.msra.mxu0 0.0
    %1167 = vmatprep.subr.mxu0 0.0
    %1168 = vmatpush2.msra.mxu0 0.0
    %1169 = vmatprep.subr.mxu0 0.0
    %1170 = vmatpush2.msra.mxu0 0.0
    %1171 = vmatprep.subr.mxu0 0.0
    %1172 = vmatpush2.msra.mxu0 0.0
    %1173 = vmatprep.subr.mxu0 0.0
    %1174 = vmatpush2.msra.mxu0 0.0
    %1175 = vmatprep.subr.mxu0 0.0
    %1176 = vmatpush2.msra.mxu0 0.0
    %1177 = vmatprep.subr.mxu0 0.0
    %1178 = vmatpush2.msra.mxu0 0.0
    %1179 = vmatprep.subr.mxu0 0.0
    %1180 = vmatpush2.msra.mxu0 0.0
    %1181 = vmatprep.subr.mxu0 0.0
    %1182 = vmatpush2.msra.mxu0 0.0
    %1183 = vmatprep.subr.mxu0 0.0
    %1184 = vmatpush2.msra.mxu0 0.0
    %1185 = vmatprep.subr.mxu0 0.0
    %1186 = vmatpush2.msra.mxu0 0.0
    %1187 = vmatprep.subr.mxu0 0.0
    %1188 = vmatpush2.msra.mxu0 0.0
    %1189 = vmatprep.subr.mxu0 0.0
    %1190 = vmatpush2.msra.mxu0 0.0
    %1191 = vmatprep.subr.mxu0 0.0
    %1192 = vmatpush2.msra.mxu0 0.0
    %1193 = vmatprep.mubr.f32.mxu0 0.0
    %1194 = vmatmul.mubr.f32.gmra.mxu0 %v1123
    %v1195 = vpop.f32.mrf.mxu0
    %v1196 = vadd.f32 %v1118, %v1195
    %v1197 = vpop.f32.mrf.mxu0
    %v1198 = vadd.f32 %v1118, %v1197
    %1199 = vdwg.mxu0
    %v1200 = vadd.f32 %v1196, %v1112
    %v1201 = vadd.f32 %v1198, %v1114
    %1202 = vst [vmem:[#allocation2] sm:$0xff] %v1200
    %1203 = vst [vmem:[#allocation2 + $0x8] sm:$0xff] %v1201
    %s1204 = scalar_lea.vmem %s0, 8
    %v1205 = vld [vmem:[%s1204] sm:$0xff]
    %v1206 = vmul.f32 %v1205, %v71
    %v1207 = vadd.f32 %v1206, %v83
    %v1208 = vmax.f32 %v1207, 0.0
    %v1210 = vcombine.high %v1208, %v1208
    %v1211 = vsel %vm97, %v1208, 0
    %v1213 = vsel %vm97, %v1210, 0
    %1215 = vmatprep.subr.mxu0 0.0
    %1216 = vmatpush1.msra.mxu0 0.0
    %1217 = vmatprep.subr.mxu0 0.0
    %1218 = vmatpush1.msra.mxu0 0.0
    %1219 = vmatprep.subr.mxu0 0.0
    %1220 = vmatpush1.msra.mxu0 0.0
    %1221 = vmatprep.subr.mxu0 0.0
    %1222 = vmatpush1.msra.mxu0 0.0
    %1223 = vmatprep.subr.mxu0 0.0
    %1224 = vmatpush1.msra.mxu0 0.0
    %1225 = vmatprep.subr.mxu0 0.0
    %1226 = vmatpush1.msra.mxu0 0.0
    %1227 = vmatprep.subr.mxu0 0.0
    %1228 = vmatpush1.msra.mxu0 0.0
    %1229 = vmatprep.subr.mxu0 0.0
    %1230 = vmatpush1.msra.mxu0 0.0
    %1231 = vmatprep.subr.mxu0 0.0
    %1232 = vmatpush1.msra.mxu0 0.0
    %1233 = vmatprep.subr.mxu0 0.0
    %1234 = vmatpush1.msra.mxu0 0.0
    %1235 = vmatprep.subr.mxu0 0.0
    %1236 = vmatpush1.msra.mxu0 0.0
    %1237 = vmatprep.subr.mxu0 0.0
    %1238 = vmatpush1.msra.mxu0 0.0
    %1239 = vmatprep.subr.mxu0 0.0
    %1240 = vmatpush1.msra.mxu0 0.0
    %1241 = vmatprep.subr.mxu0 0.0
    %1242 = vmatpush1.msra.mxu0 0.0
    %1243 = vmatprep.subr.mxu0 0.0
    %1244 = vmatpush1.msra.mxu0 0.0
    %1245 = vmatprep.subr.mxu0 %v1213
    %1246 = vmatpush1.msra.mxu0 %v1211
    %1247 = vmatprep.subr.mxu0 0.0
    %1248 = vmatpush2.msra.mxu0 0.0
    %1249 = vmatprep.subr.mxu0 0.0
    %1250 = vmatpush2.msra.mxu0 0.0
    %1251 = vmatprep.subr.mxu0 0.0
    %1252 = vmatpush2.msra.mxu0 0.0
    %1253 = vmatprep.subr.mxu0 0.0
    %1254 = vmatpush2.msra.mxu0 0.0
    %1255 = vmatprep.subr.mxu0 0.0
    %1256 = vmatpush2.msra.mxu0 0.0
    %1257 = vmatprep.subr.mxu0 0.0
    %1258 = vmatpush2.msra.mxu0 0.0
    %1259 = vmatprep.subr.mxu0 0.0
    %1260 = vmatpush2.msra.mxu0 0.0
    %1261 = vmatprep.subr.mxu0 0.0
    %1262 = vmatpush2.msra.mxu0 0.0
    %1263 = vmatprep.subr.mxu0 0.0
    %1264 = vmatpush2.msra.mxu0 0.0
    %1265 = vmatprep.subr.mxu0 0.0
    %1266 = vmatpush2.msra.mxu0 0.0
    %1267 = vmatprep.subr.mxu0 0.0
    %1268 = vmatpush2.msra.mxu0 0.0
    %1269 = vmatprep.subr.mxu0 0.0
    %1270 = vmatpush2.msra.mxu0 0.0
    %1271 = vmatprep.subr.mxu0 0.0
    %1272 = vmatpush2.msra.mxu0 0.0
    %1273 = vmatprep.subr.mxu0 0.0
    %1274 = vmatpush2.msra.mxu0 0.0
    %1275 = vmatprep.subr.mxu0 0.0
    %1276 = vmatpush2.msra.mxu0 0.0
    %1277 = vmatprep.subr.mxu0 0.0
    %1278 = vmatpush2.msra.mxu0 0.0
    %1279 = vmatprep.mubr.f32.mxu0 0.0
    %1280 = vmatmul.mubr.f32.gmra.mxu0 %v95
    %v1281 = vpop.f32.mrf.mxu0
    %v1282 = vadd.f32 %v89, %v1281
    %v1283 = vpop.f32.mrf.mxu0
    %v1284 = vadd.f32 %v89, %v1283
    %1285 = vdwg.mxu0
    %v1286 = vmax.f32 %v1282, 0.0
    %v1287 = vmax.f32 %v1284, 0.0
    %1288 = vrot.lane.b32.xlu0 %v1286, 16
    %v1289 = vpop.permute.xlu0 %1288
    %1290 = vrot.lane.b32.xlu0 %v1287, 16
    %v1291 = vpop.permute.xlu0 %1290
    %v1292 = vsel %vm181, %v1289, %v1291
    %v1293 = vsel %vm181, %v1291, %v1289
    %v1294 = vsel %vm193, %v1293, 0.0
    %v1295 = vsel %vm194, %v1292, 0.0
    %1296 = vrot.lane.b32.xlu0 %v1286, 112
    %v1297 = vpop.permute.xlu0 %1296
    %1298 = vrot.lane.b32.xlu0 %v1287, 112
    %v1299 = vpop.permute.xlu0 %1298
    %v1300 = vsel %vm201, %v1297, %v1299
    %v1301 = vsel %vm201, %v1299, %v1297
    %v1302 = vsel %vm213, %v1300, 0.0
    %v1303 = vsel %vm214, %v1301, 0.0
    %1304 = vrot.lane.b32.xlu0 %v1286, 1
    %v1305 = vpop.permute.xlu0 %1304
    %1306 = vrot.lane.b32.xlu0 %v1287, 1
    %v1307 = vpop.permute.xlu0 %1306
    %v1308 = vsel %vm221, %v1305, %v1307
    %v1309 = vsel %vm221, %v1307, %v1305
    %v1310 = vsel %vm233, %v1309, 0.0
    %v1311 = vsel %vm234, %v1308, 0.0
    %v1313 = vsel %vm97, %v1310, 0
    %v1316 = vsel %vm97, %v1311, 0
    %1318 = vmatprep.subr.mxu0 0.0
    %1319 = vmatpush1.msra.mxu0 0.0
    %1320 = vmatprep.subr.mxu0 0.0
    %1321 = vmatpush1.msra.mxu0 0.0
    %1322 = vmatprep.subr.mxu0 0.0
    %1323 = vmatpush1.msra.mxu0 0.0
    %1324 = vmatprep.subr.mxu0 0.0
    %1325 = vmatpush1.msra.mxu0 0.0
    %1326 = vmatprep.subr.mxu0 0.0
    %1327 = vmatpush1.msra.mxu0 0.0
    %1328 = vmatprep.subr.mxu0 0.0
    %1329 = vmatpush1.msra.mxu0 0.0
    %1330 = vmatprep.subr.mxu0 0.0
    %1331 = vmatpush1.msra.mxu0 0.0
    %1332 = vmatprep.subr.mxu0 0.0
    %1333 = vmatpush1.msra.mxu0 0.0
    %1334 = vmatprep.subr.mxu0 0.0
    %1335 = vmatpush1.msra.mxu0 0.0
    %1336 = vmatprep.subr.mxu0 0.0
    %1337 = vmatpush1.msra.mxu0 0.0
    %1338 = vmatprep.subr.mxu0 0.0
    %1339 = vmatpush1.msra.mxu0 0.0
    %1340 = vmatprep.subr.mxu0 0.0
    %1341 = vmatpush1.msra.mxu0 0.0
    %1342 = vmatprep.subr.mxu0 0.0
    %1343 = vmatpush1.msra.mxu0 0.0
    %1344 = vmatprep.subr.mxu0 0.0
    %1345 = vmatpush1.msra.mxu0 0.0
    %1346 = vmatprep.subr.mxu0 0.0
    %1347 = vmatpush1.msra.mxu0 0.0
    %1348 = vmatprep.subr.mxu0 %v1316
    %1349 = vmatpush1.msra.mxu0 %v1313
    %1350 = vmatprep.subr.mxu0 0.0
    %1351 = vmatpush2.msra.mxu0 0.0
    %1352 = vmatprep.subr.mxu0 0.0
    %1353 = vmatpush2.msra.mxu0 0.0
    %1354 = vmatprep.subr.mxu0 0.0
    %1355 = vmatpush2.msra.mxu0 0.0
    %1356 = vmatprep.subr.mxu0 0.0
    %1357 = vmatpush2.msra.mxu0 0.0
    %1358 = vmatprep.subr.mxu0 0.0
    %1359 = vmatpush2.msra.mxu0 0.0
    %1360 = vmatprep.subr.mxu0 0.0
    %1361 = vmatpush2.msra.mxu0 0.0
    %1362 = vmatprep.subr.mxu0 0.0
    %1363 = vmatpush2.msra.mxu0 0.0
    %1364 = vmatprep.subr.mxu0 0.0
    %1365 = vmatpush2.msra.mxu0 0.0
    %1366 = vmatprep.subr.mxu0 0.0
    %1367 = vmatpush2.msra.mxu0 0.0
    %1368 = vmatprep.subr.mxu0 0.0
    %1369 = vmatpush2.msra.mxu0 0.0
    %1370 = vmatprep.subr.mxu0 0.0
    %1371 = vmatpush2.msra.mxu0 0.0
    %1372 = vmatprep.subr.mxu0 0.0
    %1373 = vmatpush2.msra.mxu0 0.0
    %1374 = vmatprep.subr.mxu0 0.0
    %1375 = vmatpush2.msra.mxu0 0.0
    %1376 = vmatprep.subr.mxu0 0.0
    %1377 = vmatpush2.msra.mxu0 0.0
    %1378 = vmatprep.subr.mxu0 0.0
    %1379 = vmatpush2.msra.mxu0 0.0
    %1380 = vmatprep.subr.mxu0 0.0
    %1381 = vmatpush2.msra.mxu0 0.0
    %1382 = vmatprep.mubr.f32.mxu0 0.0
    %1383 = vmatmul.mubr.f32.gmra.mxu0 %v238
    %v1384 = vpop.f32.mrf.mxu0
    %v1385 = vadd.f32 0.0, %v1384
    %v1386 = vpop.f32.mrf.mxu0
    %v1387 = vadd.f32 0.0, %v1386
    %1388 = vdwg.mxu0
    %v1390 = vsel %vm97, %v1286, 0
    %v1393 = vsel %vm97, %v1287, 0
    %1395 = vmatprep.subr.mxu0 0.0
    %1396 = vmatpush1.msra.mxu0 0.0
    %1397 = vmatprep.subr.mxu0 0.0
    %1398 = vmatpush1.msra.mxu0 0.0
    %1399 = vmatprep.subr.mxu0 0.0
    %1400 = vmatpush1.msra.mxu0 0.0
    %1401 = vmatprep.subr.mxu0 0.0
    %1402 = vmatpush1.msra.mxu0 0.0
    %1403 = vmatprep.subr.mxu0 0.0
    %1404 = vmatpush1.msra.mxu0 0.0
    %1405 = vmatprep.subr.mxu0 0.0
    %1406 = vmatpush1.msra.mxu0 0.0
    %1407 = vmatprep.subr.mxu0 0.0
    %1408 = vmatpush1.msra.mxu0 0.0
    %1409 = vmatprep.subr.mxu0 0.0
    %1410 = vmatpush1.msra.mxu0 0.0
    %1411 = vmatprep.subr.mxu0 0.0
    %1412 = vmatpush1.msra.mxu0 0.0
    %1413 = vmatprep.subr.mxu0 0.0
    %1414 = vmatpush1.msra.mxu0 0.0
    %1415 = vmatprep.subr.mxu0 0.0
    %1416 = vmatpush1.msra.mxu0 0.0
    %1417 = vmatprep.subr.mxu0 0.0
    %1418 = vmatpush1.msra.mxu0 0.0
    %1419 = vmatprep.subr.mxu0 0.0
    %1420 = vmatpush1.msra.mxu0 0.0
    %1421 = vmatprep.subr.mxu0 0.0
    %1422 = vmatpush1.msra.mxu0 0.0
    %1423 = vmatprep.subr.mxu0 0.0
    %1424 = vmatpush1.msra.mxu0 0.0
    %1425 = vmatprep.subr.mxu0 %v1393
    %1426 = vmatpush1.msra.mxu0 %v1390
    %1427 = vmatprep.subr.mxu0 0.0
    %1428 = vmatpush2.msra.mxu0 0.0
    %1429 = vmatprep.subr.mxu0 0.0
    %1430 = vmatpush2.msra.mxu0 0.0
    %1431 = vmatprep.subr.mxu0 0.0
    %1432 = vmatpush2.msra.mxu0 0.0
    %1433 = vmatprep.subr.mxu0 0.0
    %1434 = vmatpush2.msra.mxu0 0.0
    %1435 = vmatprep.subr.mxu0 0.0
    %1436 = vmatpush2.msra.mxu0 0.0
    %1437 = vmatprep.subr.mxu0 0.0
    %1438 = vmatpush2.msra.mxu0 0.0
    %1439 = vmatprep.subr.mxu0 0.0
    %1440 = vmatpush2.msra.mxu0 0.0
    %1441 = vmatprep.subr.mxu0 0.0
    %1442 = vmatpush2.msra.mxu0 0.0
    %1443 = vmatprep.subr.mxu0 0.0
    %1444 = vmatpush2.msra.mxu0 0.0
    %1445 = vmatprep.subr.mxu0 0.0
    %1446 = vmatpush2.msra.mxu0 0.0
    %1447 = vmatprep.subr.mxu0 0.0
    %1448 = vmatpush2.msra.mxu0 0.0
    %1449 = vmatprep.subr.mxu0 0.0
    %1450 = vmatpush2.msra.mxu0 0.0
    %1451 = vmatprep.subr.mxu0 0.0
    %1452 = vmatpush2.msra.mxu0 0.0
    %1453 = vmatprep.subr.mxu0 0.0
    %1454 = vmatpush2.msra.mxu0 0.0
    %1455 = vmatprep.subr.mxu0 0.0
    %1456 = vmatpush2.msra.mxu0 0.0
    %1457 = vmatprep.subr.mxu0 0.0
    %1458 = vmatpush2.msra.mxu0 0.0
    %1459 = vmatprep.mubr.f32.mxu0 0.0
    %1460 = vmatmul.mubr.f32.gmra.mxu0 %v318
    %v1461 = vpop.f32.mrf.mxu0
    %v1462 = vadd.f32 %v1385, %v1461
    %v1463 = vpop.f32.mrf.mxu0
    %v1464 = vadd.f32 %v1387, %v1463
    %1465 = vdwg.mxu0
    %1466 = vrot.lane.b32.xlu0 %v1286, 127
    %v1467 = vpop.permute.xlu0 %1466
    %1468 = vrot.lane.b32.xlu0 %v1287, 127
    %v1469 = vpop.permute.xlu0 %1468
    %v1470 = vsel %vm401, %v1467, %v1469
    %v1471 = vsel %vm401, %v1469, %v1467
    %v1472 = vsel %vm413, %v1470, 0.0
    %v1473 = vsel %vm414, %v1471, 0.0
    %v1475 = vsel %vm97, %v1472, 0
    %v1478 = vsel %vm97, %v1473, 0
    %1480 = vmatprep.subr.mxu0 0.0
    %1481 = vmatpush1.msra.mxu0 0.0
    %1482 = vmatprep.subr.mxu0 0.0
    %1483 = vmatpush1.msra.mxu0 0.0
    %1484 = vmatprep.subr.mxu0 0.0
    %1485 = vmatpush1.msra.mxu0 0.0
    %1486 = vmatprep.subr.mxu0 0.0
    %1487 = vmatpush1.msra.mxu0 0.0
    %1488 = vmatprep.subr.mxu0 0.0
    %1489 = vmatpush1.msra.mxu0 0.0
    %1490 = vmatprep.subr.mxu0 0.0
    %1491 = vmatpush1.msra.mxu0 0.0
    %1492 = vmatprep.subr.mxu0 0.0
    %1493 = vmatpush1.msra.mxu0 0.0
    %1494 = vmatprep.subr.mxu0 0.0
    %1495 = vmatpush1.msra.mxu0 0.0
    %1496 = vmatprep.subr.mxu0 0.0
    %1497 = vmatpush1.msra.mxu0 0.0
    %1498 = vmatprep.subr.mxu0 0.0
    %1499 = vmatpush1.msra.mxu0 0.0
    %1500 = vmatprep.subr.mxu0 0.0
    %1501 = vmatpush1.msra.mxu0 0.0
    %1502 = vmatprep.subr.mxu0 0.0
    %1503 = vmatpush1.msra.mxu0 0.0
    %1504 = vmatprep.subr.mxu0 0.0
    %1505 = vmatpush1.msra.mxu0 0.0
    %1506 = vmatprep.subr.mxu0 0.0
    %1507 = vmatpush1.msra.mxu0 0.0
    %1508 = vmatprep.subr.mxu0 0.0
    %1509 = vmatpush1.msra.mxu0 0.0
    %1510 = vmatprep.subr.mxu0 %v1478
    %1511 = vmatpush1.msra.mxu0 %v1475
    %1512 = vmatprep.subr.mxu0 0.0
    %1513 = vmatpush2.msra.mxu0 0.0
    %1514 = vmatprep.subr.mxu0 0.0
    %1515 = vmatpush2.msra.mxu0 0.0
    %1516 = vmatprep.subr.mxu0 0.0
    %1517 = vmatpush2.msra.mxu0 0.0
    %1518 = vmatprep.subr.mxu0 0.0
    %1519 = vmatpush2.msra.mxu0 0.0
    %1520 = vmatprep.subr.mxu0 0.0
    %1521 = vmatpush2.msra.mxu0 0.0
    %1522 = vmatprep.subr.mxu0 0.0
    %1523 = vmatpush2.msra.mxu0 0.0
    %1524 = vmatprep.subr.mxu0 0.0
    %1525 = vmatpush2.msra.mxu0 0.0
    %1526 = vmatprep.subr.mxu0 0.0
    %1527 = vmatpush2.msra.mxu0 0.0
    %1528 = vmatprep.subr.mxu0 0.0
    %1529 = vmatpush2.msra.mxu0 0.0
    %1530 = vmatprep.subr.mxu0 0.0
    %1531 = vmatpush2.msra.mxu0 0.0
    %1532 = vmatprep.subr.mxu0 0.0
    %1533 = vmatpush2.msra.mxu0 0.0
    %1534 = vmatprep.subr.mxu0 0.0
    %1535 = vmatpush2.msra.mxu0 0.0
    %1536 = vmatprep.subr.mxu0 0.0
    %1537 = vmatpush2.msra.mxu0 0.0
    %1538 = vmatprep.subr.mxu0 0.0
    %1539 = vmatpush2.msra.mxu0 0.0
    %1540 = vmatprep.subr.mxu0 0.0
    %1541 = vmatpush2.msra.mxu0 0.0
    %1542 = vmatprep.subr.mxu0 0.0
    %1543 = vmatpush2.msra.mxu0 0.0
    %1544 = vmatprep.mubr.f32.mxu0 0.0
    %1545 = vmatmul.mubr.f32.gmra.mxu0 %v418
    %v1546 = vpop.f32.mrf.mxu0
    %v1547 = vadd.f32 0.0, %v1546
    %v1548 = vpop.f32.mrf.mxu0
    %v1549 = vadd.f32 0.0, %v1548
    %1550 = vdwg.mxu0
    %v1551 = vadd.f32 %v1462, %v1547
    %v1552 = vadd.f32 %v1464, %v1549
    %v1554 = vsel %vm97, %v1294, 0
    %v1557 = vsel %vm97, %v1295, 0
    %1559 = vmatprep.subr.mxu0 0.0
    %1560 = vmatpush1.msra.mxu0 0.0
    %1561 = vmatprep.subr.mxu0 0.0
    %1562 = vmatpush1.msra.mxu0 0.0
    %1563 = vmatprep.subr.mxu0 0.0
    %1564 = vmatpush1.msra.mxu0 0.0
    %1565 = vmatprep.subr.mxu0 0.0
    %1566 = vmatpush1.msra.mxu0 0.0
    %1567 = vmatprep.subr.mxu0 0.0
    %1568 = vmatpush1.msra.mxu0 0.0
    %1569 = vmatprep.subr.mxu0 0.0
    %1570 = vmatpush1.msra.mxu0 0.0
    %1571 = vmatprep.subr.mxu0 0.0
    %1572 = vmatpush1.msra.mxu0 0.0
    %1573 = vmatprep.subr.mxu0 0.0
    %1574 = vmatpush1.msra.mxu0 0.0
    %1575 = vmatprep.subr.mxu0 0.0
    %1576 = vmatpush1.msra.mxu0 0.0
    %1577 = vmatprep.subr.mxu0 0.0
    %1578 = vmatpush1.msra.mxu0 0.0
    %1579 = vmatprep.subr.mxu0 0.0
    %1580 = vmatpush1.msra.mxu0 0.0
    %1581 = vmatprep.subr.mxu0 0.0
    %1582 = vmatpush1.msra.mxu0 0.0
    %1583 = vmatprep.subr.mxu0 0.0
    %1584 = vmatpush1.msra.mxu0 0.0
    %1585 = vmatprep.subr.mxu0 0.0
    %1586 = vmatpush1.msra.mxu0 0.0
    %1587 = vmatprep.subr.mxu0 0.0
    %1588 = vmatpush1.msra.mxu0 0.0
    %1589 = vmatprep.subr.mxu0 %v1557
    %1590 = vmatpush1.msra.mxu0 %v1554
    %1591 = vmatprep.subr.mxu0 0.0
    %1592 = vmatpush2.msra.mxu0 0.0
    %1593 = vmatprep.subr.mxu0 0.0
    %1594 = vmatpush2.msra.mxu0 0.0
    %1595 = vmatprep.subr.mxu0 0.0
    %1596 = vmatpush2.msra.mxu0 0.0
    %1597 = vmatprep.subr.mxu0 0.0
    %1598 = vmatpush2.msra.mxu0 0.0
    %1599 = vmatprep.subr.mxu0 0.0
    %1600 = vmatpush2.msra.mxu0 0.0
    %1601 = vmatprep.subr.mxu0 0.0
    %1602 = vmatpush2.msra.mxu0 0.0
    %1603 = vmatprep.subr.mxu0 0.0
    %1604 = vmatpush2.msra.mxu0 0.0
    %1605 = vmatprep.subr.mxu0 0.0
    %1606 = vmatpush2.msra.mxu0 0.0
    %1607 = vmatprep.subr.mxu0 0.0
    %1608 = vmatpush2.msra.mxu0 0.0
    %1609 = vmatprep.subr.mxu0 0.0
    %1610 = vmatpush2.msra.mxu0 0.0
    %1611 = vmatprep.subr.mxu0 0.0
    %1612 = vmatpush2.msra.mxu0 0.0
    %1613 = vmatprep.subr.mxu0 0.0
    %1614 = vmatpush2.msra.mxu0 0.0
    %1615 = vmatprep.subr.mxu0 0.0
    %1616 = vmatpush2.msra.mxu0 0.0
    %1617 = vmatprep.subr.mxu0 0.0
    %1618 = vmatpush2.msra.mxu0 0.0
    %1619 = vmatprep.subr.mxu0 0.0
    %1620 = vmatpush2.msra.mxu0 0.0
    %1621 = vmatprep.subr.mxu0 0.0
    %1622 = vmatpush2.msra.mxu0 0.0
    %1623 = vmatprep.mubr.f32.mxu0 0.0
    %1624 = vmatmul.mubr.f32.gmra.mxu0 %v500
    %v1625 = vpop.f32.mrf.mxu0
    %v1626 = vadd.f32 0.0, %v1625
    %v1627 = vpop.f32.mrf.mxu0
    %v1628 = vadd.f32 0.0, %v1627
    %1629 = vdwg.mxu0
    %v1630 = vadd.f32 %v1551, %v1626
    %v1631 = vadd.f32 %v1552, %v1628
    %1632 = vrot.lane.b32.xlu0 %v1294, 1
    %v1633 = vpop.permute.xlu0 %1632
    %1634 = vrot.lane.b32.xlu0 %v1295, 1
    %v1635 = vpop.permute.xlu0 %1634
    %v1636 = vsel %vm221, %v1633, %v1635
    %v1637 = vsel %vm221, %v1635, %v1633
    %v1638 = vsel %vm233, %v1637, 0.0
    %v1639 = vsel %vm234, %v1636, 0.0
    %v1641 = vsel %vm97, %v1638, 0
    %v1644 = vsel %vm97, %v1639, 0
    %1646 = vmatprep.subr.mxu0 0.0
    %1647 = vmatpush1.msra.mxu0 0.0
    %1648 = vmatprep.subr.mxu0 0.0
    %1649 = vmatpush1.msra.mxu0 0.0
    %1650 = vmatprep.subr.mxu0 0.0
    %1651 = vmatpush1.msra.mxu0 0.0
    %1652 = vmatprep.subr.mxu0 0.0
    %1653 = vmatpush1.msra.mxu0 0.0
    %1654 = vmatprep.subr.mxu0 0.0
    %1655 = vmatpush1.msra.mxu0 0.0
    %1656 = vmatprep.subr.mxu0 0.0
    %1657 = vmatpush1.msra.mxu0 0.0
    %1658 = vmatprep.subr.mxu0 0.0
    %1659 = vmatpush1.msra.mxu0 0.0
    %1660 = vmatprep.subr.mxu0 0.0
    %1661 = vmatpush1.msra.mxu0 0.0
    %1662 = vmatprep.subr.mxu0 0.0
    %1663 = vmatpush1.msra.mxu0 0.0
    %1664 = vmatprep.subr.mxu0 0.0
    %1665 = vmatpush1.msra.mxu0 0.0
    %1666 = vmatprep.subr.mxu0 0.0
    %1667 = vmatpush1.msra.mxu0 0.0
    %1668 = vmatprep.subr.mxu0 0.0
    %1669 = vmatpush1.msra.mxu0 0.0
    %1670 = vmatprep.subr.mxu0 0.0
    %1671 = vmatpush1.msra.mxu0 0.0
    %1672 = vmatprep.subr.mxu0 0.0
    %1673 = vmatpush1.msra.mxu0 0.0
    %1674 = vmatprep.subr.mxu0 0.0
    %1675 = vmatpush1.msra.mxu0 0.0
    %1676 = vmatprep.subr.mxu0 %v1644
    %1677 = vmatpush1.msra.mxu0 %v1641
    %1678 = vmatprep.subr.mxu0 0.0
    %1679 = vmatpush2.msra.mxu0 0.0
    %1680 = vmatprep.subr.mxu0 0.0
    %1681 = vmatpush2.msra.mxu0 0.0
    %1682 = vmatprep.subr.mxu0 0.0
    %1683 = vmatpush2.msra.mxu0 0.0
    %1684 = vmatprep.subr.mxu0 0.0
    %1685 = vmatpush2.msra.mxu0 0.0
    %1686 = vmatprep.subr.mxu0 0.0
    %1687 = vmatpush2.msra.mxu0 0.0
    %1688 = vmatprep.subr.mxu0 0.0
    %1689 = vmatpush2.msra.mxu0 0.0
    %1690 = vmatprep.subr.mxu0 0.0
    %1691 = vmatpush2.msra.mxu0 0.0
    %1692 = vmatprep.subr.mxu0 0.0
    %1693 = vmatpush2.msra.mxu0 0.0
    %1694 = vmatprep.subr.mxu0 0.0
    %1695 = vmatpush2.msra.mxu0 0.0
    %1696 = vmatprep.subr.mxu0 0.0
    %1697 = vmatpush2.msra.mxu0 0.0
    %1698 = vmatprep.subr.mxu0 0.0
    %1699 = vmatpush2.msra.mxu0 0.0
    %1700 = vmatprep.subr.mxu0 0.0
    %1701 = vmatpush2.msra.mxu0 0.0
    %1702 = vmatprep.subr.mxu0 0.0
    %1703 = vmatpush2.msra.mxu0 0.0
    %1704 = vmatprep.subr.mxu0 0.0
    %1705 = vmatpush2.msra.mxu0 0.0
    %1706 = vmatprep.subr.mxu0 0.0
    %1707 = vmatpush2.msra.mxu0 0.0
    %1708 = vmatprep.subr.mxu0 0.0
    %1709 = vmatpush2.msra.mxu0 0.0
    %1710 = vmatprep.mubr.f32.mxu0 0.0
    %1711 = vmatmul.mubr.f32.gmra.mxu0 %v590
    %v1712 = vpop.f32.mrf.mxu0
    %v1713 = vadd.f32 0.0, %v1712
    %v1714 = vpop.f32.mrf.mxu0
    %v1715 = vadd.f32 0.0, %v1714
    %1716 = vdwg.mxu0
    %v1717 = vadd.f32 %v1630, %v1713
    %v1718 = vadd.f32 %v1631, %v1715
    %1719 = vrot.lane.b32.xlu0 %v1294, 127
    %v1720 = vpop.permute.xlu0 %1719
    %1721 = vrot.lane.b32.xlu0 %v1295, 127
    %v1722 = vpop.permute.xlu0 %1721
    %v1723 = vsel %vm401, %v1720, %v1722
    %v1724 = vsel %vm401, %v1722, %v1720
    %v1725 = vsel %vm413, %v1723, 0.0
    %v1726 = vsel %vm414, %v1724, 0.0
    %v1728 = vsel %vm97, %v1725, 0
    %v1731 = vsel %vm97, %v1726, 0
    %1733 = vmatprep.subr.mxu0 0.0
    %1734 = vmatpush1.msra.mxu0 0.0
    %1735 = vmatprep.subr.mxu0 0.0
    %1736 = vmatpush1.msra.mxu0 0.0
    %1737 = vmatprep.subr.mxu0 0.0
    %1738 = vmatpush1.msra.mxu0 0.0
    %1739 = vmatprep.subr.mxu0 0.0
    %1740 = vmatpush1.msra.mxu0 0.0
    %1741 = vmatprep.subr.mxu0 0.0
    %1742 = vmatpush1.msra.mxu0 0.0
    %1743 = vmatprep.subr.mxu0 0.0
    %1744 = vmatpush1.msra.mxu0 0.0
    %1745 = vmatprep.subr.mxu0 0.0
    %1746 = vmatpush1.msra.mxu0 0.0
    %1747 = vmatprep.subr.mxu0 0.0
    %1748 = vmatpush1.msra.mxu0 0.0
    %1749 = vmatprep.subr.mxu0 0.0
    %1750 = vmatpush1.msra.mxu0 0.0
    %1751 = vmatprep.subr.mxu0 0.0
    %1752 = vmatpush1.msra.mxu0 0.0
    %1753 = vmatprep.subr.mxu0 0.0
    %1754 = vmatpush1.msra.mxu0 0.0
    %1755 = vmatprep.subr.mxu0 0.0
    %1756 = vmatpush1.msra.mxu0 0.0
    %1757 = vmatprep.subr.mxu0 0.0
    %1758 = vmatpush1.msra.mxu0 0.0
    %1759 = vmatprep.subr.mxu0 0.0
    %1760 = vmatpush1.msra.mxu0 0.0
    %1761 = vmatprep.subr.mxu0 0.0
    %1762 = vmatpush1.msra.mxu0 0.0
    %1763 = vmatprep.subr.mxu0 %v1731
    %1764 = vmatpush1.msra.mxu0 %v1728
    %1765 = vmatprep.subr.mxu0 0.0
    %1766 = vmatpush2.msra.mxu0 0.0
    %1767 = vmatprep.subr.mxu0 0.0
    %1768 = vmatpush2.msra.mxu0 0.0
    %1769 = vmatprep.subr.mxu0 0.0
    %1770 = vmatpush2.msra.mxu0 0.0
    %1771 = vmatprep.subr.mxu0 0.0
    %1772 = vmatpush2.msra.mxu0 0.0
    %1773 = vmatprep.subr.mxu0 0.0
    %1774 = vmatpush2.msra.mxu0 0.0
    %1775 = vmatprep.subr.mxu0 0.0
    %1776 = vmatpush2.msra.mxu0 0.0
    %1777 = vmatprep.subr.mxu0 0.0
    %1778 = vmatpush2.msra.mxu0 0.0
    %1779 = vmatprep.subr.mxu0 0.0
    %1780 = vmatpush2.msra.mxu0 0.0
    %1781 = vmatprep.subr.mxu0 0.0
    %1782 = vmatpush2.msra.mxu0 0.0
    %1783 = vmatprep.subr.mxu0 0.0
    %1784 = vmatpush2.msra.mxu0 0.0
    %1785 = vmatprep.subr.mxu0 0.0
    %1786 = vmatpush2.msra.mxu0 0.0
    %1787 = vmatprep.subr.mxu0 0.0
    %1788 = vmatpush2.msra.mxu0 0.0
    %1789 = vmatprep.subr.mxu0 0.0
    %1790 = vmatpush2.msra.mxu0 0.0
    %1791 = vmatprep.subr.mxu0 0.0
    %1792 = vmatpush2.msra.mxu0 0.0
    %1793 = vmatprep.subr.mxu0 0.0
    %1794 = vmatpush2.msra.mxu0 0.0
    %1795 = vmatprep.subr.mxu0 0.0
    %1796 = vmatpush2.msra.mxu0 0.0
    %1797 = vmatprep.mubr.f32.mxu0 0.0
    %1798 = vmatmul.mubr.f32.gmra.mxu0 %v680
    %v1799 = vpop.f32.mrf.mxu0
    %v1800 = vadd.f32 0.0, %v1799
    %v1801 = vpop.f32.mrf.mxu0
    %v1802 = vadd.f32 0.0, %v1801
    %1803 = vdwg.mxu0
    %v1804 = vadd.f32 %v1717, %v1800
    %v1805 = vadd.f32 %v1718, %v1802
    %v1807 = vsel %vm97, %v1302, 0
    %v1810 = vsel %vm97, %v1303, 0
    %1812 = vmatprep.subr.mxu0 0.0
    %1813 = vmatpush1.msra.mxu0 0.0
    %1814 = vmatprep.subr.mxu0 0.0
    %1815 = vmatpush1.msra.mxu0 0.0
    %1816 = vmatprep.subr.mxu0 0.0
    %1817 = vmatpush1.msra.mxu0 0.0
    %1818 = vmatprep.subr.mxu0 0.0
    %1819 = vmatpush1.msra.mxu0 0.0
    %1820 = vmatprep.subr.mxu0 0.0
    %1821 = vmatpush1.msra.mxu0 0.0
    %1822 = vmatprep.subr.mxu0 0.0
    %1823 = vmatpush1.msra.mxu0 0.0
    %1824 = vmatprep.subr.mxu0 0.0
    %1825 = vmatpush1.msra.mxu0 0.0
    %1826 = vmatprep.subr.mxu0 0.0
    %1827 = vmatpush1.msra.mxu0 0.0
    %1828 = vmatprep.subr.mxu0 0.0
    %1829 = vmatpush1.msra.mxu0 0.0
    %1830 = vmatprep.subr.mxu0 0.0
    %1831 = vmatpush1.msra.mxu0 0.0
    %1832 = vmatprep.subr.mxu0 0.0
    %1833 = vmatpush1.msra.mxu0 0.0
    %1834 = vmatprep.subr.mxu0 0.0
    %1835 = vmatpush1.msra.mxu0 0.0
    %1836 = vmatprep.subr.mxu0 0.0
    %1837 = vmatpush1.msra.mxu0 0.0
    %1838 = vmatprep.subr.mxu0 0.0
    %1839 = vmatpush1.msra.mxu0 0.0
    %1840 = vmatprep.subr.mxu0 0.0
    %1841 = vmatpush1.msra.mxu0 0.0
    %1842 = vmatprep.subr.mxu0 %v1810
    %1843 = vmatpush1.msra.mxu0 %v1807
    %1844 = vmatprep.subr.mxu0 0.0
    %1845 = vmatpush2.msra.mxu0 0.0
    %1846 = vmatprep.subr.mxu0 0.0
    %1847 = vmatpush2.msra.mxu0 0.0
    %1848 = vmatprep.subr.mxu0 0.0
    %1849 = vmatpush2.msra.mxu0 0.0
    %1850 = vmatprep.subr.mxu0 0.0
    %1851 = vmatpush2.msra.mxu0 0.0
    %1852 = vmatprep.subr.mxu0 0.0
    %1853 = vmatpush2.msra.mxu0 0.0
    %1854 = vmatprep.subr.mxu0 0.0
    %1855 = vmatpush2.msra.mxu0 0.0
    %1856 = vmatprep.subr.mxu0 0.0
    %1857 = vmatpush2.msra.mxu0 0.0
    %1858 = vmatprep.subr.mxu0 0.0
    %1859 = vmatpush2.msra.mxu0 0.0
    %1860 = vmatprep.subr.mxu0 0.0
    %1861 = vmatpush2.msra.mxu0 0.0
    %1862 = vmatprep.subr.mxu0 0.0
    %1863 = vmatpush2.msra.mxu0 0.0
    %1864 = vmatprep.subr.mxu0 0.0
    %1865 = vmatpush2.msra.mxu0 0.0
    %1866 = vmatprep.subr.mxu0 0.0
    %1867 = vmatpush2.msra.mxu0 0.0
    %1868 = vmatprep.subr.mxu0 0.0
    %1869 = vmatpush2.msra.mxu0 0.0
    %1870 = vmatprep.subr.mxu0 0.0
    %1871 = vmatpush2.msra.mxu0 0.0
    %1872 = vmatprep.subr.mxu0 0.0
    %1873 = vmatpush2.msra.mxu0 0.0
    %1874 = vmatprep.subr.mxu0 0.0
    %1875 = vmatpush2.msra.mxu0 0.0
    %1876 = vmatprep.mubr.f32.mxu0 0.0
    %1877 = vmatmul.mubr.f32.gmra.mxu0 %v762
    %v1878 = vpop.f32.mrf.mxu0
    %v1879 = vadd.f32 0.0, %v1878
    %v1880 = vpop.f32.mrf.mxu0
    %v1881 = vadd.f32 0.0, %v1880
    %1882 = vdwg.mxu0
    %v1883 = vadd.f32 %v1804, %v1879
    %v1884 = vadd.f32 %v1805, %v1881
    %1885 = vrot.lane.b32.xlu0 %v1302, 1
    %v1886 = vpop.permute.xlu0 %1885
    %1887 = vrot.lane.b32.xlu0 %v1303, 1
    %v1888 = vpop.permute.xlu0 %1887
    %v1889 = vsel %vm221, %v1886, %v1888
    %v1890 = vsel %vm221, %v1888, %v1886
    %v1891 = vsel %vm233, %v1890, 0.0
    %v1892 = vsel %vm234, %v1889, 0.0
    %v1894 = vsel %vm97, %v1891, 0
    %v1897 = vsel %vm97, %v1892, 0
    %1899 = vmatprep.subr.mxu0 0.0
    %1900 = vmatpush1.msra.mxu0 0.0
    %1901 = vmatprep.subr.mxu0 0.0
    %1902 = vmatpush1.msra.mxu0 0.0
    %1903 = vmatprep.subr.mxu0 0.0
    %1904 = vmatpush1.msra.mxu0 0.0
    %1905 = vmatprep.subr.mxu0 0.0
    %1906 = vmatpush1.msra.mxu0 0.0
    %1907 = vmatprep.subr.mxu0 0.0
    %1908 = vmatpush1.msra.mxu0 0.0
    %1909 = vmatprep.subr.mxu0 0.0
    %1910 = vmatpush1.msra.mxu0 0.0
    %1911 = vmatprep.subr.mxu0 0.0
    %1912 = vmatpush1.msra.mxu0 0.0
    %1913 = vmatprep.subr.mxu0 0.0
    %1914 = vmatpush1.msra.mxu0 0.0
    %1915 = vmatprep.subr.mxu0 0.0
    %1916 = vmatpush1.msra.mxu0 0.0
    %1917 = vmatprep.subr.mxu0 0.0
    %1918 = vmatpush1.msra.mxu0 0.0
    %1919 = vmatprep.subr.mxu0 0.0
    %1920 = vmatpush1.msra.mxu0 0.0
    %1921 = vmatprep.subr.mxu0 0.0
    %1922 = vmatpush1.msra.mxu0 0.0
    %1923 = vmatprep.subr.mxu0 0.0
    %1924 = vmatpush1.msra.mxu0 0.0
    %1925 = vmatprep.subr.mxu0 0.0
    %1926 = vmatpush1.msra.mxu0 0.0
    %1927 = vmatprep.subr.mxu0 0.0
    %1928 = vmatpush1.msra.mxu0 0.0
    %1929 = vmatprep.subr.mxu0 %v1897
    %1930 = vmatpush1.msra.mxu0 %v1894
    %1931 = vmatprep.subr.mxu0 0.0
    %1932 = vmatpush2.msra.mxu0 0.0
    %1933 = vmatprep.subr.mxu0 0.0
    %1934 = vmatpush2.msra.mxu0 0.0
    %1935 = vmatprep.subr.mxu0 0.0
    %1936 = vmatpush2.msra.mxu0 0.0
    %1937 = vmatprep.subr.mxu0 0.0
    %1938 = vmatpush2.msra.mxu0 0.0
    %1939 = vmatprep.subr.mxu0 0.0
    %1940 = vmatpush2.msra.mxu0 0.0
    %1941 = vmatprep.subr.mxu0 0.0
    %1942 = vmatpush2.msra.mxu0 0.0
    %1943 = vmatprep.subr.mxu0 0.0
    %1944 = vmatpush2.msra.mxu0 0.0
    %1945 = vmatprep.subr.mxu0 0.0
    %1946 = vmatpush2.msra.mxu0 0.0
    %1947 = vmatprep.subr.mxu0 0.0
    %1948 = vmatpush2.msra.mxu0 0.0
    %1949 = vmatprep.subr.mxu0 0.0
    %1950 = vmatpush2.msra.mxu0 0.0
    %1951 = vmatprep.subr.mxu0 0.0
    %1952 = vmatpush2.msra.mxu0 0.0
    %1953 = vmatprep.subr.mxu0 0.0
    %1954 = vmatpush2.msra.mxu0 0.0
    %1955 = vmatprep.subr.mxu0 0.0
    %1956 = vmatpush2.msra.mxu0 0.0
    %1957 = vmatprep.subr.mxu0 0.0
    %1958 = vmatpush2.msra.mxu0 0.0
    %1959 = vmatprep.subr.mxu0 0.0
    %1960 = vmatpush2.msra.mxu0 0.0
    %1961 = vmatprep.subr.mxu0 0.0
    %1962 = vmatpush2.msra.mxu0 0.0
    %1963 = vmatprep.mubr.f32.mxu0 0.0
    %1964 = vmatmul.mubr.f32.gmra.mxu0 %v852
    %v1965 = vpop.f32.mrf.mxu0
    %v1966 = vadd.f32 0.0, %v1965
    %v1967 = vpop.f32.mrf.mxu0
    %v1968 = vadd.f32 0.0, %v1967
    %1969 = vdwg.mxu0
    %v1970 = vadd.f32 %v1883, %v1966
    %v1971 = vadd.f32 %v1884, %v1968
    %1972 = vrot.lane.b32.xlu0 %v1302, 127
    %v1973 = vpop.permute.xlu0 %1972
    %1974 = vrot.lane.b32.xlu0 %v1303, 127
    %v1975 = vpop.permute.xlu0 %1974
    %v1976 = vsel %vm401, %v1973, %v1975
    %v1977 = vsel %vm401, %v1975, %v1973
    %v1978 = vsel %vm413, %v1976, 0.0
    %v1979 = vsel %vm414, %v1977, 0.0
    %v1981 = vsel %vm97, %v1978, 0
    %v1984 = vsel %vm97, %v1979, 0
    %1986 = vmatprep.subr.mxu0 0.0
    %1987 = vmatpush1.msra.mxu0 0.0
    %1988 = vmatprep.subr.mxu0 0.0
    %1989 = vmatpush1.msra.mxu0 0.0
    %1990 = vmatprep.subr.mxu0 0.0
    %1991 = vmatpush1.msra.mxu0 0.0
    %1992 = vmatprep.subr.mxu0 0.0
    %1993 = vmatpush1.msra.mxu0 0.0
    %1994 = vmatprep.subr.mxu0 0.0
    %1995 = vmatpush1.msra.mxu0 0.0
    %1996 = vmatprep.subr.mxu0 0.0
    %1997 = vmatpush1.msra.mxu0 0.0
    %1998 = vmatprep.subr.mxu0 0.0
    %1999 = vmatpush1.msra.mxu0 0.0
    %2000 = vmatprep.subr.mxu0 0.0
    %2001 = vmatpush1.msra.mxu0 0.0
    %2002 = vmatprep.subr.mxu0 0.0
    %2003 = vmatpush1.msra.mxu0 0.0
    %2004 = vmatprep.subr.mxu0 0.0
    %2005 = vmatpush1.msra.mxu0 0.0
    %2006 = vmatprep.subr.mxu0 0.0
    %2007 = vmatpush1.msra.mxu0 0.0
    %2008 = vmatprep.subr.mxu0 0.0
    %2009 = vmatpush1.msra.mxu0 0.0
    %2010 = vmatprep.subr.mxu0 0.0
    %2011 = vmatpush1.msra.mxu0 0.0
    %2012 = vmatprep.subr.mxu0 0.0
    %2013 = vmatpush1.msra.mxu0 0.0
    %2014 = vmatprep.subr.mxu0 0.0
    %2015 = vmatpush1.msra.mxu0 0.0
    %2016 = vmatprep.subr.mxu0 %v1984
    %2017 = vmatpush1.msra.mxu0 %v1981
    %2018 = vmatprep.subr.mxu0 0.0
    %2019 = vmatpush2.msra.mxu0 0.0
    %2020 = vmatprep.subr.mxu0 0.0
    %2021 = vmatpush2.msra.mxu0 0.0
    %2022 = vmatprep.subr.mxu0 0.0
    %2023 = vmatpush2.msra.mxu0 0.0
    %2024 = vmatprep.subr.mxu0 0.0
    %2025 = vmatpush2.msra.mxu0 0.0
    %2026 = vmatprep.subr.mxu0 0.0
    %2027 = vmatpush2.msra.mxu0 0.0
    %2028 = vmatprep.subr.mxu0 0.0
    %2029 = vmatpush2.msra.mxu0 0.0
    %2030 = vmatprep.subr.mxu0 0.0
    %2031 = vmatpush2.msra.mxu0 0.0
    %2032 = vmatprep.subr.mxu0 0.0
    %2033 = vmatpush2.msra.mxu0 0.0
    %2034 = vmatprep.subr.mxu0 0.0
    %2035 = vmatpush2.msra.mxu0 0.0
    %2036 = vmatprep.subr.mxu0 0.0
    %2037 = vmatpush2.msra.mxu0 0.0
    %2038 = vmatprep.subr.mxu0 0.0
    %2039 = vmatpush2.msra.mxu0 0.0
    %2040 = vmatprep.subr.mxu0 0.0
    %2041 = vmatpush2.msra.mxu0 0.0
    %2042 = vmatprep.subr.mxu0 0.0
    %2043 = vmatpush2.msra.mxu0 0.0
    %2044 = vmatprep.subr.mxu0 0.0
    %2045 = vmatpush2.msra.mxu0 0.0
    %2046 = vmatprep.subr.mxu0 0.0
    %2047 = vmatpush2.msra.mxu0 0.0
    %2048 = vmatprep.subr.mxu0 0.0
    %2049 = vmatpush2.msra.mxu0 0.0
    %2050 = vmatprep.mubr.f32.mxu0 0.0
    %2051 = vmatmul.mubr.f32.gmra.mxu0 %v942
    %v2052 = vpop.f32.mrf.mxu0
    %v2053 = vadd.f32 0.0, %v2052
    %v2054 = vpop.f32.mrf.mxu0
    %v2055 = vadd.f32 0.0, %v2054
    %2056 = vdwg.mxu0
    %v2057 = vadd.f32 %v1970, %v2053
    %v2058 = vadd.f32 %v1971, %v2055
    %v2059 = vadd.f32 %v2057, %v1025
    %v2060 = vadd.f32 %v2058, %v1025
    %v2061 = vmax.f32 %v2059, 0.0
    %v2062 = vmax.f32 %v2060, 0.0
    %v2064 = vsel %vm97, %v2061, 0
    %v2067 = vsel %vm97, %v2062, 0
    %2069 = vmatprep.subr.mxu0 0.0
    %2070 = vmatpush1.msra.mxu0 0.0
    %2071 = vmatprep.subr.mxu0 0.0
    %2072 = vmatpush1.msra.mxu0 0.0
    %2073 = vmatprep.subr.mxu0 0.0
    %2074 = vmatpush1.msra.mxu0 0.0
    %2075 = vmatprep.subr.mxu0 0.0
    %2076 = vmatpush1.msra.mxu0 0.0
    %2077 = vmatprep.subr.mxu0 0.0
    %2078 = vmatpush1.msra.mxu0 0.0
    %2079 = vmatprep.subr.mxu0 0.0
    %2080 = vmatpush1.msra.mxu0 0.0
    %2081 = vmatprep.subr.mxu0 0.0
    %2082 = vmatpush1.msra.mxu0 0.0
    %2083 = vmatprep.subr.mxu0 0.0
    %2084 = vmatpush1.msra.mxu0 0.0
    %2085 = vmatprep.subr.mxu0 0.0
    %2086 = vmatpush1.msra.mxu0 0.0
    %2087 = vmatprep.subr.mxu0 0.0
    %2088 = vmatpush1.msra.mxu0 0.0
    %2089 = vmatprep.subr.mxu0 0.0
    %2090 = vmatpush1.msra.mxu0 0.0
    %2091 = vmatprep.subr.mxu0 0.0
    %2092 = vmatpush1.msra.mxu0 0.0
    %2093 = vmatprep.subr.mxu0 0.0
    %2094 = vmatpush1.msra.mxu0 0.0
    %2095 = vmatprep.subr.mxu0 0.0
    %2096 = vmatpush1.msra.mxu0 0.0
    %2097 = vmatprep.subr.mxu0 0.0
    %2098 = vmatpush1.msra.mxu0 0.0
    %2099 = vmatprep.subr.mxu0 %v2067
    %2100 = vmatpush1.msra.mxu0 %v2064
    %2101 = vmatprep.subr.mxu0 0.0
    %2102 = vmatpush2.msra.mxu0 0.0
    %2103 = vmatprep.subr.mxu0 0.0
    %2104 = vmatpush2.msra.mxu0 0.0
    %2105 = vmatprep.subr.mxu0 0.0
    %2106 = vmatpush2.msra.mxu0 0.0
    %2107 = vmatprep.subr.mxu0 0.0
    %2108 = vmatpush2.msra.mxu0 0.0
    %2109 = vmatprep.subr.mxu0 0.0
    %2110 = vmatpush2.msra.mxu0 0.0
    %2111 = vmatprep.subr.mxu0 0.0
    %2112 = vmatpush2.msra.mxu0 0.0
    %2113 = vmatprep.subr.mxu0 0.0
    %2114 = vmatpush2.msra.mxu0 0.0
    %2115 = vmatprep.subr.mxu0 0.0
    %2116 = vmatpush2.msra.mxu0 0.0
    %2117 = vmatprep.subr.mxu0 0.0
    %2118 = vmatpush2.msra.mxu0 0.0
    %2119 = vmatprep.subr.mxu0 0.0
    %2120 = vmatpush2.msra.mxu0 0.0
    %2121 = vmatprep.subr.mxu0 0.0
    %2122 = vmatpush2.msra.mxu0 0.0
    %2123 = vmatprep.subr.mxu0 0.0
    %2124 = vmatpush2.msra.mxu0 0.0
    %2125 = vmatprep.subr.mxu0 0.0
    %2126 = vmatpush2.msra.mxu0 0.0
    %2127 = vmatprep.subr.mxu0 0.0
    %2128 = vmatpush2.msra.mxu0 0.0
    %2129 = vmatprep.subr.mxu0 0.0
    %2130 = vmatpush2.msra.mxu0 0.0
    %2131 = vmatprep.subr.mxu0 0.0
    %2132 = vmatpush2.msra.mxu0 0.0
    %2133 = vmatprep.mubr.f32.mxu0 0.0
    %2134 = vmatmul.mubr.f32.gmra.mxu0 %v1037
    %v2135 = vpop.f32.mrf.mxu0
    %v2136 = vadd.f32 %v1034, %v2135
    %v2137 = vpop.f32.mrf.mxu0
    %v2138 = vadd.f32 %v1034, %v2137
    %2139 = vdwg.mxu0
    %v2141 = vcombine.high %v1205, %v1205
    %v2142 = vsel %vm97, %v1205, 0
    %v2144 = vsel %vm97, %v2141, 0
    %2146 = vmatprep.subr.mxu0 0.0
    %2147 = vmatpush1.msra.mxu0 0.0
    %2148 = vmatprep.subr.mxu0 0.0
    %2149 = vmatpush1.msra.mxu0 0.0
    %2150 = vmatprep.subr.mxu0 0.0
    %2151 = vmatpush1.msra.mxu0 0.0
    %2152 = vmatprep.subr.mxu0 0.0
    %2153 = vmatpush1.msra.mxu0 0.0
    %2154 = vmatprep.subr.mxu0 0.0
    %2155 = vmatpush1.msra.mxu0 0.0
    %2156 = vmatprep.subr.mxu0 0.0
    %2157 = vmatpush1.msra.mxu0 0.0
    %2158 = vmatprep.subr.mxu0 0.0
    %2159 = vmatpush1.msra.mxu0 0.0
    %2160 = vmatprep.subr.mxu0 0.0
    %2161 = vmatpush1.msra.mxu0 0.0
    %2162 = vmatprep.subr.mxu0 0.0
    %2163 = vmatpush1.msra.mxu0 0.0
    %2164 = vmatprep.subr.mxu0 0.0
    %2165 = vmatpush1.msra.mxu0 0.0
    %2166 = vmatprep.subr.mxu0 0.0
    %2167 = vmatpush1.msra.mxu0 0.0
    %2168 = vmatprep.subr.mxu0 0.0
    %2169 = vmatpush1.msra.mxu0 0.0
    %2170 = vmatprep.subr.mxu0 0.0
    %2171 = vmatpush1.msra.mxu0 0.0
    %2172 = vmatprep.subr.mxu0 0.0
    %2173 = vmatpush1.msra.mxu0 0.0
    %2174 = vmatprep.subr.mxu0 0.0
    %2175 = vmatpush1.msra.mxu0 0.0
    %2176 = vmatprep.subr.mxu0 %v2144
    %2177 = vmatpush1.msra.mxu0 %v2142
    %2178 = vmatprep.subr.mxu0 0.0
    %2179 = vmatpush2.msra.mxu0 0.0
    %2180 = vmatprep.subr.mxu0 0.0
    %2181 = vmatpush2.msra.mxu0 0.0
    %2182 = vmatprep.subr.mxu0 0.0
    %2183 = vmatpush2.msra.mxu0 0.0
    %2184 = vmatprep.subr.mxu0 0.0
    %2185 = vmatpush2.msra.mxu0 0.0
    %2186 = vmatprep.subr.mxu0 0.0
    %2187 = vmatpush2.msra.mxu0 0.0
    %2188 = vmatprep.subr.mxu0 0.0
    %2189 = vmatpush2.msra.mxu0 0.0
    %2190 = vmatprep.subr.mxu0 0.0
    %2191 = vmatpush2.msra.mxu0 0.0
    %2192 = vmatprep.subr.mxu0 0.0
    %2193 = vmatpush2.msra.mxu0 0.0
    %2194 = vmatprep.subr.mxu0 0.0
    %2195 = vmatpush2.msra.mxu0 0.0
    %2196 = vmatprep.subr.mxu0 0.0
    %2197 = vmatpush2.msra.mxu0 0.0
    %2198 = vmatprep.subr.mxu0 0.0
    %2199 = vmatpush2.msra.mxu0 0.0
    %2200 = vmatprep.subr.mxu0 0.0
    %2201 = vmatpush2.msra.mxu0 0.0
    %2202 = vmatprep.subr.mxu0 0.0
    %2203 = vmatpush2.msra.mxu0 0.0
    %2204 = vmatprep.subr.mxu0 0.0
    %2205 = vmatpush2.msra.mxu0 0.0
    %2206 = vmatprep.subr.mxu0 0.0
    %2207 = vmatpush2.msra.mxu0 0.0
    %2208 = vmatprep.subr.mxu0 0.0
    %2209 = vmatpush2.msra.mxu0 0.0
    %2210 = vmatprep.mubr.f32.mxu0 0.0
    %2211 = vmatmul.mubr.f32.gmra.mxu0 %v1123
    %v2212 = vpop.f32.mrf.mxu0
    %v2213 = vadd.f32 %v1118, %v2212
    %v2214 = vpop.f32.mrf.mxu0
    %v2215 = vadd.f32 %v1118, %v2214
    %2216 = vdwg.mxu0
    %v2217 = vadd.f32 %v2213, %v2136
    %v2218 = vadd.f32 %v2215, %v2138
    %s2219 = scalar_lea.vmem [#allocation2], 16
    %2220 = vst [vmem:[%s2219] sm:$0xff] %v2217
    %2221 = vst [vmem:[%s2219 + $0x8] sm:$0xff] %v2218
    // Predicated region
    $region30: #{tpu_custom_call.1} parent=1 // pred_check
      _
    $region31: #{tpu_custom_call.1} parent=1 // pred_check_branch
      %2223 = sbr.rel (0) target = $region33
    $region32: #{tpu_custom_call.1} parent=1 // pred_region
      %s2225 = ssub.s32 512, 512
      %2226 = vsyncadd [#allocation3], %s2225
      %s2227 = sshll.u32 [#allocation2], 4
      %s2228 = int_to_ptr.vmem [resolvable:$true] %s2227
      %2233 = dma.vmem_to_hbm [thread:$0]  %s2228, 512, %s7, [#allocation3], 256, 256, 16
    $region33: #{tpu_custom_call.1} parent=1 // pred_fallthru
      _
    // Predicated region
    $region34: #{tpu_custom_call.1} parent=1 // pred_check
      _
    $region35: #{tpu_custom_call.1} parent=1 // pred_check_branch
      %2235 = sbr.rel (0) target = $region37
    $region36: #{tpu_custom_call.1} parent=1 // pred_region
      %2236 = dma.done [#allocation3], 512
    $region37: #{tpu_custom_call.1} parent=1 // pred_fallthru
      _
    %2237 = vsyncpa [#allocation3], 1

// kernel: tpu_custom_call.1
$region0: #{tpu_custom_call.1}
  #allocation0 [shape = 'u32[]', space=smem, size = 0x4, offset = 0x4, fixed_abs, tag = 'smem constant byte address 0x4 - core index']
  #allocation1 [shape = 'u32[144,128]{1,0:T(1,128)}', space=vmem, size = 0x12000, scoped, tag = 'internal scratch']
  %s0 = inlined_call_operand.vmem [shape: f32[2,4,256], index: 0, kind: input, shape index: {}]
  %s1 = inlined_call_operand.vmem [shape: f32[8,256], index: 1, kind: input, shape index: {}]
  %s2 = inlined_call_operand.vmem [shape: f32[8,8], index: 2, kind: input, shape index: {}]
  %s3 = inlined_call_operand.vmem [shape: f32[4,4], index: 3, kind: input, shape index: {}]
  %s4 = inlined_call_operand.vmem [shape: f32[9,4,4], index: 4, kind: input, shape index: {}]
  %s5 = inlined_call_operand.vmem [shape: f32[8,4], index: 5, kind: input, shape index: {}]
  %s6 = inlined_call_operand.vmem [shape: f32[8,4], index: 6, kind: input, shape index: {}]
  %s7 = inlined_call_operand.hbm [shape: f32[2,8,256], index: 7, kind: output, shape index: {}]
  %s8 = sld [smem:[#allocation0]]
  $region38: #{tpu_custom_call.1} parent=0
    _
  %s10 = ssub.s32 1, %s8
  %s11 = scalar_select 0, %s10, %s8
  $region1: #{tpu_custom_call.1} parent=0
    #allocation2 [shape = 'u8[16384]{0}', space=vmem, size = 0x4000, scoped, tag = 'output window, operand 0, single buffered']
    #allocation3 [shape = 's32[1]{0}', space=sflag, size = 0x4, scoped, tag = 'scoped memory for tpu_custom_call.1']
    %12 = vsyncpa [#allocation3], 0
    // Predicated region
    $region2: #{tpu_custom_call.1} parent=1 // pred_check
      _
    $region3: #{tpu_custom_call.1} parent=1 // pred_check_branch
      %14 = sbr.rel (0) target = $region5
    $region4: #{tpu_custom_call.1} parent=1 // pred_region
      _
    $region5: #{tpu_custom_call.1} parent=1 // pred_fallthru
      _
    // Predicated region
    $region6: #{tpu_custom_call.1} parent=1 // pred_check
      _
    $region7: #{tpu_custom_call.1} parent=1 // pred_check_branch
      %16 = sbr.rel (0) target = $region9
    $region8: #{tpu_custom_call.1} parent=1 // pred_region
      _
    $region9: #{tpu_custom_call.1} parent=1 // pred_fallthru
      _
    // Predicated region
    $region10: #{tpu_custom_call.1} parent=1 // pred_check
      _
    $region11: #{tpu_custom_call.1} parent=1 // pred_check_branch
      %18 = sbr.rel (0) target = $region13
    $region12: #{tpu_custom_call.1} parent=1 // pred_region
      _
    $region13: #{tpu_custom_call.1} parent=1 // pred_fallthru
      _
    // Predicated region
    $region14: #{tpu_custom_call.1} parent=1 // pred_check
      _
    $region15: #{tpu_custom_call.1} parent=1 // pred_check_branch
      %20 = sbr.rel (0) target = $region17
    $region16: #{tpu_custom_call.1} parent=1 // pred_region
      _
    $region17: #{tpu_custom_call.1} parent=1 // pred_fallthru
      _
    // Predicated region
    $region18: #{tpu_custom_call.1} parent=1 // pred_check
      _
    $region19: #{tpu_custom_call.1} parent=1 // pred_check_branch
      %22 = sbr.rel (0) target = $region21
    $region20: #{tpu_custom_call.1} parent=1 // pred_region
      _
    $region21: #{tpu_custom_call.1} parent=1 // pred_fallthru
      _
    // Predicated region
    $region22: #{tpu_custom_call.1} parent=1 // pred_check
      _
    $region23: #{tpu_custom_call.1} parent=1 // pred_check_branch
      %24 = sbr.rel (0) target = $region25
    $region24: #{tpu_custom_call.1} parent=1 // pred_region
      _
    $region25: #{tpu_custom_call.1} parent=1 // pred_fallthru
      _
    // Predicated region
    $region26: #{tpu_custom_call.1} parent=1 // pred_check
      _
    $region27: #{tpu_custom_call.1} parent=1 // pred_check_branch
      %26 = sbr.rel (0) target = $region29
    $region28: #{tpu_custom_call.1} parent=1 // pred_region
      _
    $region29: #{tpu_custom_call.1} parent=1 // pred_fallthru
      _
    %v27 = vld [vmem:[%s2] sm:$0xf]
    %v28 = vld [vmem:[%s2] sm:$0xff]
    %v29 = vld [vmem:[%s1] ss:$8 sm:$0x3]
    %vm30 = vcmp.gt.f32.partialorder %v29, 0.5
    %s31 = scalar_lea.vmem %s1, 1
    %v32 = vld [vmem:[%s31] ss:$8 sm:$0x3]
    %vm33 = vcmp.gt.f32.partialorder %v32, 0.5
    %s34 = scalar_lea.vmem %s1, 2
    %v35 = vld [vmem:[%s34] ss:$8 sm:$0x3]
    %vm36 = vcmp.gt.f32.partialorder %v35, 0.5
    %s37 = scalar_lea.vmem %s1, 3
    %v38 = vld [vmem:[%s37] ss:$8 sm:$0x3]
    %vm39 = vcmp.gt.f32.partialorder %v38, 0.5
    %v40 = vld [vmem:[%s3] sm:$0xf]
    %v41 = vld [vmem:[%s5] sm:$0xff]
    %v42 = vld [vmem:[%s4] sm:$0xf]
    %s43 = scalar_lea.vmem %s4, 4
    %v44 = vld [vmem:[%s43] sm:$0xf]
    %s45 = scalar_lea.vmem %s4, 8
    %v46 = vld [vmem:[%s45] sm:$0xf]
    %s47 = scalar_lea.vmem %s4, 12
    %v48 = vld [vmem:[%s47] sm:$0xf]
    %s49 = scalar_lea.vmem %s4, 16
    %v50 = vld [vmem:[%s49] sm:$0xf]
    %s51 = scalar_lea.vmem %s4, 20
    %v52 = vld [vmem:[%s51] sm:$0xf]
    %s53 = scalar_lea.vmem %s4, 24
    %v54 = vld [vmem:[%s53] sm:$0xf]
    %s55 = scalar_lea.vmem %s4, 28
    %v56 = vld [vmem:[%s55] sm:$0xf]
    %s57 = scalar_lea.vmem %s4, 32
    %v58 = vld [vmem:[%s57] sm:$0xf]
    %v59 = vld [vmem:[%s6] sm:$0xff]
    %v60 = vld [vmem:[%s0] sm:$0xff]
    %62 = vset.pattern.permute.xlu0 0
    %63 = vperm.xlu0 %62, %v27
    %v64 = vpop.permute.xlu0 %63
    %v66 = vunpack.c.l.s4 839922192
    %v67 = vunpack.c.0.s8 %v66
    %v68 = vlaneseq
    %v69 = vshrl.u32 %v68, 7
    %v70 = vsub.s32 %v67, %v69
    %v71 = vrot.slane %v64, %v70
    %v73 = vmul.f32 %v60, %v71
    %74 = vset.pattern.permute.xlu0 1
    %75 = vperm.xlu0 %74, %v27
    %v76 = vpop.permute.xlu0 %75
    %v78 = vunpack.c.l.s4 839922192
    %v79 = vunpack.c.0.s8 %v78
    %v80 = vlaneseq
    %v81 = vshrl.u32 %v80, 7
    %v82 = vsub.s32 %v79, %v81
    %v83 = vrot.slane %v76, %v82
    %v85 = vadd.f32 %v73, %v83
    %v86 = vmax.f32 %v85, 0.0
    %87 = vset.pattern.permute.xlu0 2
    %88 = vperm.xlu0 %87, %v27
    %v89 = vpop.permute.xlu0 %88
    %v92 = vcombine.high %v86, %v86
    %vm93 = vcmask 31744
    %v95 = vsel %vm93, %v40, 0
    %vm97 = vcmask 1043456
    %v98 = vsel %vm97, %v86, 0
    %v100 = vsel %vm97, %v92, 0
    %102 = vmatprep.subr.mxu0 0.0
    %103 = vmatpush1.msra.mxu0 0.0
    %104 = vmatprep.subr.mxu0 0.0
    %105 = vmatpush1.msra.mxu0 0.0
    %106 = vmatprep.subr.mxu0 0.0
    %107 = vmatpush1.msra.mxu0 0.0
    %108 = vmatprep.subr.mxu0 0.0
    %109 = vmatpush1.msra.mxu0 0.0
    %110 = vmatprep.subr.mxu0 0.0
    %111 = vmatpush1.msra.mxu0 0.0
    %112 = vmatprep.subr.mxu0 0.0
    %113 = vmatpush1.msra.mxu0 0.0
    %114 = vmatprep.subr.mxu0 0.0
    %115 = vmatpush1.msra.mxu0 0.0
    %116 = vmatprep.subr.mxu0 0.0
    %117 = vmatpush1.msra.mxu0 0.0
    %118 = vmatprep.subr.mxu0 0.0
    %119 = vmatpush1.msra.mxu0 0.0
    %120 = vmatprep.subr.mxu0 0.0
    %121 = vmatpush1.msra.mxu0 0.0
    %122 = vmatprep.subr.mxu0 0.0
    %123 = vmatpush1.msra.mxu0 0.0
    %124 = vmatprep.subr.mxu0 0.0
    %125 = vmatpush1.msra.mxu0 0.0
    %126 = vmatprep.subr.mxu0 0.0
    %127 = vmatpush1.msra.mxu0 0.0
    %128 = vmatprep.subr.mxu0 0.0
    %129 = vmatpush1.msra.mxu0 0.0
    %130 = vmatprep.subr.mxu0 0.0
    %131 = vmatpush1.msra.mxu0 0.0
    %132 = vmatprep.subr.mxu0 %v100
    %133 = vmatpush1.msra.mxu0 %v98
    %134 = vmatprep.subr.mxu0 0.0
    %135 = vmatpush2.msra.mxu0 0.0
    %136 = vmatprep.subr.mxu0 0.0
    %137 = vmatpush2.msra.mxu0 0.0
    %138 = vmatprep.subr.mxu0 0.0
    %139 = vmatpush2.msra.mxu0 0.0
    %140 = vmatprep.subr.mxu0 0.0
    %141 = vmatpush2.msra.mxu0 0.0
    %142 = vmatprep.subr.mxu0 0.0
    %143 = vmatpush2.msra.mxu0 0.0
    %144 = vmatprep.subr.mxu0 0.0
    %145 = vmatpush2.msra.mxu0 0.0
    %146 = vmatprep.subr.mxu0 0.0
    %147 = vmatpush2.msra.mxu0 0.0
    %148 = vmatprep.subr.mxu0 0.0
    %149 = vmatpush2.msra.mxu0 0.0
    %150 = vmatprep.subr.mxu0 0.0
    %151 = vmatpush2.msra.mxu0 0.0
    %152 = vmatprep.subr.mxu0 0.0
    %153 = vmatpush2.msra.mxu0 0.0
    %154 = vmatprep.subr.mxu0 0.0
    %155 = vmatpush2.msra.mxu0 0.0
    %156 = vmatprep.subr.mxu0 0.0
    %157 = vmatpush2.msra.mxu0 0.0
    %158 = vmatprep.subr.mxu0 0.0
    %159 = vmatpush2.msra.mxu0 0.0
    %160 = vmatprep.subr.mxu0 0.0
    %161 = vmatpush2.msra.mxu0 0.0
    %162 = vmatprep.subr.mxu0 0.0
    %163 = vmatpush2.msra.mxu0 0.0
    %164 = vmatprep.subr.mxu0 0.0
    %165 = vmatpush2.msra.mxu0 0.0
    %166 = vmatprep.mubr.f32.mxu0 0.0
    %167 = vmatmul.mubr.f32.gmra.mxu0 %v95
    %v168 = vpop.f32.mrf.mxu0
    %v169 = vadd.f32 %v89, %v168
    %v170 = vpop.f32.mrf.mxu0
    %v171 = vadd.f32 %v89, %v170
    %172 = vdwg.mxu0
    %v173 = vmax.f32 %v169, 0.0
    %v174 = vmax.f32 %v171, 0.0
    %175 = vrot.lane.b32.xlu0 %v173, 16
    %v176 = vpop.permute.xlu0 %175
    %177 = vrot.lane.b32.xlu0 %v174, 16
    %v178 = vpop.permute.xlu0 %177
    %v179 = vlaneseq
    %v180 = vand.u32 %v179, 127
    %vm181 = vcmp.lt.s32.totalorder %v180, 16
    %v182 = vsel %vm181, %v176, %v178
    %v183 = vsel %vm181, %v178, %v176
    %v184 = vsel %vm36, 1, 0
    %v185 = vlaneseq
    %v186 = vshrl.u32 %v185, 7
    %v187 = vsub.s32 0, %v186
    %v188 = vrot.slane %v184, %v187
    %v189 = vlaneseq
    %v190 = vshrl.u32 %v189, 7
    %v191 = vsub.s32 1, %v190
    %v192 = vrot.slane %v184, %v191
    %vm193 = vcmp.eq.s32.totalorder %v188, 1
    %vm194 = vcmp.eq.s32.totalorder %v192, 1
    %v195 = vsel %vm193, %v183, 0.0
    %v196 = vsel %vm194, %v182, 0.0
    %197 = vrot.lane.b32.xlu0 %v173, 112
    %v198 = vpop.permute.xlu0 %197
    %199 = vrot.lane.b32.xlu0 %v174, 112
    %v200 = vpop.permute.xlu0 %199
    %vm201 = vcmp.lt.s32.totalorder %v180, 112
    %v202 = vsel %vm201, %v198, %v200
    %v203 = vsel %vm201, %v200, %v198
    %v204 = vsel %vm39, 1, 0
    %v205 = vlaneseq
    %v206 = vshrl.u32 %v205, 7
    %v207 = vsub.s32 0, %v206
    %v208 = vrot.slane %v204, %v207
    %v209 = vlaneseq
    %v210 = vshrl.u32 %v209, 7
    %v211 = vsub.s32 1, %v210
    %v212 = vrot.slane %v204, %v211
    %vm213 = vcmp.eq.s32.totalorder %v208, 1
    %vm214 = vcmp.eq.s32.totalorder %v212, 1
    %v215 = vsel %vm213, %v202, 0.0
    %v216 = vsel %vm214, %v203, 0.0
    %217 = vrot.lane.b32.xlu0 %v173, 1
    %v218 = vpop.permute.xlu0 %217
    %219 = vrot.lane.b32.xlu0 %v174, 1
    %v220 = vpop.permute.xlu0 %219
    %vm221 = vcmp.lt.s32.totalorder %v180, 1
    %v222 = vsel %vm221, %v218, %v220
    %v223 = vsel %vm221, %v220, %v218
    %v224 = vsel %vm30, 1, 0
    %v225 = vlaneseq
    %v226 = vshrl.u32 %v225, 7
    %v227 = vsub.s32 0, %v226
    %v228 = vrot.slane %v224, %v227
    %v229 = vlaneseq
    %v230 = vshrl.u32 %v229, 7
    %v231 = vsub.s32 1, %v230
    %v232 = vrot.slane %v224, %v231
    %vm233 = vcmp.eq.s32.totalorder %v228, 1
    %vm234 = vcmp.eq.s32.totalorder %v232, 1
    %v235 = vsel %vm233, %v223, 0.0
    %v236 = vsel %vm234, %v222, 0.0
    %v238 = vsel %vm93, %v48, 0
    %v241 = vsel %vm97, %v235, 0
    %v244 = vsel %vm97, %v236, 0
    %246 = vmatprep.subr.mxu0 0.0
    %247 = vmatpush1.msra.mxu0 0.0
    %248 = vmatprep.subr.mxu0 0.0
    %249 = vmatpush1.msra.mxu0 0.0
    %250 = vmatprep.subr.mxu0 0.0
    %251 = vmatpush1.msra.mxu0 0.0
    %252 = vmatprep.subr.mxu0 0.0
    %253 = vmatpush1.msra.mxu0 0.0
    %254 = vmatprep.subr.mxu0 0.0
    %255 = vmatpush1.msra.mxu0 0.0
    %256 = vmatprep.subr.mxu0 0.0
    %257 = vmatpush1.msra.mxu0 0.0
    %258 = vmatprep.subr.mxu0 0.0
    %259 = vmatpush1.msra.mxu0 0.0
    %260 = vmatprep.subr.mxu0 0.0
    %261 = vmatpush1.msra.mxu0 0.0
    %262 = vmatprep.subr.mxu0 0.0
    %263 = vmatpush1.msra.mxu0 0.0
    %264 = vmatprep.subr.mxu0 0.0
    %265 = vmatpush1.msra.mxu0 0.0
    %266 = vmatprep.subr.mxu0 0.0
    %267 = vmatpush1.msra.mxu0 0.0
    %268 = vmatprep.subr.mxu0 0.0
    %269 = vmatpush1.msra.mxu0 0.0
    %270 = vmatprep.subr.mxu0 0.0
    %271 = vmatpush1.msra.mxu0 0.0
    %272 = vmatprep.subr.mxu0 0.0
    %273 = vmatpush1.msra.mxu0 0.0
    %274 = vmatprep.subr.mxu0 0.0
    %275 = vmatpush1.msra.mxu0 0.0
    %276 = vmatprep.subr.mxu0 %v244
    %277 = vmatpush1.msra.mxu0 %v241
    %278 = vmatprep.subr.mxu0 0.0
    %279 = vmatpush2.msra.mxu0 0.0
    %280 = vmatprep.subr.mxu0 0.0
    %281 = vmatpush2.msra.mxu0 0.0
    %282 = vmatprep.subr.mxu0 0.0
    %283 = vmatpush2.msra.mxu0 0.0
    %284 = vmatprep.subr.mxu0 0.0
    %285 = vmatpush2.msra.mxu0 0.0
    %286 = vmatprep.subr.mxu0 0.0
    %287 = vmatpush2.msra.mxu0 0.0
    %288 = vmatprep.subr.mxu0 0.0
    %289 = vmatpush2.msra.mxu0 0.0
    %290 = vmatprep.subr.mxu0 0.0
    %291 = vmatpush2.msra.mxu0 0.0
    %292 = vmatprep.subr.mxu0 0.0
    %293 = vmatpush2.msra.mxu0 0.0
    %294 = vmatprep.subr.mxu0 0.0
    %295 = vmatpush2.msra.mxu0 0.0
    %296 = vmatprep.subr.mxu0 0.0
    %297 = vmatpush2.msra.mxu0 0.0
    %298 = vmatprep.subr.mxu0 0.0
    %299 = vmatpush2.msra.mxu0 0.0
    %300 = vmatprep.subr.mxu0 0.0
    %301 = vmatpush2.msra.mxu0 0.0
    %302 = vmatprep.subr.mxu0 0.0
    %303 = vmatpush2.msra.mxu0 0.0
    %304 = vmatprep.subr.mxu0 0.0
    %305 = vmatpush2.msra.mxu0 0.0
    %306 = vmatprep.subr.mxu0 0.0
    %307 = vmatpush2.msra.mxu0 0.0
    %308 = vmatprep.subr.mxu0 0.0
    %309 = vmatpush2.msra.mxu0 0.0
    %310 = vmatprep.mubr.f32.mxu0 0.0
    %311 = vmatmul.mubr.f32.gmra.mxu0 %v238
    %v312 = vpop.f32.mrf.mxu0
    %v313 = vadd.f32 0.0, %v312
    %v314 = vpop.f32.mrf.mxu0
    %v315 = vadd.f32 0.0, %v314
    %316 = vdwg.mxu0
    %v318 = vsel %vm93, %v50, 0
    %v321 = vsel %vm97, %v173, 0
    %v324 = vsel %vm97, %v174, 0
    %326 = vmatprep.subr.mxu0 0.0
    %327 = vmatpush1.msra.mxu0 0.0
    %328 = vmatprep.subr.mxu0 0.0
    %329 = vmatpush1.msra.mxu0 0.0
    %330 = vmatprep.subr.mxu0 0.0
    %331 = vmatpush1.msra.mxu0 0.0
    %332 = vmatprep.subr.mxu0 0.0
    %333 = vmatpush1.msra.mxu0 0.0
    %334 = vmatprep.subr.mxu0 0.0
    %335 = vmatpush1.msra.mxu0 0.0
    %336 = vmatprep.subr.mxu0 0.0
    %337 = vmatpush1.msra.mxu0 0.0
    %338 = vmatprep.subr.mxu0 0.0
    %339 = vmatpush1.msra.mxu0 0.0
    %340 = vmatprep.subr.mxu0 0.0
    %341 = vmatpush1.msra.mxu0 0.0
    %342 = vmatprep.subr.mxu0 0.0
    %343 = vmatpush1.msra.mxu0 0.0
    %344 = vmatprep.subr.mxu0 0.0
    %345 = vmatpush1.msra.mxu0 0.0
    %346 = vmatprep.subr.mxu0 0.0
    %347 = vmatpush1.msra.mxu0 0.0
    %348 = vmatprep.subr.mxu0 0.0
    %349 = vmatpush1.msra.mxu0 0.0
    %350 = vmatprep.subr.mxu0 0.0
    %351 = vmatpush1.msra.mxu0 0.0
    %352 = vmatprep.subr.mxu0 0.0
    %353 = vmatpush1.msra.mxu0 0.0
    %354 = vmatprep.subr.mxu0 0.0
    %355 = vmatpush1.msra.mxu0 0.0
    %356 = vmatprep.subr.mxu0 %v324
    %357 = vmatpush1.msra.mxu0 %v321
    %358 = vmatprep.subr.mxu0 0.0
    %359 = vmatpush2.msra.mxu0 0.0
    %360 = vmatprep.subr.mxu0 0.0
    %361 = vmatpush2.msra.mxu0 0.0
    %362 = vmatprep.subr.mxu0 0.0
    %363 = vmatpush2.msra.mxu0 0.0
    %364 = vmatprep.subr.mxu0 0.0
    %365 = vmatpush2.msra.mxu0 0.0
    %366 = vmatprep.subr.mxu0 0.0
    %367 = vmatpush2.msra.mxu0 0.0
    %368 = vmatprep.subr.mxu0 0.0
    %369 = vmatpush2.msra.mxu0 0.0
    %370 = vmatprep.subr.mxu0 0.0
    %371 = vmatpush2.msra.mxu0 0.0
    %372 = vmatprep.subr.mxu0 0.0
    %373 = vmatpush2.msra.mxu0 0.0
    %374 = vmatprep.subr.mxu0 0.0
    %375 = vmatpush2.msra.mxu0 0.0
    %376 = vmatprep.subr.mxu0 0.0
    %377 = vmatpush2.msra.mxu0 0.0
    %378 = vmatprep.subr.mxu0 0.0
    %379 = vmatpush2.msra.mxu0 0.0
    %380 = vmatprep.subr.mxu0 0.0
    %381 = vmatpush2.msra.mxu0 0.0
    %382 = vmatprep.subr.mxu0 0.0
    %383 = vmatpush2.msra.mxu0 0.0
    %384 = vmatprep.subr.mxu0 0.0
    %385 = vmatpush2.msra.mxu0 0.0
    %386 = vmatprep.subr.mxu0 0.0
    %387 = vmatpush2.msra.mxu0 0.0
    %388 = vmatprep.subr.mxu0 0.0
    %389 = vmatpush2.msra.mxu0 0.0
    %390 = vmatprep.mubr.f32.mxu0 0.0
    %391 = vmatmul.mubr.f32.gmra.mxu0 %v318
    %v392 = vpop.f32.mrf.mxu0
    %v393 = vadd.f32 %v313, %v392
    %v394 = vpop.f32.mrf.mxu0
    %v395 = vadd.f32 %v315, %v394
    %396 = vdwg.mxu0
    %397 = vrot.lane.b32.xlu0 %v173, 127
    %v398 = vpop.permute.xlu0 %397
    %399 = vrot.lane.b32.xlu0 %v174, 127
    %v400 = vpop.permute.xlu0 %399
    %vm401 = vcmp.lt.s32.totalorder %v180, 127
    %v402 = vsel %vm401, %v398, %v400
    %v403 = vsel %vm401, %v400, %v398
    %v404 = vsel %vm33, 1, 0
    %v405 = vlaneseq
    %v406 = vshrl.u32 %v405, 7
    %v407 = vsub.s32 0, %v406
    %v408 = vrot.slane %v404, %v407
    %v409 = vlaneseq
    %v410 = vshrl.u32 %v409, 7
    %v411 = vsub.s32 1, %v410
    %v412 = vrot.slane %v404, %v411
    %vm413 = vcmp.eq.s32.totalorder %v408, 1
    %vm414 = vcmp.eq.s32.totalorder %v412, 1
    %v415 = vsel %vm413, %v402, 0.0
    %v416 = vsel %vm414, %v403, 0.0
    %v418 = vsel %vm93, %v52, 0
    %v421 = vsel %vm97, %v415, 0
    %v424 = vsel %vm97, %v416, 0
    %426 = vmatprep.subr.mxu0 0.0
    %427 = vmatpush1.msra.mxu0 0.0
    %428 = vmatprep.subr.mxu0 0.0
    %429 = vmatpush1.msra.mxu0 0.0
    %430 = vmatprep.subr.mxu0 0.0
    %431 = vmatpush1.msra.mxu0 0.0
    %432 = vmatprep.subr.mxu0 0.0
    %433 = vmatpush1.msra.mxu0 0.0
    %434 = vmatprep.subr.mxu0 0.0
    %435 = vmatpush1.msra.mxu0 0.0
    %436 = vmatprep.subr.mxu0 0.0
    %437 = vmatpush1.msra.mxu0 0.0
    %438 = vmatprep.subr.mxu0 0.0
    %439 = vmatpush1.msra.mxu0 0.0
    %440 = vmatprep.subr.mxu0 0.0
    %441 = vmatpush1.msra.mxu0 0.0
    %442 = vmatprep.subr.mxu0 0.0
    %443 = vmatpush1.msra.mxu0 0.0
    %444 = vmatprep.subr.mxu0 0.0
    %445 = vmatpush1.msra.mxu0 0.0
    %446 = vmatprep.subr.mxu0 0.0
    %447 = vmatpush1.msra.mxu0 0.0
    %448 = vmatprep.subr.mxu0 0.0
    %449 = vmatpush1.msra.mxu0 0.0
    %450 = vmatprep.subr.mxu0 0.0
    %451 = vmatpush1.msra.mxu0 0.0
    %452 = vmatprep.subr.mxu0 0.0
    %453 = vmatpush1.msra.mxu0 0.0
    %454 = vmatprep.subr.mxu0 0.0
    %455 = vmatpush1.msra.mxu0 0.0
    %456 = vmatprep.subr.mxu0 %v424
    %457 = vmatpush1.msra.mxu0 %v421
    %458 = vmatprep.subr.mxu0 0.0
    %459 = vmatpush2.msra.mxu0 0.0
    %460 = vmatprep.subr.mxu0 0.0
    %461 = vmatpush2.msra.mxu0 0.0
    %462 = vmatprep.subr.mxu0 0.0
    %463 = vmatpush2.msra.mxu0 0.0
    %464 = vmatprep.subr.mxu0 0.0
    %465 = vmatpush2.msra.mxu0 0.0
    %466 = vmatprep.subr.mxu0 0.0
    %467 = vmatpush2.msra.mxu0 0.0
    %468 = vmatprep.subr.mxu0 0.0
    %469 = vmatpush2.msra.mxu0 0.0
    %470 = vmatprep.subr.mxu0 0.0
    %471 = vmatpush2.msra.mxu0 0.0
    %472 = vmatprep.subr.mxu0 0.0
    %473 = vmatpush2.msra.mxu0 0.0
    %474 = vmatprep.subr.mxu0 0.0
    %475 = vmatpush2.msra.mxu0 0.0
    %476 = vmatprep.subr.mxu0 0.0
    %477 = vmatpush2.msra.mxu0 0.0
    %478 = vmatprep.subr.mxu0 0.0
    %479 = vmatpush2.msra.mxu0 0.0
    %480 = vmatprep.subr.mxu0 0.0
    %481 = vmatpush2.msra.mxu0 0.0
    %482 = vmatprep.subr.mxu0 0.0
    %483 = vmatpush2.msra.mxu0 0.0
    %484 = vmatprep.subr.mxu0 0.0
    %485 = vmatpush2.msra.mxu0 0.0
    %486 = vmatprep.subr.mxu0 0.0
    %487 = vmatpush2.msra.mxu0 0.0
    %488 = vmatprep.subr.mxu0 0.0
    %489 = vmatpush2.msra.mxu0 0.0
    %490 = vmatprep.mubr.f32.mxu0 0.0
    %491 = vmatmul.mubr.f32.gmra.mxu0 %v418
    %v492 = vpop.f32.mrf.mxu0
    %v493 = vadd.f32 0.0, %v492
    %v494 = vpop.f32.mrf.mxu0
    %v495 = vadd.f32 0.0, %v494
    %496 = vdwg.mxu0
    %v497 = vadd.f32 %v393, %v493
    %v498 = vadd.f32 %v395, %v495
    %v500 = vsel %vm93, %v44, 0
    %v503 = vsel %vm97, %v195, 0
    %v506 = vsel %vm97, %v196, 0
    %508 = vmatprep.subr.mxu0 0.0
    %509 = vmatpush1.msra.mxu0 0.0
    %510 = vmatprep.subr.mxu0 0.0
    %511 = vmatpush1.msra.mxu0 0.0
    %512 = vmatprep.subr.mxu0 0.0
    %513 = vmatpush1.msra.mxu0 0.0
    %514 = vmatprep.subr.mxu0 0.0
    %515 = vmatpush1.msra.mxu0 0.0
    %516 = vmatprep.subr.mxu0 0.0
    %517 = vmatpush1.msra.mxu0 0.0
    %518 = vmatprep.subr.mxu0 0.0
    %519 = vmatpush1.msra.mxu0 0.0
    %520 = vmatprep.subr.mxu0 0.0
    %521 = vmatpush1.msra.mxu0 0.0
    %522 = vmatprep.subr.mxu0 0.0
    %523 = vmatpush1.msra.mxu0 0.0
    %524 = vmatprep.subr.mxu0 0.0
    %525 = vmatpush1.msra.mxu0 0.0
    %526 = vmatprep.subr.mxu0 0.0
    %527 = vmatpush1.msra.mxu0 0.0
    %528 = vmatprep.subr.mxu0 0.0
    %529 = vmatpush1.msra.mxu0 0.0
    %530 = vmatprep.subr.mxu0 0.0
    %531 = vmatpush1.msra.mxu0 0.0
    %532 = vmatprep.subr.mxu0 0.0
    %533 = vmatpush1.msra.mxu0 0.0
    %534 = vmatprep.subr.mxu0 0.0
    %535 = vmatpush1.msra.mxu0 0.0
    %536 = vmatprep.subr.mxu0 0.0
    %537 = vmatpush1.msra.mxu0 0.0
    %538 = vmatprep.subr.mxu0 %v506
    %539 = vmatpush1.msra.mxu0 %v503
    %540 = vmatprep.subr.mxu0 0.0
    %541 = vmatpush2.msra.mxu0 0.0
    %542 = vmatprep.subr.mxu0 0.0
    %543 = vmatpush2.msra.mxu0 0.0
    %544 = vmatprep.subr.mxu0 0.0
    %545 = vmatpush2.msra.mxu0 0.0
    %546 = vmatprep.subr.mxu0 0.0
    %547 = vmatpush2.msra.mxu0 0.0
    %548 = vmatprep.subr.mxu0 0.0
    %549 = vmatpush2.msra.mxu0 0.0
    %550 = vmatprep.subr.mxu0 0.0
    %551 = vmatpush2.msra.mxu0 0.0
    %552 = vmatprep.subr.mxu0 0.0
    %553 = vmatpush2.msra.mxu0 0.0
    %554 = vmatprep.subr.mxu0 0.0
    %555 = vmatpush2.msra.mxu0 0.0
    %556 = vmatprep.subr.mxu0 0.0
    %557 = vmatpush2.msra.mxu0 0.0
    %558 = vmatprep.subr.mxu0 0.0
    %559 = vmatpush2.msra.mxu0 0.0
    %560 = vmatprep.subr.mxu0 0.0
    %561 = vmatpush2.msra.mxu0 0.0
    %562 = vmatprep.subr.mxu0 0.0
    %563 = vmatpush2.msra.mxu0 0.0
    %564 = vmatprep.subr.mxu0 0.0
    %565 = vmatpush2.msra.mxu0 0.0
    %566 = vmatprep.subr.mxu0 0.0
    %567 = vmatpush2.msra.mxu0 0.0
    %568 = vmatprep.subr.mxu0 0.0
    %569 = vmatpush2.msra.mxu0 0.0
    %570 = vmatprep.subr.mxu0 0.0
    %571 = vmatpush2.msra.mxu0 0.0
    %572 = vmatprep.mubr.f32.mxu0 0.0
    %573 = vmatmul.mubr.f32.gmra.mxu0 %v500
    %v574 = vpop.f32.mrf.mxu0
    %v575 = vadd.f32 0.0, %v574
    %v576 = vpop.f32.mrf.mxu0
    %v577 = vadd.f32 0.0, %v576
    %578 = vdwg.mxu0
    %v579 = vadd.f32 %v497, %v575
    %v580 = vadd.f32 %v498, %v577
    %581 = vrot.lane.b32.xlu0 %v195, 1
    %v582 = vpop.permute.xlu0 %581
    %583 = vrot.lane.b32.xlu0 %v196, 1
    %v584 = vpop.permute.xlu0 %583
    %v585 = vsel %vm221, %v582, %v584
    %v586 = vsel %vm221, %v584, %v582
    %v587 = vsel %vm233, %v586, 0.0
    %v588 = vsel %vm234, %v585, 0.0
    %v590 = vsel %vm93, %v42, 0
    %v593 = vsel %vm97, %v587, 0
    %v596 = vsel %vm97, %v588, 0
    %598 = vmatprep.subr.mxu0 0.0
    %599 = vmatpush1.msra.mxu0 0.0
    %600 = vmatprep.subr.mxu0 0.0
    %601 = vmatpush1.msra.mxu0 0.0
    %602 = vmatprep.subr.mxu0 0.0
    %603 = vmatpush1.msra.mxu0 0.0
    %604 = vmatprep.subr.mxu0 0.0
    %605 = vmatpush1.msra.mxu0 0.0
    %606 = vmatprep.subr.mxu0 0.0
    %607 = vmatpush1.msra.mxu0 0.0
    %608 = vmatprep.subr.mxu0 0.0
    %609 = vmatpush1.msra.mxu0 0.0
    %610 = vmatprep.subr.mxu0 0.0
    %611 = vmatpush1.msra.mxu0 0.0
    %612 = vmatprep.subr.mxu0 0.0
    %613 = vmatpush1.msra.mxu0 0.0
    %614 = vmatprep.subr.mxu0 0.0
    %615 = vmatpush1.msra.mxu0 0.0
    %616 = vmatprep.subr.mxu0 0.0
    %617 = vmatpush1.msra.mxu0 0.0
    %618 = vmatprep.subr.mxu0 0.0
    %619 = vmatpush1.msra.mxu0 0.0
    %620 = vmatprep.subr.mxu0 0.0
    %621 = vmatpush1.msra.mxu0 0.0
    %622 = vmatprep.subr.mxu0 0.0
    %623 = vmatpush1.msra.mxu0 0.0
    %624 = vmatprep.subr.mxu0 0.0
    %625 = vmatpush1.msra.mxu0 0.0
    %626 = vmatprep.subr.mxu0 0.0
    %627 = vmatpush1.msra.mxu0 0.0
    %628 = vmatprep.subr.mxu0 %v596
    %629 = vmatpush1.msra.mxu0 %v593
    %630 = vmatprep.subr.mxu0 0.0
    %631 = vmatpush2.msra.mxu0 0.0
    %632 = vmatprep.subr.mxu0 0.0
    %633 = vmatpush2.msra.mxu0 0.0
    %634 = vmatprep.subr.mxu0 0.0
    %635 = vmatpush2.msra.mxu0 0.0
    %636 = vmatprep.subr.mxu0 0.0
    %637 = vmatpush2.msra.mxu0 0.0
    %638 = vmatprep.subr.mxu0 0.0
    %639 = vmatpush2.msra.mxu0 0.0
    %640 = vmatprep.subr.mxu0 0.0
    %641 = vmatpush2.msra.mxu0 0.0
    %642 = vmatprep.subr.mxu0 0.0
    %643 = vmatpush2.msra.mxu0 0.0
    %644 = vmatprep.subr.mxu0 0.0
    %645 = vmatpush2.msra.mxu0 0.0
    %646 = vmatprep.subr.mxu0 0.0
    %647 = vmatpush2.msra.mxu0 0.0
    %648 = vmatprep.subr.mxu0 0.0
    %649 = vmatpush2.msra.mxu0 0.0
    %650 = vmatprep.subr.mxu0 0.0
    %651 = vmatpush2.msra.mxu0 0.0
    %652 = vmatprep.subr.mxu0 0.0
    %653 = vmatpush2.msra.mxu0 0.0
    %654 = vmatprep.subr.mxu0 0.0
    %655 = vmatpush2.msra.mxu0 0.0
    %656 = vmatprep.subr.mxu0 0.0
    %657 = vmatpush2.msra.mxu0 0.0
    %658 = vmatprep.subr.mxu0 0.0
    %659 = vmatpush2.msra.mxu0 0.0
    %660 = vmatprep.subr.mxu0 0.0
    %661 = vmatpush2.msra.mxu0 0.0
    %662 = vmatprep.mubr.f32.mxu0 0.0
    %663 = vmatmul.mubr.f32.gmra.mxu0 %v590
    %v664 = vpop.f32.mrf.mxu0
    %v665 = vadd.f32 0.0, %v664
    %v666 = vpop.f32.mrf.mxu0
    %v667 = vadd.f32 0.0, %v666
    %668 = vdwg.mxu0
    %v669 = vadd.f32 %v579, %v665
    %v670 = vadd.f32 %v580, %v667
    %671 = vrot.lane.b32.xlu0 %v195, 127
    %v672 = vpop.permute.xlu0 %671
    %673 = vrot.lane.b32.xlu0 %v196, 127
    %v674 = vpop.permute.xlu0 %673
    %v675 = vsel %vm401, %v672, %v674
    %v676 = vsel %vm401, %v674, %v672
    %v677 = vsel %vm413, %v675, 0.0
    %v678 = vsel %vm414, %v676, 0.0
    %v680 = vsel %vm93, %v46, 0
    %v683 = vsel %vm97, %v677, 0
    %v686 = vsel %vm97, %v678, 0
    %688 = vmatprep.subr.mxu0 0.0
    %689 = vmatpush1.msra.mxu0 0.0
    %690 = vmatprep.subr.mxu0 0.0
    %691 = vmatpush1.msra.mxu0 0.0
    %692 = vmatprep.subr.mxu0 0.0
    %693 = vmatpush1.msra.mxu0 0.0
    %694 = vmatprep.subr.mxu0 0.0
    %695 = vmatpush1.msra.mxu0 0.0
    %696 = vmatprep.subr.mxu0 0.0
    %697 = vmatpush1.msra.mxu0 0.0
    %698 = vmatprep.subr.mxu0 0.0
    %699 = vmatpush1.msra.mxu0 0.0
    %700 = vmatprep.subr.mxu0 0.0
    %701 = vmatpush1.msra.mxu0 0.0
    %702 = vmatprep.subr.mxu0 0.0
    %703 = vmatpush1.msra.mxu0 0.0
    %704 = vmatprep.subr.mxu0 0.0
    %705 = vmatpush1.msra.mxu0 0.0
    %706 = vmatprep.subr.mxu0 0.0
    %707 = vmatpush1.msra.mxu0 0.0
    %708 = vmatprep.subr.mxu0 0.0
    %709 = vmatpush1.msra.mxu0 0.0
    %710 = vmatprep.subr.mxu0 0.0
    %711 = vmatpush1.msra.mxu0 0.0
    %712 = vmatprep.subr.mxu0 0.0
    %713 = vmatpush1.msra.mxu0 0.0
    %714 = vmatprep.subr.mxu0 0.0
    %715 = vmatpush1.msra.mxu0 0.0
    %716 = vmatprep.subr.mxu0 0.0
    %717 = vmatpush1.msra.mxu0 0.0
    %718 = vmatprep.subr.mxu0 %v686
    %719 = vmatpush1.msra.mxu0 %v683
    %720 = vmatprep.subr.mxu0 0.0
    %721 = vmatpush2.msra.mxu0 0.0
    %722 = vmatprep.subr.mxu0 0.0
    %723 = vmatpush2.msra.mxu0 0.0
    %724 = vmatprep.subr.mxu0 0.0
    %725 = vmatpush2.msra.mxu0 0.0
    %726 = vmatprep.subr.mxu0 0.0
    %727 = vmatpush2.msra.mxu0 0.0
    %728 = vmatprep.subr.mxu0 0.0
    %729 = vmatpush2.msra.mxu0 0.0
    %730 = vmatprep.subr.mxu0 0.0
    %731 = vmatpush2.msra.mxu0 0.0
    %732 = vmatprep.subr.mxu0 0.0
    %733 = vmatpush2.msra.mxu0 0.0
    %734 = vmatprep.subr.mxu0 0.0
    %735 = vmatpush2.msra.mxu0 0.0
    %736 = vmatprep.subr.mxu0 0.0
    %737 = vmatpush2.msra.mxu0 0.0
    %738 = vmatprep.subr.mxu0 0.0
    %739 = vmatpush2.msra.mxu0 0.0
    %740 = vmatprep.subr.mxu0 0.0
    %741 = vmatpush2.msra.mxu0 0.0
    %742 = vmatprep.subr.mxu0 0.0
    %743 = vmatpush2.msra.mxu0 0.0
    %744 = vmatprep.subr.mxu0 0.0
    %745 = vmatpush2.msra.mxu0 0.0
    %746 = vmatprep.subr.mxu0 0.0
    %747 = vmatpush2.msra.mxu0 0.0
    %748 = vmatprep.subr.mxu0 0.0
    %749 = vmatpush2.msra.mxu0 0.0
    %750 = vmatprep.subr.mxu0 0.0
    %751 = vmatpush2.msra.mxu0 0.0
    %752 = vmatprep.mubr.f32.mxu0 0.0
    %753 = vmatmul.mubr.f32.gmra.mxu0 %v680
    %v754 = vpop.f32.mrf.mxu0
    %v755 = vadd.f32 0.0, %v754
    %v756 = vpop.f32.mrf.mxu0
    %v757 = vadd.f32 0.0, %v756
    %758 = vdwg.mxu0
    %v759 = vadd.f32 %v669, %v755
    %v760 = vadd.f32 %v670, %v757
    %v762 = vsel %vm93, %v56, 0
    %v765 = vsel %vm97, %v215, 0
    %v768 = vsel %vm97, %v216, 0
    %770 = vmatprep.subr.mxu0 0.0
    %771 = vmatpush1.msra.mxu0 0.0
    %772 = vmatprep.subr.mxu0 0.0
    %773 = vmatpush1.msra.mxu0 0.0
    %774 = vmatprep.subr.mxu0 0.0
    %775 = vmatpush1.msra.mxu0 0.0
    %776 = vmatprep.subr.mxu0 0.0
    %777 = vmatpush1.msra.mxu0 0.0
    %778 = vmatprep.subr.mxu0 0.0
    %779 = vmatpush1.msra.mxu0 0.0
    %780 = vmatprep.subr.mxu0 0.0
    %781 = vmatpush1.msra.mxu0 0.0
    %782 = vmatprep.subr.mxu0 0.0
    %783 = vmatpush1.msra.mxu0 0.0
    %784 = vmatprep.subr.mxu0 0.0
    %785 = vmatpush1.msra.mxu0 0.0
    %786 = vmatprep.subr.mxu0 0.0
    %787 = vmatpush1.msra.mxu0 0.0
    %788 = vmatprep.subr.mxu0 0.0
    %789 = vmatpush1.msra.mxu0 0.0
    %790 = vmatprep.subr.mxu0 0.0
    %791 = vmatpush1.msra.mxu0 0.0
    %792 = vmatprep.subr.mxu0 0.0
    %793 = vmatpush1.msra.mxu0 0.0
    %794 = vmatprep.subr.mxu0 0.0
    %795 = vmatpush1.msra.mxu0 0.0
    %796 = vmatprep.subr.mxu0 0.0
    %797 = vmatpush1.msra.mxu0 0.0
    %798 = vmatprep.subr.mxu0 0.0
    %799 = vmatpush1.msra.mxu0 0.0
    %800 = vmatprep.subr.mxu0 %v768
    %801 = vmatpush1.msra.mxu0 %v765
    %802 = vmatprep.subr.mxu0 0.0
    %803 = vmatpush2.msra.mxu0 0.0
    %804 = vmatprep.subr.mxu0 0.0
    %805 = vmatpush2.msra.mxu0 0.0
    %806 = vmatprep.subr.mxu0 0.0
    %807 = vmatpush2.msra.mxu0 0.0
    %808 = vmatprep.subr.mxu0 0.0
    %809 = vmatpush2.msra.mxu0 0.0
    %810 = vmatprep.subr.mxu0 0.0
    %811 = vmatpush2.msra.mxu0 0.0
    %812 = vmatprep.subr.mxu0 0.0
    %813 = vmatpush2.msra.mxu0 0.0
    %814 = vmatprep.subr.mxu0 0.0
    %815 = vmatpush2.msra.mxu0 0.0
    %816 = vmatprep.subr.mxu0 0.0
    %817 = vmatpush2.msra.mxu0 0.0
    %818 = vmatprep.subr.mxu0 0.0
    %819 = vmatpush2.msra.mxu0 0.0
    %820 = vmatprep.subr.mxu0 0.0
    %821 = vmatpush2.msra.mxu0 0.0
    %822 = vmatprep.subr.mxu0 0.0
    %823 = vmatpush2.msra.mxu0 0.0
    %824 = vmatprep.subr.mxu0 0.0
    %825 = vmatpush2.msra.mxu0 0.0
    %826 = vmatprep.subr.mxu0 0.0
    %827 = vmatpush2.msra.mxu0 0.0
    %828 = vmatprep.subr.mxu0 0.0
    %829 = vmatpush2.msra.mxu0 0.0
    %830 = vmatprep.subr.mxu0 0.0
    %831 = vmatpush2.msra.mxu0 0.0
    %832 = vmatprep.subr.mxu0 0.0
    %833 = vmatpush2.msra.mxu0 0.0
    %834 = vmatprep.mubr.f32.mxu0 0.0
    %835 = vmatmul.mubr.f32.gmra.mxu0 %v762
    %v836 = vpop.f32.mrf.mxu0
    %v837 = vadd.f32 0.0, %v836
    %v838 = vpop.f32.mrf.mxu0
    %v839 = vadd.f32 0.0, %v838
    %840 = vdwg.mxu0
    %v841 = vadd.f32 %v759, %v837
    %v842 = vadd.f32 %v760, %v839
    %843 = vrot.lane.b32.xlu0 %v215, 1
    %v844 = vpop.permute.xlu0 %843
    %845 = vrot.lane.b32.xlu0 %v216, 1
    %v846 = vpop.permute.xlu0 %845
    %v847 = vsel %vm221, %v844, %v846
    %v848 = vsel %vm221, %v846, %v844
    %v849 = vsel %vm233, %v848, 0.0
    %v850 = vsel %vm234, %v847, 0.0
    %v852 = vsel %vm93, %v54, 0
    %v855 = vsel %vm97, %v849, 0
    %v858 = vsel %vm97, %v850, 0
    %860 = vmatprep.subr.mxu0 0.0
    %861 = vmatpush1.msra.mxu0 0.0
    %862 = vmatprep.subr.mxu0 0.0
    %863 = vmatpush1.msra.mxu0 0.0
    %864 = vmatprep.subr.mxu0 0.0
    %865 = vmatpush1.msra.mxu0 0.0
    %866 = vmatprep.subr.mxu0 0.0
    %867 = vmatpush1.msra.mxu0 0.0
    %868 = vmatprep.subr.mxu0 0.0
    %869 = vmatpush1.msra.mxu0 0.0
    %870 = vmatprep.subr.mxu0 0.0
    %871 = vmatpush1.msra.mxu0 0.0
    %872 = vmatprep.subr.mxu0 0.0
    %873 = vmatpush1.msra.mxu0 0.0
    %874 = vmatprep.subr.mxu0 0.0
    %875 = vmatpush1.msra.mxu0 0.0
    %876 = vmatprep.subr.mxu0 0.0
    %877 = vmatpush1.msra.mxu0 0.0
    %878 = vmatprep.subr.mxu0 0.0
    %879 = vmatpush1.msra.mxu0 0.0
    %880 = vmatprep.subr.mxu0 0.0
    %881 = vmatpush1.msra.mxu0 0.0
    %882 = vmatprep.subr.mxu0 0.0
    %883 = vmatpush1.msra.mxu0 0.0
    %884 = vmatprep.subr.mxu0 0.0
    %885 = vmatpush1.msra.mxu0 0.0
    %886 = vmatprep.subr.mxu0 0.0
    %887 = vmatpush1.msra.mxu0 0.0
    %888 = vmatprep.subr.mxu0 0.0
    %889 = vmatpush1.msra.mxu0 0.0
    %890 = vmatprep.subr.mxu0 %v858
    %891 = vmatpush1.msra.mxu0 %v855
    %892 = vmatprep.subr.mxu0 0.0
    %893 = vmatpush2.msra.mxu0 0.0
    %894 = vmatprep.subr.mxu0 0.0
    %895 = vmatpush2.msra.mxu0 0.0
    %896 = vmatprep.subr.mxu0 0.0
    %897 = vmatpush2.msra.mxu0 0.0
    %898 = vmatprep.subr.mxu0 0.0
    %899 = vmatpush2.msra.mxu0 0.0
    %900 = vmatprep.subr.mxu0 0.0
    %901 = vmatpush2.msra.mxu0 0.0
    %902 = vmatprep.subr.mxu0 0.0
    %903 = vmatpush2.msra.mxu0 0.0
    %904 = vmatprep.subr.mxu0 0.0
    %905 = vmatpush2.msra.mxu0 0.0
    %906 = vmatprep.subr.mxu0 0.0
    %907 = vmatpush2.msra.mxu0 0.0
    %908 = vmatprep.subr.mxu0 0.0
    %909 = vmatpush2.msra.mxu0 0.0
    %910 = vmatprep.subr.mxu0 0.0
    %911 = vmatpush2.msra.mxu0 0.0
    %912 = vmatprep.subr.mxu0 0.0
    %913 = vmatpush2.msra.mxu0 0.0
    %914 = vmatprep.subr.mxu0 0.0
    %915 = vmatpush2.msra.mxu0 0.0
    %916 = vmatprep.subr.mxu0 0.0
    %917 = vmatpush2.msra.mxu0 0.0
    %918 = vmatprep.subr.mxu0 0.0
    %919 = vmatpush2.msra.mxu0 0.0
    %920 = vmatprep.subr.mxu0 0.0
    %921 = vmatpush2.msra.mxu0 0.0
    %922 = vmatprep.subr.mxu0 0.0
    %923 = vmatpush2.msra.mxu0 0.0
    %924 = vmatprep.mubr.f32.mxu0 0.0
    %925 = vmatmul.mubr.f32.gmra.mxu0 %v852
    %v926 = vpop.f32.mrf.mxu0
    %v927 = vadd.f32 0.0, %v926
    %v928 = vpop.f32.mrf.mxu0
    %v929 = vadd.f32 0.0, %v928
    %930 = vdwg.mxu0
    %v931 = vadd.f32 %v841, %v927
    %v932 = vadd.f32 %v842, %v929
    %933 = vrot.lane.b32.xlu0 %v215, 127
    %v934 = vpop.permute.xlu0 %933
    %935 = vrot.lane.b32.xlu0 %v216, 127
    %v936 = vpop.permute.xlu0 %935
    %v937 = vsel %vm401, %v934, %v936
    %v938 = vsel %vm401, %v936, %v934
    %v939 = vsel %vm413, %v937, 0.0
    %v940 = vsel %vm414, %v938, 0.0
    %v942 = vsel %vm93, %v58, 0
    %v945 = vsel %vm97, %v939, 0
    %v948 = vsel %vm97, %v940, 0
    %950 = vmatprep.subr.mxu0 0.0
    %951 = vmatpush1.msra.mxu0 0.0
    %952 = vmatprep.subr.mxu0 0.0
    %953 = vmatpush1.msra.mxu0 0.0
    %954 = vmatprep.subr.mxu0 0.0
    %955 = vmatpush1.msra.mxu0 0.0
    %956 = vmatprep.subr.mxu0 0.0
    %957 = vmatpush1.msra.mxu0 0.0
    %958 = vmatprep.subr.mxu0 0.0
    %959 = vmatpush1.msra.mxu0 0.0
    %960 = vmatprep.subr.mxu0 0.0
    %961 = vmatpush1.msra.mxu0 0.0
    %962 = vmatprep.subr.mxu0 0.0
    %963 = vmatpush1.msra.mxu0 0.0
    %964 = vmatprep.subr.mxu0 0.0
    %965 = vmatpush1.msra.mxu0 0.0
    %966 = vmatprep.subr.mxu0 0.0
    %967 = vmatpush1.msra.mxu0 0.0
    %968 = vmatprep.subr.mxu0 0.0
    %969 = vmatpush1.msra.mxu0 0.0
    %970 = vmatprep.subr.mxu0 0.0
    %971 = vmatpush1.msra.mxu0 0.0
    %972 = vmatprep.subr.mxu0 0.0
    %973 = vmatpush1.msra.mxu0 0.0
    %974 = vmatprep.subr.mxu0 0.0
    %975 = vmatpush1.msra.mxu0 0.0
    %976 = vmatprep.subr.mxu0 0.0
    %977 = vmatpush1.msra.mxu0 0.0
    %978 = vmatprep.subr.mxu0 0.0
    %979 = vmatpush1.msra.mxu0 0.0
    %980 = vmatprep.subr.mxu0 %v948
    %981 = vmatpush1.msra.mxu0 %v945
    %982 = vmatprep.subr.mxu0 0.0
    %983 = vmatpush2.msra.mxu0 0.0
    %984 = vmatprep.subr.mxu0 0.0
    %985 = vmatpush2.msra.mxu0 0.0
    %986 = vmatprep.subr.mxu0 0.0
    %987 = vmatpush2.msra.mxu0 0.0
    %988 = vmatprep.subr.mxu0 0.0
    %989 = vmatpush2.msra.mxu0 0.0
    %990 = vmatprep.subr.mxu0 0.0
    %991 = vmatpush2.msra.mxu0 0.0
    %992 = vmatprep.subr.mxu0 0.0
    %993 = vmatpush2.msra.mxu0 0.0
    %994 = vmatprep.subr.mxu0 0.0
    %995 = vmatpush2.msra.mxu0 0.0
    %996 = vmatprep.subr.mxu0 0.0
    %997 = vmatpush2.msra.mxu0 0.0
    %998 = vmatprep.subr.mxu0 0.0
    %999 = vmatpush2.msra.mxu0 0.0
    %1000 = vmatprep.subr.mxu0 0.0
    %1001 = vmatpush2.msra.mxu0 0.0
    %1002 = vmatprep.subr.mxu0 0.0
    %1003 = vmatpush2.msra.mxu0 0.0
    %1004 = vmatprep.subr.mxu0 0.0
    %1005 = vmatpush2.msra.mxu0 0.0
    %1006 = vmatprep.subr.mxu0 0.0
    %1007 = vmatpush2.msra.mxu0 0.0
    %1008 = vmatprep.subr.mxu0 0.0
    %1009 = vmatpush2.msra.mxu0 0.0
    %1010 = vmatprep.subr.mxu0 0.0
    %1011 = vmatpush2.msra.mxu0 0.0
    %1012 = vmatprep.subr.mxu0 0.0
    %1013 = vmatpush2.msra.mxu0 0.0
    %1014 = vmatprep.mubr.f32.mxu0 0.0
    %1015 = vmatmul.mubr.f32.gmra.mxu0 %v942
    %v1016 = vpop.f32.mrf.mxu0
    %v1017 = vadd.f32 0.0, %v1016
    %v1018 = vpop.f32.mrf.mxu0
    %v1019 = vadd.f32 0.0, %v1018
    %1020 = vdwg.mxu0
    %v1021 = vadd.f32 %v931, %v1017
    %v1022 = vadd.f32 %v932, %v1019
    %1023 = vset.pattern.permute.xlu0 3
    %1024 = vperm.xlu0 %1023, %v27
    %v1025 = vpop.permute.xlu0 %1024
    %v1027 = vadd.f32 %v1021, %v1025
    %v1028 = vadd.f32 %v1022, %v1025
    %v1029 = vmax.f32 %v1027, 0.0
    %v1030 = vmax.f32 %v1028, 0.0
    %1032 = vset.pattern.permute.xlu0 4
    %1033 = vperm.xlu0 %1032, %v28
    %v1034 = vpop.permute.xlu0 %1033
    %v1037 = vsel %vm93, %v41, 0
    %v1040 = vsel %vm97, %v1029, 0
    %v1043 = vsel %vm97, %v1030, 0
    %1045 = vmatprep.subr.mxu0 0.0
    %1046 = vmatpush1.msra.mxu0 0.0
    %1047 = vmatprep.subr.mxu0 0.0
    %1048 = vmatpush1.msra.mxu0 0.0
    %1049 = vmatprep.subr.mxu0 0.0
    %1050 = vmatpush1.msra.mxu0 0.0
    %1051 = vmatprep.subr.mxu0 0.0
    %1052 = vmatpush1.msra.mxu0 0.0
    %1053 = vmatprep.subr.mxu0 0.0
    %1054 = vmatpush1.msra.mxu0 0.0
    %1055 = vmatprep.subr.mxu0 0.0
    %1056 = vmatpush1.msra.mxu0 0.0
    %1057 = vmatprep.subr.mxu0 0.0
    %1058 = vmatpush1.msra.mxu0 0.0
    %1059 = vmatprep.subr.mxu0 0.0
    %1060 = vmatpush1.msra.mxu0 0.0
    %1061 = vmatprep.subr.mxu0 0.0
    %1062 = vmatpush1.msra.mxu0 0.0
    %1063 = vmatprep.subr.mxu0 0.0
    %1064 = vmatpush1.msra.mxu0 0.0
    %1065 = vmatprep.subr.mxu0 0.0
    %1066 = vmatpush1.msra.mxu0 0.0
    %1067 = vmatprep.subr.mxu0 0.0
    %1068 = vmatpush1.msra.mxu0 0.0
    %1069 = vmatprep.subr.mxu0 0.0
    %1070 = vmatpush1.msra.mxu0 0.0
    %1071 = vmatprep.subr.mxu0 0.0
    %1072 = vmatpush1.msra.mxu0 0.0
    %1073 = vmatprep.subr.mxu0 0.0
    %1074 = vmatpush1.msra.mxu0 0.0
    %1075 = vmatprep.subr.mxu0 %v1043
    %1076 = vmatpush1.msra.mxu0 %v1040
    %1077 = vmatprep.subr.mxu0 0.0
    %1078 = vmatpush2.msra.mxu0 0.0
    %1079 = vmatprep.subr.mxu0 0.0
    %1080 = vmatpush2.msra.mxu0 0.0
    %1081 = vmatprep.subr.mxu0 0.0
    %1082 = vmatpush2.msra.mxu0 0.0
    %1083 = vmatprep.subr.mxu0 0.0
    %1084 = vmatpush2.msra.mxu0 0.0
    %1085 = vmatprep.subr.mxu0 0.0
    %1086 = vmatpush2.msra.mxu0 0.0
    %1087 = vmatprep.subr.mxu0 0.0
    %1088 = vmatpush2.msra.mxu0 0.0
    %1089 = vmatprep.subr.mxu0 0.0
    %1090 = vmatpush2.msra.mxu0 0.0
    %1091 = vmatprep.subr.mxu0 0.0
    %1092 = vmatpush2.msra.mxu0 0.0
    %1093 = vmatprep.subr.mxu0 0.0
    %1094 = vmatpush2.msra.mxu0 0.0
    %1095 = vmatprep.subr.mxu0 0.0
    %1096 = vmatpush2.msra.mxu0 0.0
    %1097 = vmatprep.subr.mxu0 0.0
    %1098 = vmatpush2.msra.mxu0 0.0
    %1099 = vmatprep.subr.mxu0 0.0
    %1100 = vmatpush2.msra.mxu0 0.0
    %1101 = vmatprep.subr.mxu0 0.0
    %1102 = vmatpush2.msra.mxu0 0.0
    %1103 = vmatprep.subr.mxu0 0.0
    %1104 = vmatpush2.msra.mxu0 0.0
    %1105 = vmatprep.subr.mxu0 0.0
    %1106 = vmatpush2.msra.mxu0 0.0
    %1107 = vmatprep.subr.mxu0 0.0
    %1108 = vmatpush2.msra.mxu0 0.0
    %1109 = vmatprep.mubr.f32.mxu0 0.0
    %1110 = vmatmul.mubr.f32.gmra.mxu0 %v1037
    %v1111 = vpop.f32.mrf.mxu0
    %v1112 = vadd.f32 %v1034, %v1111
    %v1113 = vpop.f32.mrf.mxu0
    %v1114 = vadd.f32 %v1034, %v1113
    %1115 = vdwg.mxu0
    %1116 = vset.pattern.permute.xlu0 5
    %1117 = vperm.xlu0 %1116, %v28
    %v1118 = vpop.permute.xlu0 %1117
    %v1121 = vcombine.high %v60, %v60
    %v1123 = vsel %vm93, %v59, 0
    %v1125 = vsel %vm97, %v60, 0
    %v1127 = vsel %vm97, %v1121, 0
    %1129 = vmatprep.subr.mxu0 0.0
    %1130 = vmatpush1.msra.mxu0 0.0
    %1131 = vmatprep.subr.mxu0 0.0
    %1132 = vmatpush1.msra.mxu0 0.0
    %1133 = vmatprep.subr.mxu0 0.0
    %1134 = vmatpush1.msra.mxu0 0.0
    %1135 = vmatprep.subr.mxu0 0.0
    %1136 = vmatpush1.msra.mxu0 0.0
    %1137 = vmatprep.subr.mxu0 0.0
    %1138 = vmatpush1.msra.mxu0 0.0
    %1139 = vmatprep.subr.mxu0 0.0
    %1140 = vmatpush1.msra.mxu0 0.0
    %1141 = vmatprep.subr.mxu0 0.0
    %1142 = vmatpush1.msra.mxu0 0.0
    %1143 = vmatprep.subr.mxu0 0.0
    %1144 = vmatpush1.msra.mxu0 0.0
    %1145 = vmatprep.subr.mxu0 0.0
    %1146 = vmatpush1.msra.mxu0 0.0
    %1147 = vmatprep.subr.mxu0 0.0
    %1148 = vmatpush1.msra.mxu0 0.0
    %1149 = vmatprep.subr.mxu0 0.0
    %1150 = vmatpush1.msra.mxu0 0.0
    %1151 = vmatprep.subr.mxu0 0.0
    %1152 = vmatpush1.msra.mxu0 0.0
    %1153 = vmatprep.subr.mxu0 0.0
    %1154 = vmatpush1.msra.mxu0 0.0
    %1155 = vmatprep.subr.mxu0 0.0
    %1156 = vmatpush1.msra.mxu0 0.0
    %1157 = vmatprep.subr.mxu0 0.0
    %1158 = vmatpush1.msra.mxu0 0.0
    %1159 = vmatprep.subr.mxu0 %v1127
    %1160 = vmatpush1.msra.mxu0 %v1125
    %1161 = vmatprep.subr.mxu0 0.0
    %1162 = vmatpush2.msra.mxu0 0.0
    %1163 = vmatprep.subr.mxu0 0.0
    %1164 = vmatpush2.msra.mxu0 0.0
    %1165 = vmatprep.subr.mxu0 0.0
    %1166 = vmatpush2.msra.mxu0 0.0
    %1167 = vmatprep.subr.mxu0 0.0
    %1168 = vmatpush2.msra.mxu0 0.0
    %1169 = vmatprep.subr.mxu0 0.0
    %1170 = vmatpush2.msra.mxu0 0.0
    %1171 = vmatprep.subr.mxu0 0.0
    %1172 = vmatpush2.msra.mxu0 0.0
    %1173 = vmatprep.subr.mxu0 0.0
    %1174 = vmatpush2.msra.mxu0 0.0
    %1175 = vmatprep.subr.mxu0 0.0
    %1176 = vmatpush2.msra.mxu0 0.0
    %1177 = vmatprep.subr.mxu0 0.0
    %1178 = vmatpush2.msra.mxu0 0.0
    %1179 = vmatprep.subr.mxu0 0.0
    %1180 = vmatpush2.msra.mxu0 0.0
    %1181 = vmatprep.subr.mxu0 0.0
    %1182 = vmatpush2.msra.mxu0 0.0
    %1183 = vmatprep.subr.mxu0 0.0
    %1184 = vmatpush2.msra.mxu0 0.0
    %1185 = vmatprep.subr.mxu0 0.0
    %1186 = vmatpush2.msra.mxu0 0.0
    %1187 = vmatprep.subr.mxu0 0.0
    %1188 = vmatpush2.msra.mxu0 0.0
    %1189 = vmatprep.subr.mxu0 0.0
    %1190 = vmatpush2.msra.mxu0 0.0
    %1191 = vmatprep.subr.mxu0 0.0
    %1192 = vmatpush2.msra.mxu0 0.0
    %1193 = vmatprep.mubr.f32.mxu0 0.0
    %1194 = vmatmul.mubr.f32.gmra.mxu0 %v1123
    %v1195 = vpop.f32.mrf.mxu0
    %v1196 = vadd.f32 %v1118, %v1195
    %v1197 = vpop.f32.mrf.mxu0
    %v1198 = vadd.f32 %v1118, %v1197
    %1199 = vdwg.mxu0
    %v1200 = vadd.f32 %v1196, %v1112
    %v1201 = vadd.f32 %v1198, %v1114
    %1202 = vst [vmem:[#allocation2] sm:$0xff] %v1200
    %1203 = vst [vmem:[#allocation2 + $0x8] sm:$0xff] %v1201
    %s1204 = scalar_lea.vmem %s0, 8
    %v1205 = vld [vmem:[%s1204] sm:$0xff]
    %v1206 = vmul.f32 %v1205, %v71
    %v1207 = vadd.f32 %v1206, %v83
    %v1208 = vmax.f32 %v1207, 0.0
    %v1210 = vcombine.high %v1208, %v1208
    %v1211 = vsel %vm97, %v1208, 0
    %v1213 = vsel %vm97, %v1210, 0
    %1215 = vmatprep.subr.mxu0 0.0
    %1216 = vmatpush1.msra.mxu0 0.0
    %1217 = vmatprep.subr.mxu0 0.0
    %1218 = vmatpush1.msra.mxu0 0.0
    %1219 = vmatprep.subr.mxu0 0.0
    %1220 = vmatpush1.msra.mxu0 0.0
    %1221 = vmatprep.subr.mxu0 0.0
    %1222 = vmatpush1.msra.mxu0 0.0
    %1223 = vmatprep.subr.mxu0 0.0
    %1224 = vmatpush1.msra.mxu0 0.0
    %1225 = vmatprep.subr.mxu0 0.0
    %1226 = vmatpush1.msra.mxu0 0.0
    %1227 = vmatprep.subr.mxu0 0.0
    %1228 = vmatpush1.msra.mxu0 0.0
    %1229 = vmatprep.subr.mxu0 0.0
    %1230 = vmatpush1.msra.mxu0 0.0
    %1231 = vmatprep.subr.mxu0 0.0
    %1232 = vmatpush1.msra.mxu0 0.0
    %1233 = vmatprep.subr.mxu0 0.0
    %1234 = vmatpush1.msra.mxu0 0.0
    %1235 = vmatprep.subr.mxu0 0.0
    %1236 = vmatpush1.msra.mxu0 0.0
    %1237 = vmatprep.subr.mxu0 0.0
    %1238 = vmatpush1.msra.mxu0 0.0
    %1239 = vmatprep.subr.mxu0 0.0
    %1240 = vmatpush1.msra.mxu0 0.0
    %1241 = vmatprep.subr.mxu0 0.0
    %1242 = vmatpush1.msra.mxu0 0.0
    %1243 = vmatprep.subr.mxu0 0.0
    %1244 = vmatpush1.msra.mxu0 0.0
    %1245 = vmatprep.subr.mxu0 %v1213
    %1246 = vmatpush1.msra.mxu0 %v1211
    %1247 = vmatprep.subr.mxu0 0.0
    %1248 = vmatpush2.msra.mxu0 0.0
    %1249 = vmatprep.subr.mxu0 0.0
    %1250 = vmatpush2.msra.mxu0 0.0
    %1251 = vmatprep.subr.mxu0 0.0
    %1252 = vmatpush2.msra.mxu0 0.0
    %1253 = vmatprep.subr.mxu0 0.0
    %1254 = vmatpush2.msra.mxu0 0.0
    %1255 = vmatprep.subr.mxu0 0.0
    %1256 = vmatpush2.msra.mxu0 0.0
    %1257 = vmatprep.subr.mxu0 0.0
    %1258 = vmatpush2.msra.mxu0 0.0
    %1259 = vmatprep.subr.mxu0 0.0
    %1260 = vmatpush2.msra.mxu0 0.0
    %1261 = vmatprep.subr.mxu0 0.0
    %1262 = vmatpush2.msra.mxu0 0.0
    %1263 = vmatprep.subr.mxu0 0.0
    %1264 = vmatpush2.msra.mxu0 0.0
    %1265 = vmatprep.subr.mxu0 0.0
    %1266 = vmatpush2.msra.mxu0 0.0
    %1267 = vmatprep.subr.mxu0 0.0
    %1268 = vmatpush2.msra.mxu0 0.0
    %1269 = vmatprep.subr.mxu0 0.0
    %1270 = vmatpush2.msra.mxu0 0.0
    %1271 = vmatprep.subr.mxu0 0.0
    %1272 = vmatpush2.msra.mxu0 0.0
    %1273 = vmatprep.subr.mxu0 0.0
    %1274 = vmatpush2.msra.mxu0 0.0
    %1275 = vmatprep.subr.mxu0 0.0
    %1276 = vmatpush2.msra.mxu0 0.0
    %1277 = vmatprep.subr.mxu0 0.0
    %1278 = vmatpush2.msra.mxu0 0.0
    %1279 = vmatprep.mubr.f32.mxu0 0.0
    %1280 = vmatmul.mubr.f32.gmra.mxu0 %v95
    %v1281 = vpop.f32.mrf.mxu0
    %v1282 = vadd.f32 %v89, %v1281
    %v1283 = vpop.f32.mrf.mxu0
    %v1284 = vadd.f32 %v89, %v1283
    %1285 = vdwg.mxu0
    %v1286 = vmax.f32 %v1282, 0.0
    %v1287 = vmax.f32 %v1284, 0.0
    %1288 = vrot.lane.b32.xlu0 %v1286, 16
    %v1289 = vpop.permute.xlu0 %1288
    %1290 = vrot.lane.b32.xlu0 %v1287, 16
    %v1291 = vpop.permute.xlu0 %1290
    %v1292 = vsel %vm181, %v1289, %v1291
    %v1293 = vsel %vm181, %v1291, %v1289
    %v1294 = vsel %vm193, %v1293, 0.0
    %v1295 = vsel %vm194, %v1292, 0.0
    %1296 = vrot.lane.b32.xlu0 %v1286, 112
    %v1297 = vpop.permute.xlu0 %1296
    %1298 = vrot.lane.b32.xlu0 %v1287, 112
    %v1299 = vpop.permute.xlu0 %1298
    %v1300 = vsel %vm201, %v1297, %v1299
    %v1301 = vsel %vm201, %v1299, %v1297
    %v1302 = vsel %vm213, %v1300, 0.0
    %v1303 = vsel %vm214, %v1301, 0.0
    %1304 = vrot.lane.b32.xlu0 %v1286, 1
    %v1305 = vpop.permute.xlu0 %1304
    %1306 = vrot.lane.b32.xlu0 %v1287, 1
    %v1307 = vpop.permute.xlu0 %1306
    %v1308 = vsel %vm221, %v1305, %v1307
    %v1309 = vsel %vm221, %v1307, %v1305
    %v1310 = vsel %vm233, %v1309, 0.0
    %v1311 = vsel %vm234, %v1308, 0.0
    %v1313 = vsel %vm97, %v1310, 0
    %v1316 = vsel %vm97, %v1311, 0
    %1318 = vmatprep.subr.mxu0 0.0
    %1319 = vmatpush1.msra.mxu0 0.0
    %1320 = vmatprep.subr.mxu0 0.0
    %1321 = vmatpush1.msra.mxu0 0.0
    %1322 = vmatprep.subr.mxu0 0.0
    %1323 = vmatpush1.msra.mxu0 0.0
    %1324 = vmatprep.subr.mxu0 0.0
    %1325 = vmatpush1.msra.mxu0 0.0
    %1326 = vmatprep.subr.mxu0 0.0
    %1327 = vmatpush1.msra.mxu0 0.0
    %1328 = vmatprep.subr.mxu0 0.0
    %1329 = vmatpush1.msra.mxu0 0.0
    %1330 = vmatprep.subr.mxu0 0.0
    %1331 = vmatpush1.msra.mxu0 0.0
    %1332 = vmatprep.subr.mxu0 0.0
    %1333 = vmatpush1.msra.mxu0 0.0
    %1334 = vmatprep.subr.mxu0 0.0
    %1335 = vmatpush1.msra.mxu0 0.0
    %1336 = vmatprep.subr.mxu0 0.0
    %1337 = vmatpush1.msra.mxu0 0.0
    %1338 = vmatprep.subr.mxu0 0.0
    %1339 = vmatpush1.msra.mxu0 0.0
    %1340 = vmatprep.subr.mxu0 0.0
    %1341 = vmatpush1.msra.mxu0 0.0
    %1342 = vmatprep.subr.mxu0 0.0
    %1343 = vmatpush1.msra.mxu0 0.0
    %1344 = vmatprep.subr.mxu0 0.0
    %1345 = vmatpush1.msra.mxu0 0.0
    %1346 = vmatprep.subr.mxu0 0.0
    %1347 = vmatpush1.msra.mxu0 0.0
    %1348 = vmatprep.subr.mxu0 %v1316
    %1349 = vmatpush1.msra.mxu0 %v1313
    %1350 = vmatprep.subr.mxu0 0.0
    %1351 = vmatpush2.msra.mxu0 0.0
    %1352 = vmatprep.subr.mxu0 0.0
    %1353 = vmatpush2.msra.mxu0 0.0
    %1354 = vmatprep.subr.mxu0 0.0
    %1355 = vmatpush2.msra.mxu0 0.0
    %1356 = vmatprep.subr.mxu0 0.0
    %1357 = vmatpush2.msra.mxu0 0.0
    %1358 = vmatprep.subr.mxu0 0.0
    %1359 = vmatpush2.msra.mxu0 0.0
    %1360 = vmatprep.subr.mxu0 0.0
    %1361 = vmatpush2.msra.mxu0 0.0
    %1362 = vmatprep.subr.mxu0 0.0
    %1363 = vmatpush2.msra.mxu0 0.0
    %1364 = vmatprep.subr.mxu0 0.0
    %1365 = vmatpush2.msra.mxu0 0.0
    %1366 = vmatprep.subr.mxu0 0.0
    %1367 = vmatpush2.msra.mxu0 0.0
    %1368 = vmatprep.subr.mxu0 0.0
    %1369 = vmatpush2.msra.mxu0 0.0
    %1370 = vmatprep.subr.mxu0 0.0
    %1371 = vmatpush2.msra.mxu0 0.0
    %1372 = vmatprep.subr.mxu0 0.0
    %1373 = vmatpush2.msra.mxu0 0.0
    %1374 = vmatprep.subr.mxu0 0.0
    %1375 = vmatpush2.msra.mxu0 0.0
    %1376 = vmatprep.subr.mxu0 0.0
    %1377 = vmatpush2.msra.mxu0 0.0
    %1378 = vmatprep.subr.mxu0 0.0
    %1379 = vmatpush2.msra.mxu0 0.0
    %1380 = vmatprep.subr.mxu0 0.0
    %1381 = vmatpush2.msra.mxu0 0.0
    %1382 = vmatprep.mubr.f32.mxu0 0.0
    %1383 = vmatmul.mubr.f32.gmra.mxu0 %v238
    %v1384 = vpop.f32.mrf.mxu0
    %v1385 = vadd.f32 0.0, %v1384
    %v1386 = vpop.f32.mrf.mxu0
    %v1387 = vadd.f32 0.0, %v1386
    %1388 = vdwg.mxu0
    %v1390 = vsel %vm97, %v1286, 0
    %v1393 = vsel %vm97, %v1287, 0
    %1395 = vmatprep.subr.mxu0 0.0
    %1396 = vmatpush1.msra.mxu0 0.0
    %1397 = vmatprep.subr.mxu0 0.0
    %1398 = vmatpush1.msra.mxu0 0.0
    %1399 = vmatprep.subr.mxu0 0.0
    %1400 = vmatpush1.msra.mxu0 0.0
    %1401 = vmatprep.subr.mxu0 0.0
    %1402 = vmatpush1.msra.mxu0 0.0
    %1403 = vmatprep.subr.mxu0 0.0
    %1404 = vmatpush1.msra.mxu0 0.0
    %1405 = vmatprep.subr.mxu0 0.0
    %1406 = vmatpush1.msra.mxu0 0.0
    %1407 = vmatprep.subr.mxu0 0.0
    %1408 = vmatpush1.msra.mxu0 0.0
    %1409 = vmatprep.subr.mxu0 0.0
    %1410 = vmatpush1.msra.mxu0 0.0
    %1411 = vmatprep.subr.mxu0 0.0
    %1412 = vmatpush1.msra.mxu0 0.0
    %1413 = vmatprep.subr.mxu0 0.0
    %1414 = vmatpush1.msra.mxu0 0.0
    %1415 = vmatprep.subr.mxu0 0.0
    %1416 = vmatpush1.msra.mxu0 0.0
    %1417 = vmatprep.subr.mxu0 0.0
    %1418 = vmatpush1.msra.mxu0 0.0
    %1419 = vmatprep.subr.mxu0 0.0
    %1420 = vmatpush1.msra.mxu0 0.0
    %1421 = vmatprep.subr.mxu0 0.0
    %1422 = vmatpush1.msra.mxu0 0.0
    %1423 = vmatprep.subr.mxu0 0.0
    %1424 = vmatpush1.msra.mxu0 0.0
    %1425 = vmatprep.subr.mxu0 %v1393
    %1426 = vmatpush1.msra.mxu0 %v1390
    %1427 = vmatprep.subr.mxu0 0.0
    %1428 = vmatpush2.msra.mxu0 0.0
    %1429 = vmatprep.subr.mxu0 0.0
    %1430 = vmatpush2.msra.mxu0 0.0
    %1431 = vmatprep.subr.mxu0 0.0
    %1432 = vmatpush2.msra.mxu0 0.0
    %1433 = vmatprep.subr.mxu0 0.0
    %1434 = vmatpush2.msra.mxu0 0.0
    %1435 = vmatprep.subr.mxu0 0.0
    %1436 = vmatpush2.msra.mxu0 0.0
    %1437 = vmatprep.subr.mxu0 0.0
    %1438 = vmatpush2.msra.mxu0 0.0
    %1439 = vmatprep.subr.mxu0 0.0
    %1440 = vmatpush2.msra.mxu0 0.0
    %1441 = vmatprep.subr.mxu0 0.0
    %1442 = vmatpush2.msra.mxu0 0.0
    %1443 = vmatprep.subr.mxu0 0.0
    %1444 = vmatpush2.msra.mxu0 0.0
    %1445 = vmatprep.subr.mxu0 0.0
    %1446 = vmatpush2.msra.mxu0 0.0
    %1447 = vmatprep.subr.mxu0 0.0
    %1448 = vmatpush2.msra.mxu0 0.0
    %1449 = vmatprep.subr.mxu0 0.0
    %1450 = vmatpush2.msra.mxu0 0.0
    %1451 = vmatprep.subr.mxu0 0.0
    %1452 = vmatpush2.msra.mxu0 0.0
    %1453 = vmatprep.subr.mxu0 0.0
    %1454 = vmatpush2.msra.mxu0 0.0
    %1455 = vmatprep.subr.mxu0 0.0
    %1456 = vmatpush2.msra.mxu0 0.0
    %1457 = vmatprep.subr.mxu0 0.0
    %1458 = vmatpush2.msra.mxu0 0.0
    %1459 = vmatprep.mubr.f32.mxu0 0.0
    %1460 = vmatmul.mubr.f32.gmra.mxu0 %v318
    %v1461 = vpop.f32.mrf.mxu0
    %v1462 = vadd.f32 %v1385, %v1461
    %v1463 = vpop.f32.mrf.mxu0
    %v1464 = vadd.f32 %v1387, %v1463
    %1465 = vdwg.mxu0
    %1466 = vrot.lane.b32.xlu0 %v1286, 127
    %v1467 = vpop.permute.xlu0 %1466
    %1468 = vrot.lane.b32.xlu0 %v1287, 127
    %v1469 = vpop.permute.xlu0 %1468
    %v1470 = vsel %vm401, %v1467, %v1469
    %v1471 = vsel %vm401, %v1469, %v1467
    %v1472 = vsel %vm413, %v1470, 0.0
    %v1473 = vsel %vm414, %v1471, 0.0
    %v1475 = vsel %vm97, %v1472, 0
    %v1478 = vsel %vm97, %v1473, 0
    %1480 = vmatprep.subr.mxu0 0.0
    %1481 = vmatpush1.msra.mxu0 0.0
    %1482 = vmatprep.subr.mxu0 0.0
    %1483 = vmatpush1.msra.mxu0 0.0
    %1484 = vmatprep.subr.mxu0 0.0
    %1485 = vmatpush1.msra.mxu0 0.0
    %1486 = vmatprep.subr.mxu0 0.0
    %1487 = vmatpush1.msra.mxu0 0.0
    %1488 = vmatprep.subr.mxu0 0.0
    %1489 = vmatpush1.msra.mxu0 0.0
    %1490 = vmatprep.subr.mxu0 0.0
    %1491 = vmatpush1.msra.mxu0 0.0
    %1492 = vmatprep.subr.mxu0 0.0
    %1493 = vmatpush1.msra.mxu0 0.0
    %1494 = vmatprep.subr.mxu0 0.0
    %1495 = vmatpush1.msra.mxu0 0.0
    %1496 = vmatprep.subr.mxu0 0.0
    %1497 = vmatpush1.msra.mxu0 0.0
    %1498 = vmatprep.subr.mxu0 0.0
    %1499 = vmatpush1.msra.mxu0 0.0
    %1500 = vmatprep.subr.mxu0 0.0
    %1501 = vmatpush1.msra.mxu0 0.0
    %1502 = vmatprep.subr.mxu0 0.0
    %1503 = vmatpush1.msra.mxu0 0.0
    %1504 = vmatprep.subr.mxu0 0.0
    %1505 = vmatpush1.msra.mxu0 0.0
    %1506 = vmatprep.subr.mxu0 0.0
    %1507 = vmatpush1.msra.mxu0 0.0
    %1508 = vmatprep.subr.mxu0 0.0
    %1509 = vmatpush1.msra.mxu0 0.0
    %1510 = vmatprep.subr.mxu0 %v1478
    %1511 = vmatpush1.msra.mxu0 %v1475
    %1512 = vmatprep.subr.mxu0 0.0
    %1513 = vmatpush2.msra.mxu0 0.0
    %1514 = vmatprep.subr.mxu0 0.0
    %1515 = vmatpush2.msra.mxu0 0.0
    %1516 = vmatprep.subr.mxu0 0.0
    %1517 = vmatpush2.msra.mxu0 0.0
    %1518 = vmatprep.subr.mxu0 0.0
    %1519 = vmatpush2.msra.mxu0 0.0
    %1520 = vmatprep.subr.mxu0 0.0
    %1521 = vmatpush2.msra.mxu0 0.0
    %1522 = vmatprep.subr.mxu0 0.0
    %1523 = vmatpush2.msra.mxu0 0.0
    %1524 = vmatprep.subr.mxu0 0.0
    %1525 = vmatpush2.msra.mxu0 0.0
    %1526 = vmatprep.subr.mxu0 0.0
    %1527 = vmatpush2.msra.mxu0 0.0
    %1528 = vmatprep.subr.mxu0 0.0
    %1529 = vmatpush2.msra.mxu0 0.0
    %1530 = vmatprep.subr.mxu0 0.0
    %1531 = vmatpush2.msra.mxu0 0.0
    %1532 = vmatprep.subr.mxu0 0.0
    %1533 = vmatpush2.msra.mxu0 0.0
    %1534 = vmatprep.subr.mxu0 0.0
    %1535 = vmatpush2.msra.mxu0 0.0
    %1536 = vmatprep.subr.mxu0 0.0
    %1537 = vmatpush2.msra.mxu0 0.0
    %1538 = vmatprep.subr.mxu0 0.0
    %1539 = vmatpush2.msra.mxu0 0.0
    %1540 = vmatprep.subr.mxu0 0.0
    %1541 = vmatpush2.msra.mxu0 0.0
    %1542 = vmatprep.subr.mxu0 0.0
    %1543 = vmatpush2.msra.mxu0 0.0
    %1544 = vmatprep.mubr.f32.mxu0 0.0
    %1545 = vmatmul.mubr.f32.gmra.mxu0 %v418
    %v1546 = vpop.f32.mrf.mxu0
    %v1547 = vadd.f32 0.0, %v1546
    %v1548 = vpop.f32.mrf.mxu0
    %v1549 = vadd.f32 0.0, %v1548
    %1550 = vdwg.mxu0
    %v1551 = vadd.f32 %v1462, %v1547
    %v1552 = vadd.f32 %v1464, %v1549
    %v1554 = vsel %vm97, %v1294, 0
    %v1557 = vsel %vm97, %v1295, 0
    %1559 = vmatprep.subr.mxu0 0.0
    %1560 = vmatpush1.msra.mxu0 0.0
    %1561 = vmatprep.subr.mxu0 0.0
    %1562 = vmatpush1.msra.mxu0 0.0
    %1563 = vmatprep.subr.mxu0 0.0
    %1564 = vmatpush1.msra.mxu0 0.0
    %1565 = vmatprep.subr.mxu0 0.0
    %1566 = vmatpush1.msra.mxu0 0.0
    %1567 = vmatprep.subr.mxu0 0.0
    %1568 = vmatpush1.msra.mxu0 0.0
    %1569 = vmatprep.subr.mxu0 0.0
    %1570 = vmatpush1.msra.mxu0 0.0
    %1571 = vmatprep.subr.mxu0 0.0
    %1572 = vmatpush1.msra.mxu0 0.0
    %1573 = vmatprep.subr.mxu0 0.0
    %1574 = vmatpush1.msra.mxu0 0.0
    %1575 = vmatprep.subr.mxu0 0.0
    %1576 = vmatpush1.msra.mxu0 0.0
    %1577 = vmatprep.subr.mxu0 0.0
    %1578 = vmatpush1.msra.mxu0 0.0
    %1579 = vmatprep.subr.mxu0 0.0
    %1580 = vmatpush1.msra.mxu0 0.0
    %1581 = vmatprep.subr.mxu0 0.0
    %1582 = vmatpush1.msra.mxu0 0.0
    %1583 = vmatprep.subr.mxu0 0.0
    %1584 = vmatpush1.msra.mxu0 0.0
    %1585 = vmatprep.subr.mxu0 0.0
    %1586 = vmatpush1.msra.mxu0 0.0
    %1587 = vmatprep.subr.mxu0 0.0
    %1588 = vmatpush1.msra.mxu0 0.0
    %1589 = vmatprep.subr.mxu0 %v1557
    %1590 = vmatpush1.msra.mxu0 %v1554
    %1591 = vmatprep.subr.mxu0 0.0
    %1592 = vmatpush2.msra.mxu0 0.0
    %1593 = vmatprep.subr.mxu0 0.0
    %1594 = vmatpush2.msra.mxu0 0.0
    %1595 = vmatprep.subr.mxu0 0.0
    %1596 = vmatpush2.msra.mxu0 0.0
    %1597 = vmatprep.subr.mxu0 0.0
    %1598 = vmatpush2.msra.mxu0 0.0
    %1599 = vmatprep.subr.mxu0 0.0
    %1600 = vmatpush2.msra.mxu0 0.0
    %1601 = vmatprep.subr.mxu0 0.0
    %1602 = vmatpush2.msra.mxu0 0.0
    %1603 = vmatprep.subr.mxu0 0.0
    %1604 = vmatpush2.msra.mxu0 0.0
    %1605 = vmatprep.subr.mxu0 0.0
    %1606 = vmatpush2.msra.mxu0 0.0
    %1607 = vmatprep.subr.mxu0 0.0
    %1608 = vmatpush2.msra.mxu0 0.0
    %1609 = vmatprep.subr.mxu0 0.0
    %1610 = vmatpush2.msra.mxu0 0.0
    %1611 = vmatprep.subr.mxu0 0.0
    %1612 = vmatpush2.msra.mxu0 0.0
    %1613 = vmatprep.subr.mxu0 0.0
    %1614 = vmatpush2.msra.mxu0 0.0
    %1615 = vmatprep.subr.mxu0 0.0
    %1616 = vmatpush2.msra.mxu0 0.0
    %1617 = vmatprep.subr.mxu0 0.0
    %1618 = vmatpush2.msra.mxu0 0.0
    %1619 = vmatprep.subr.mxu0 0.0
    %1620 = vmatpush2.msra.mxu0 0.0
    %1621 = vmatprep.subr.mxu0 0.0
    %1622 = vmatpush2.msra.mxu0 0.0
    %1623 = vmatprep.mubr.f32.mxu0 0.0
    %1624 = vmatmul.mubr.f32.gmra.mxu0 %v500
    %v1625 = vpop.f32.mrf.mxu0
    %v1626 = vadd.f32 0.0, %v1625
    %v1627 = vpop.f32.mrf.mxu0
    %v1628 = vadd.f32 0.0, %v1627
    %1629 = vdwg.mxu0
    %v1630 = vadd.f32 %v1551, %v1626
    %v1631 = vadd.f32 %v1552, %v1628
    %1632 = vrot.lane.b32.xlu0 %v1294, 1
    %v1633 = vpop.permute.xlu0 %1632
    %1634 = vrot.lane.b32.xlu0 %v1295, 1
    %v1635 = vpop.permute.xlu0 %1634
    %v1636 = vsel %vm221, %v1633, %v1635
    %v1637 = vsel %vm221, %v1635, %v1633
    %v1638 = vsel %vm233, %v1637, 0.0
    %v1639 = vsel %vm234, %v1636, 0.0
    %v1641 = vsel %vm97, %v1638, 0
    %v1644 = vsel %vm97, %v1639, 0
    %1646 = vmatprep.subr.mxu0 0.0
    %1647 = vmatpush1.msra.mxu0 0.0
    %1648 = vmatprep.subr.mxu0 0.0
    %1649 = vmatpush1.msra.mxu0 0.0
    %1650 = vmatprep.subr.mxu0 0.0
    %1651 = vmatpush1.msra.mxu0 0.0
    %1652 = vmatprep.subr.mxu0 0.0
    %1653 = vmatpush1.msra.mxu0 0.0
    %1654 = vmatprep.subr.mxu0 0.0
    %1655 = vmatpush1.msra.mxu0 0.0
    %1656 = vmatprep.subr.mxu0 0.0
    %1657 = vmatpush1.msra.mxu0 0.0
    %1658 = vmatprep.subr.mxu0 0.0
    %1659 = vmatpush1.msra.mxu0 0.0
    %1660 = vmatprep.subr.mxu0 0.0
    %1661 = vmatpush1.msra.mxu0 0.0
    %1662 = vmatprep.subr.mxu0 0.0
    %1663 = vmatpush1.msra.mxu0 0.0
    %1664 = vmatprep.subr.mxu0 0.0
    %1665 = vmatpush1.msra.mxu0 0.0
    %1666 = vmatprep.subr.mxu0 0.0
    %1667 = vmatpush1.msra.mxu0 0.0
    %1668 = vmatprep.subr.mxu0 0.0
    %1669 = vmatpush1.msra.mxu0 0.0
    %1670 = vmatprep.subr.mxu0 0.0
    %1671 = vmatpush1.msra.mxu0 0.0
    %1672 = vmatprep.subr.mxu0 0.0
    %1673 = vmatpush1.msra.mxu0 0.0
    %1674 = vmatprep.subr.mxu0 0.0
    %1675 = vmatpush1.msra.mxu0 0.0
    %1676 = vmatprep.subr.mxu0 %v1644
    %1677 = vmatpush1.msra.mxu0 %v1641
    %1678 = vmatprep.subr.mxu0 0.0
    %1679 = vmatpush2.msra.mxu0 0.0
    %1680 = vmatprep.subr.mxu0 0.0
    %1681 = vmatpush2.msra.mxu0 0.0
    %1682 = vmatprep.subr.mxu0 0.0
    %1683 = vmatpush2.msra.mxu0 0.0
    %1684 = vmatprep.subr.mxu0 0.0
    %1685 = vmatpush2.msra.mxu0 0.0
    %1686 = vmatprep.subr.mxu0 0.0
    %1687 = vmatpush2.msra.mxu0 0.0
    %1688 = vmatprep.subr.mxu0 0.0
    %1689 = vmatpush2.msra.mxu0 0.0
    %1690 = vmatprep.subr.mxu0 0.0
    %1691 = vmatpush2.msra.mxu0 0.0
    %1692 = vmatprep.subr.mxu0 0.0
    %1693 = vmatpush2.msra.mxu0 0.0
    %1694 = vmatprep.subr.mxu0 0.0
    %1695 = vmatpush2.msra.mxu0 0.0
    %1696 = vmatprep.subr.mxu0 0.0
    %1697 = vmatpush2.msra.mxu0 0.0
    %1698 = vmatprep.subr.mxu0 0.0
    %1699 = vmatpush2.msra.mxu0 0.0
    %1700 = vmatprep.subr.mxu0 0.0
    %1701 = vmatpush2.msra.mxu0 0.0
    %1702 = vmatprep.subr.mxu0 0.0
    %1703 = vmatpush2.msra.mxu0 0.0
    %1704 = vmatprep.subr.mxu0 0.0
    %1705 = vmatpush2.msra.mxu0 0.0
    %1706 = vmatprep.subr.mxu0 0.0
    %1707 = vmatpush2.msra.mxu0 0.0
    %1708 = vmatprep.subr.mxu0 0.0
    %1709 = vmatpush2.msra.mxu0 0.0
    %1710 = vmatprep.mubr.f32.mxu0 0.0
    %1711 = vmatmul.mubr.f32.gmra.mxu0 %v590
    %v1712 = vpop.f32.mrf.mxu0
    %v1713 = vadd.f32 0.0, %v1712
    %v1714 = vpop.f32.mrf.mxu0
    %v1715 = vadd.f32 0.0, %v1714
    %1716 = vdwg.mxu0
    %v1717 = vadd.f32 %v1630, %v1713
    %v1718 = vadd.f32 %v1631, %v1715
    %1719 = vrot.lane.b32.xlu0 %v1294, 127
    %v1720 = vpop.permute.xlu0 %1719
    %1721 = vrot.lane.b32.xlu0 %v1295, 127
    %v1722 = vpop.permute.xlu0 %1721
    %v1723 = vsel %vm401, %v1720, %v1722
    %v1724 = vsel %vm401, %v1722, %v1720
    %v1725 = vsel %vm413, %v1723, 0.0
    %v1726 = vsel %vm414, %v1724, 0.0
    %v1728 = vsel %vm97, %v1725, 0
    %v1731 = vsel %vm97, %v1726, 0
    %1733 = vmatprep.subr.mxu0 0.0
    %1734 = vmatpush1.msra.mxu0 0.0
    %1735 = vmatprep.subr.mxu0 0.0
    %1736 = vmatpush1.msra.mxu0 0.0
    %1737 = vmatprep.subr.mxu0 0.0
    %1738 = vmatpush1.msra.mxu0 0.0
    %1739 = vmatprep.subr.mxu0 0.0
    %1740 = vmatpush1.msra.mxu0 0.0
    %1741 = vmatprep.subr.mxu0 0.0
    %1742 = vmatpush1.msra.mxu0 0.0
    %1743 = vmatprep.subr.mxu0 0.0
    %1744 = vmatpush1.msra.mxu0 0.0
    %1745 = vmatprep.subr.mxu0 0.0
    %1746 = vmatpush1.msra.mxu0 0.0
    %1747 = vmatprep.subr.mxu0 0.0
    %1748 = vmatpush1.msra.mxu0 0.0
    %1749 = vmatprep.subr.mxu0 0.0
    %1750 = vmatpush1.msra.mxu0 0.0
    %1751 = vmatprep.subr.mxu0 0.0
    %1752 = vmatpush1.msra.mxu0 0.0
    %1753 = vmatprep.subr.mxu0 0.0
    %1754 = vmatpush1.msra.mxu0 0.0
    %1755 = vmatprep.subr.mxu0 0.0
    %1756 = vmatpush1.msra.mxu0 0.0
    %1757 = vmatprep.subr.mxu0 0.0
    %1758 = vmatpush1.msra.mxu0 0.0
    %1759 = vmatprep.subr.mxu0 0.0
    %1760 = vmatpush1.msra.mxu0 0.0
    %1761 = vmatprep.subr.mxu0 0.0
    %1762 = vmatpush1.msra.mxu0 0.0
    %1763 = vmatprep.subr.mxu0 %v1731
    %1764 = vmatpush1.msra.mxu0 %v1728
    %1765 = vmatprep.subr.mxu0 0.0
    %1766 = vmatpush2.msra.mxu0 0.0
    %1767 = vmatprep.subr.mxu0 0.0
    %1768 = vmatpush2.msra.mxu0 0.0
    %1769 = vmatprep.subr.mxu0 0.0
    %1770 = vmatpush2.msra.mxu0 0.0
    %1771 = vmatprep.subr.mxu0 0.0
    %1772 = vmatpush2.msra.mxu0 0.0
    %1773 = vmatprep.subr.mxu0 0.0
    %1774 = vmatpush2.msra.mxu0 0.0
    %1775 = vmatprep.subr.mxu0 0.0
    %1776 = vmatpush2.msra.mxu0 0.0
    %1777 = vmatprep.subr.mxu0 0.0
    %1778 = vmatpush2.msra.mxu0 0.0
    %1779 = vmatprep.subr.mxu0 0.0
    %1780 = vmatpush2.msra.mxu0 0.0
    %1781 = vmatprep.subr.mxu0 0.0
    %1782 = vmatpush2.msra.mxu0 0.0
    %1783 = vmatprep.subr.mxu0 0.0
    %1784 = vmatpush2.msra.mxu0 0.0
    %1785 = vmatprep.subr.mxu0 0.0
    %1786 = vmatpush2.msra.mxu0 0.0
    %1787 = vmatprep.subr.mxu0 0.0
    %1788 = vmatpush2.msra.mxu0 0.0
    %1789 = vmatprep.subr.mxu0 0.0
    %1790 = vmatpush2.msra.mxu0 0.0
    %1791 = vmatprep.subr.mxu0 0.0
    %1792 = vmatpush2.msra.mxu0 0.0
    %1793 = vmatprep.subr.mxu0 0.0
    %1794 = vmatpush2.msra.mxu0 0.0
    %1795 = vmatprep.subr.mxu0 0.0
    %1796 = vmatpush2.msra.mxu0 0.0
    %1797 = vmatprep.mubr.f32.mxu0 0.0
    %1798 = vmatmul.mubr.f32.gmra.mxu0 %v680
    %v1799 = vpop.f32.mrf.mxu0
    %v1800 = vadd.f32 0.0, %v1799
    %v1801 = vpop.f32.mrf.mxu0
    %v1802 = vadd.f32 0.0, %v1801
    %1803 = vdwg.mxu0
    %v1804 = vadd.f32 %v1717, %v1800
    %v1805 = vadd.f32 %v1718, %v1802
    %v1807 = vsel %vm97, %v1302, 0
    %v1810 = vsel %vm97, %v1303, 0
    %1812 = vmatprep.subr.mxu0 0.0
    %1813 = vmatpush1.msra.mxu0 0.0
    %1814 = vmatprep.subr.mxu0 0.0
    %1815 = vmatpush1.msra.mxu0 0.0
    %1816 = vmatprep.subr.mxu0 0.0
    %1817 = vmatpush1.msra.mxu0 0.0
    %1818 = vmatprep.subr.mxu0 0.0
    %1819 = vmatpush1.msra.mxu0 0.0
    %1820 = vmatprep.subr.mxu0 0.0
    %1821 = vmatpush1.msra.mxu0 0.0
    %1822 = vmatprep.subr.mxu0 0.0
    %1823 = vmatpush1.msra.mxu0 0.0
    %1824 = vmatprep.subr.mxu0 0.0
    %1825 = vmatpush1.msra.mxu0 0.0
    %1826 = vmatprep.subr.mxu0 0.0
    %1827 = vmatpush1.msra.mxu0 0.0
    %1828 = vmatprep.subr.mxu0 0.0
    %1829 = vmatpush1.msra.mxu0 0.0
    %1830 = vmatprep.subr.mxu0 0.0
    %1831 = vmatpush1.msra.mxu0 0.0
    %1832 = vmatprep.subr.mxu0 0.0
    %1833 = vmatpush1.msra.mxu0 0.0
    %1834 = vmatprep.subr.mxu0 0.0
    %1835 = vmatpush1.msra.mxu0 0.0
    %1836 = vmatprep.subr.mxu0 0.0
    %1837 = vmatpush1.msra.mxu0 0.0
    %1838 = vmatprep.subr.mxu0 0.0
    %1839 = vmatpush1.msra.mxu0 0.0
    %1840 = vmatprep.subr.mxu0 0.0
    %1841 = vmatpush1.msra.mxu0 0.0
    %1842 = vmatprep.subr.mxu0 %v1810
    %1843 = vmatpush1.msra.mxu0 %v1807
    %1844 = vmatprep.subr.mxu0 0.0
    %1845 = vmatpush2.msra.mxu0 0.0
    %1846 = vmatprep.subr.mxu0 0.0
    %1847 = vmatpush2.msra.mxu0 0.0
    %1848 = vmatprep.subr.mxu0 0.0
    %1849 = vmatpush2.msra.mxu0 0.0
    %1850 = vmatprep.subr.mxu0 0.0
    %1851 = vmatpush2.msra.mxu0 0.0
    %1852 = vmatprep.subr.mxu0 0.0
    %1853 = vmatpush2.msra.mxu0 0.0
    %1854 = vmatprep.subr.mxu0 0.0
    %1855 = vmatpush2.msra.mxu0 0.0
    %1856 = vmatprep.subr.mxu0 0.0
    %1857 = vmatpush2.msra.mxu0 0.0
    %1858 = vmatprep.subr.mxu0 0.0
    %1859 = vmatpush2.msra.mxu0 0.0
    %1860 = vmatprep.subr.mxu0 0.0
    %1861 = vmatpush2.msra.mxu0 0.0
    %1862 = vmatprep.subr.mxu0 0.0
    %1863 = vmatpush2.msra.mxu0 0.0
    %1864 = vmatprep.subr.mxu0 0.0
    %1865 = vmatpush2.msra.mxu0 0.0
    %1866 = vmatprep.subr.mxu0 0.0
    %1867 = vmatpush2.msra.mxu0 0.0
    %1868 = vmatprep.subr.mxu0 0.0
    %1869 = vmatpush2.msra.mxu0 0.0
    %1870 = vmatprep.subr.mxu0 0.0
    %1871 = vmatpush2.msra.mxu0 0.0
    %1872 = vmatprep.subr.mxu0 0.0
    %1873 = vmatpush2.msra.mxu0 0.0
    %1874 = vmatprep.subr.mxu0 0.0
    %1875 = vmatpush2.msra.mxu0 0.0
    %1876 = vmatprep.mubr.f32.mxu0 0.0
    %1877 = vmatmul.mubr.f32.gmra.mxu0 %v762
    %v1878 = vpop.f32.mrf.mxu0
    %v1879 = vadd.f32 0.0, %v1878
    %v1880 = vpop.f32.mrf.mxu0
    %v1881 = vadd.f32 0.0, %v1880
    %1882 = vdwg.mxu0
    %v1883 = vadd.f32 %v1804, %v1879
    %v1884 = vadd.f32 %v1805, %v1881
    %1885 = vrot.lane.b32.xlu0 %v1302, 1
    %v1886 = vpop.permute.xlu0 %1885
    %1887 = vrot.lane.b32.xlu0 %v1303, 1
    %v1888 = vpop.permute.xlu0 %1887
    %v1889 = vsel %vm221, %v1886, %v1888
    %v1890 = vsel %vm221, %v1888, %v1886
    %v1891 = vsel %vm233, %v1890, 0.0
    %v1892 = vsel %vm234, %v1889, 0.0
    %v1894 = vsel %vm97, %v1891, 0
    %v1897 = vsel %vm97, %v1892, 0
    %1899 = vmatprep.subr.mxu0 0.0
    %1900 = vmatpush1.msra.mxu0 0.0
    %1901 = vmatprep.subr.mxu0 0.0
    %1902 = vmatpush1.msra.mxu0 0.0
    %1903 = vmatprep.subr.mxu0 0.0
    %1904 = vmatpush1.msra.mxu0 0.0
    %1905 = vmatprep.subr.mxu0 0.0
    %1906 = vmatpush1.msra.mxu0 0.0
    %1907 = vmatprep.subr.mxu0 0.0
    %1908 = vmatpush1.msra.mxu0 0.0
    %1909 = vmatprep.subr.mxu0 0.0
    %1910 = vmatpush1.msra.mxu0 0.0
    %1911 = vmatprep.subr.mxu0 0.0
    %1912 = vmatpush1.msra.mxu0 0.0
    %1913 = vmatprep.subr.mxu0 0.0
    %1914 = vmatpush1.msra.mxu0 0.0
    %1915 = vmatprep.subr.mxu0 0.0
    %1916 = vmatpush1.msra.mxu0 0.0
    %1917 = vmatprep.subr.mxu0 0.0
    %1918 = vmatpush1.msra.mxu0 0.0
    %1919 = vmatprep.subr.mxu0 0.0
    %1920 = vmatpush1.msra.mxu0 0.0
    %1921 = vmatprep.subr.mxu0 0.0
    %1922 = vmatpush1.msra.mxu0 0.0
    %1923 = vmatprep.subr.mxu0 0.0
    %1924 = vmatpush1.msra.mxu0 0.0
    %1925 = vmatprep.subr.mxu0 0.0
    %1926 = vmatpush1.msra.mxu0 0.0
    %1927 = vmatprep.subr.mxu0 0.0
    %1928 = vmatpush1.msra.mxu0 0.0
    %1929 = vmatprep.subr.mxu0 %v1897
    %1930 = vmatpush1.msra.mxu0 %v1894
    %1931 = vmatprep.subr.mxu0 0.0
    %1932 = vmatpush2.msra.mxu0 0.0
    %1933 = vmatprep.subr.mxu0 0.0
    %1934 = vmatpush2.msra.mxu0 0.0
    %1935 = vmatprep.subr.mxu0 0.0
    %1936 = vmatpush2.msra.mxu0 0.0
    %1937 = vmatprep.subr.mxu0 0.0
    %1938 = vmatpush2.msra.mxu0 0.0
    %1939 = vmatprep.subr.mxu0 0.0
    %1940 = vmatpush2.msra.mxu0 0.0
    %1941 = vmatprep.subr.mxu0 0.0
    %1942 = vmatpush2.msra.mxu0 0.0
    %1943 = vmatprep.subr.mxu0 0.0
    %1944 = vmatpush2.msra.mxu0 0.0
    %1945 = vmatprep.subr.mxu0 0.0
    %1946 = vmatpush2.msra.mxu0 0.0
    %1947 = vmatprep.subr.mxu0 0.0
    %1948 = vmatpush2.msra.mxu0 0.0
    %1949 = vmatprep.subr.mxu0 0.0
    %1950 = vmatpush2.msra.mxu0 0.0
    %1951 = vmatprep.subr.mxu0 0.0
    %1952 = vmatpush2.msra.mxu0 0.0
    %1953 = vmatprep.subr.mxu0 0.0
    %1954 = vmatpush2.msra.mxu0 0.0
    %1955 = vmatprep.subr.mxu0 0.0
    %1956 = vmatpush2.msra.mxu0 0.0
    %1957 = vmatprep.subr.mxu0 0.0
    %1958 = vmatpush2.msra.mxu0 0.0
    %1959 = vmatprep.subr.mxu0 0.0
    %1960 = vmatpush2.msra.mxu0 0.0
    %1961 = vmatprep.subr.mxu0 0.0
    %1962 = vmatpush2.msra.mxu0 0.0
    %1963 = vmatprep.mubr.f32.mxu0 0.0
    %1964 = vmatmul.mubr.f32.gmra.mxu0 %v852
    %v1965 = vpop.f32.mrf.mxu0
    %v1966 = vadd.f32 0.0, %v1965
    %v1967 = vpop.f32.mrf.mxu0
    %v1968 = vadd.f32 0.0, %v1967
    %1969 = vdwg.mxu0
    %v1970 = vadd.f32 %v1883, %v1966
    %v1971 = vadd.f32 %v1884, %v1968
    %1972 = vrot.lane.b32.xlu0 %v1302, 127
    %v1973 = vpop.permute.xlu0 %1972
    %1974 = vrot.lane.b32.xlu0 %v1303, 127
    %v1975 = vpop.permute.xlu0 %1974
    %v1976 = vsel %vm401, %v1973, %v1975
    %v1977 = vsel %vm401, %v1975, %v1973
    %v1978 = vsel %vm413, %v1976, 0.0
    %v1979 = vsel %vm414, %v1977, 0.0
    %v1981 = vsel %vm97, %v1978, 0
    %v1984 = vsel %vm97, %v1979, 0
    %1986 = vmatprep.subr.mxu0 0.0
    %1987 = vmatpush1.msra.mxu0 0.0
    %1988 = vmatprep.subr.mxu0 0.0
    %1989 = vmatpush1.msra.mxu0 0.0
    %1990 = vmatprep.subr.mxu0 0.0
    %1991 = vmatpush1.msra.mxu0 0.0
    %1992 = vmatprep.subr.mxu0 0.0
    %1993 = vmatpush1.msra.mxu0 0.0
    %1994 = vmatprep.subr.mxu0 0.0
    %1995 = vmatpush1.msra.mxu0 0.0
    %1996 = vmatprep.subr.mxu0 0.0
    %1997 = vmatpush1.msra.mxu0 0.0
    %1998 = vmatprep.subr.mxu0 0.0
    %1999 = vmatpush1.msra.mxu0 0.0
    %2000 = vmatprep.subr.mxu0 0.0
    %2001 = vmatpush1.msra.mxu0 0.0
    %2002 = vmatprep.subr.mxu0 0.0
    %2003 = vmatpush1.msra.mxu0 0.0
    %2004 = vmatprep.subr.mxu0 0.0
    %2005 = vmatpush1.msra.mxu0 0.0
    %2006 = vmatprep.subr.mxu0 0.0
    %2007 = vmatpush1.msra.mxu0 0.0
    %2008 = vmatprep.subr.mxu0 0.0
    %2009 = vmatpush1.msra.mxu0 0.0
    %2010 = vmatprep.subr.mxu0 0.0
    %2011 = vmatpush1.msra.mxu0 0.0
    %2012 = vmatprep.subr.mxu0 0.0
    %2013 = vmatpush1.msra.mxu0 0.0
    %2014 = vmatprep.subr.mxu0 0.0
    %2015 = vmatpush1.msra.mxu0 0.0
    %2016 = vmatprep.subr.mxu0 %v1984
    %2017 = vmatpush1.msra.mxu0 %v1981
    %2018 = vmatprep.subr.mxu0 0.0
    %2019 = vmatpush2.msra.mxu0 0.0
    %2020 = vmatprep.subr.mxu0 0.0
    %2021 = vmatpush2.msra.mxu0 0.0
    %2022 = vmatprep.subr.mxu0 0.0
    %2023 = vmatpush2.msra.mxu0 0.0
    %2024 = vmatprep.subr.mxu0 0.0
    %2025 = vmatpush2.msra.mxu0 0.0
    %2026 = vmatprep.subr.mxu0 0.0
    %2027 = vmatpush2.msra.mxu0 0.0
    %2028 = vmatprep.subr.mxu0 0.0
    %2029 = vmatpush2.msra.mxu0 0.0
    %2030 = vmatprep.subr.mxu0 0.0
    %2031 = vmatpush2.msra.mxu0 0.0
    %2032 = vmatprep.subr.mxu0 0.0
    %2033 = vmatpush2.msra.mxu0 0.0
    %2034 = vmatprep.subr.mxu0 0.0
    %2035 = vmatpush2.msra.mxu0 0.0
    %2036 = vmatprep.subr.mxu0 0.0
    %2037 = vmatpush2.msra.mxu0 0.0
    %2038 = vmatprep.subr.mxu0 0.0
    %2039 = vmatpush2.msra.mxu0 0.0
    %2040 = vmatprep.subr.mxu0 0.0
    %2041 = vmatpush2.msra.mxu0 0.0
    %2042 = vmatprep.subr.mxu0 0.0
    %2043 = vmatpush2.msra.mxu0 0.0
    %2044 = vmatprep.subr.mxu0 0.0
    %2045 = vmatpush2.msra.mxu0 0.0
    %2046 = vmatprep.subr.mxu0 0.0
    %2047 = vmatpush2.msra.mxu0 0.0
    %2048 = vmatprep.subr.mxu0 0.0
    %2049 = vmatpush2.msra.mxu0 0.0
    %2050 = vmatprep.mubr.f32.mxu0 0.0
    %2051 = vmatmul.mubr.f32.gmra.mxu0 %v942
    %v2052 = vpop.f32.mrf.mxu0
    %v2053 = vadd.f32 0.0, %v2052
    %v2054 = vpop.f32.mrf.mxu0
    %v2055 = vadd.f32 0.0, %v2054
    %2056 = vdwg.mxu0
    %v2057 = vadd.f32 %v1970, %v2053
    %v2058 = vadd.f32 %v1971, %v2055
    %v2059 = vadd.f32 %v2057, %v1025
    %v2060 = vadd.f32 %v2058, %v1025
    %v2061 = vmax.f32 %v2059, 0.0
    %v2062 = vmax.f32 %v2060, 0.0
    %v2064 = vsel %vm97, %v2061, 0
    %v2067 = vsel %vm97, %v2062, 0
    %2069 = vmatprep.subr.mxu0 0.0
    %2070 = vmatpush1.msra.mxu0 0.0
    %2071 = vmatprep.subr.mxu0 0.0
    %2072 = vmatpush1.msra.mxu0 0.0
    %2073 = vmatprep.subr.mxu0 0.0
    %2074 = vmatpush1.msra.mxu0 0.0
    %2075 = vmatprep.subr.mxu0 0.0
    %2076 = vmatpush1.msra.mxu0 0.0
    %2077 = vmatprep.subr.mxu0 0.0
    %2078 = vmatpush1.msra.mxu0 0.0
    %2079 = vmatprep.subr.mxu0 0.0
    %2080 = vmatpush1.msra.mxu0 0.0
    %2081 = vmatprep.subr.mxu0 0.0
    %2082 = vmatpush1.msra.mxu0 0.0
    %2083 = vmatprep.subr.mxu0 0.0
    %2084 = vmatpush1.msra.mxu0 0.0
    %2085 = vmatprep.subr.mxu0 0.0
    %2086 = vmatpush1.msra.mxu0 0.0
    %2087 = vmatprep.subr.mxu0 0.0
    %2088 = vmatpush1.msra.mxu0 0.0
    %2089 = vmatprep.subr.mxu0 0.0
    %2090 = vmatpush1.msra.mxu0 0.0
    %2091 = vmatprep.subr.mxu0 0.0
    %2092 = vmatpush1.msra.mxu0 0.0
    %2093 = vmatprep.subr.mxu0 0.0
    %2094 = vmatpush1.msra.mxu0 0.0
    %2095 = vmatprep.subr.mxu0 0.0
    %2096 = vmatpush1.msra.mxu0 0.0
    %2097 = vmatprep.subr.mxu0 0.0
    %2098 = vmatpush1.msra.mxu0 0.0
    %2099 = vmatprep.subr.mxu0 %v2067
    %2100 = vmatpush1.msra.mxu0 %v2064
    %2101 = vmatprep.subr.mxu0 0.0
    %2102 = vmatpush2.msra.mxu0 0.0
    %2103 = vmatprep.subr.mxu0 0.0
    %2104 = vmatpush2.msra.mxu0 0.0
    %2105 = vmatprep.subr.mxu0 0.0
    %2106 = vmatpush2.msra.mxu0 0.0
    %2107 = vmatprep.subr.mxu0 0.0
    %2108 = vmatpush2.msra.mxu0 0.0
    %2109 = vmatprep.subr.mxu0 0.0
    %2110 = vmatpush2.msra.mxu0 0.0
    %2111 = vmatprep.subr.mxu0 0.0
    %2112 = vmatpush2.msra.mxu0 0.0
    %2113 = vmatprep.subr.mxu0 0.0
    %2114 = vmatpush2.msra.mxu0 0.0
    %2115 = vmatprep.subr.mxu0 0.0
    %2116 = vmatpush2.msra.mxu0 0.0
    %2117 = vmatprep.subr.mxu0 0.0
    %2118 = vmatpush2.msra.mxu0 0.0
    %2119 = vmatprep.subr.mxu0 0.0
    %2120 = vmatpush2.msra.mxu0 0.0
    %2121 = vmatprep.subr.mxu0 0.0
    %2122 = vmatpush2.msra.mxu0 0.0
    %2123 = vmatprep.subr.mxu0 0.0
    %2124 = vmatpush2.msra.mxu0 0.0
    %2125 = vmatprep.subr.mxu0 0.0
    %2126 = vmatpush2.msra.mxu0 0.0
    %2127 = vmatprep.subr.mxu0 0.0
    %2128 = vmatpush2.msra.mxu0 0.0
    %2129 = vmatprep.subr.mxu0 0.0
    %2130 = vmatpush2.msra.mxu0 0.0
    %2131 = vmatprep.subr.mxu0 0.0
    %2132 = vmatpush2.msra.mxu0 0.0
    %2133 = vmatprep.mubr.f32.mxu0 0.0
    %2134 = vmatmul.mubr.f32.gmra.mxu0 %v1037
    %v2135 = vpop.f32.mrf.mxu0
    %v2136 = vadd.f32 %v1034, %v2135
    %v2137 = vpop.f32.mrf.mxu0
    %v2138 = vadd.f32 %v1034, %v2137
    %2139 = vdwg.mxu0
    %v2141 = vcombine.high %v1205, %v1205
    %v2142 = vsel %vm97, %v1205, 0
    %v2144 = vsel %vm97, %v2141, 0
    %2146 = vmatprep.subr.mxu0 0.0
    %2147 = vmatpush1.msra.mxu0 0.0
    %2148 = vmatprep.subr.mxu0 0.0
    %2149 = vmatpush1.msra.mxu0 0.0
    %2150 = vmatprep.subr.mxu0 0.0
    %2151 = vmatpush1.msra.mxu0 0.0
    %2152 = vmatprep.subr.mxu0 0.0
    %2153 = vmatpush1.msra.mxu0 0.0
    %2154 = vmatprep.subr.mxu0 0.0
    %2155 = vmatpush1.msra.mxu0 0.0
    %2156 = vmatprep.subr.mxu0 0.0
    %2157 = vmatpush1.msra.mxu0 0.0
    %2158 = vmatprep.subr.mxu0 0.0
    %2159 = vmatpush1.msra.mxu0 0.0
    %2160 = vmatprep.subr.mxu0 0.0
    %2161 = vmatpush1.msra.mxu0 0.0
    %2162 = vmatprep.subr.mxu0 0.0
    %2163 = vmatpush1.msra.mxu0 0.0
    %2164 = vmatprep.subr.mxu0 0.0
    %2165 = vmatpush1.msra.mxu0 0.0
    %2166 = vmatprep.subr.mxu0 0.0
    %2167 = vmatpush1.msra.mxu0 0.0
    %2168 = vmatprep.subr.mxu0 0.0
    %2169 = vmatpush1.msra.mxu0 0.0
    %2170 = vmatprep.subr.mxu0 0.0
    %2171 = vmatpush1.msra.mxu0 0.0
    %2172 = vmatprep.subr.mxu0 0.0
    %2173 = vmatpush1.msra.mxu0 0.0
    %2174 = vmatprep.subr.mxu0 0.0
    %2175 = vmatpush1.msra.mxu0 0.0
    %2176 = vmatprep.subr.mxu0 %v2144
    %2177 = vmatpush1.msra.mxu0 %v2142
    %2178 = vmatprep.subr.mxu0 0.0
    %2179 = vmatpush2.msra.mxu0 0.0
    %2180 = vmatprep.subr.mxu0 0.0
    %2181 = vmatpush2.msra.mxu0 0.0
    %2182 = vmatprep.subr.mxu0 0.0
    %2183 = vmatpush2.msra.mxu0 0.0
    %2184 = vmatprep.subr.mxu0 0.0
    %2185 = vmatpush2.msra.mxu0 0.0
    %2186 = vmatprep.subr.mxu0 0.0
    %2187 = vmatpush2.msra.mxu0 0.0
    %2188 = vmatprep.subr.mxu0 0.0
    %2189 = vmatpush2.msra.mxu0 0.0
    %2190 = vmatprep.subr.mxu0 0.0
    %2191 = vmatpush2.msra.mxu0 0.0
    %2192 = vmatprep.subr.mxu0 0.0
    %2193 = vmatpush2.msra.mxu0 0.0
    %2194 = vmatprep.subr.mxu0 0.0
    %2195 = vmatpush2.msra.mxu0 0.0
    %2196 = vmatprep.subr.mxu0 0.0
    %2197 = vmatpush2.msra.mxu0 0.0
    %2198 = vmatprep.subr.mxu0 0.0
    %2199 = vmatpush2.msra.mxu0 0.0
    %2200 = vmatprep.subr.mxu0 0.0
    %2201 = vmatpush2.msra.mxu0 0.0
    %2202 = vmatprep.subr.mxu0 0.0
    %2203 = vmatpush2.msra.mxu0 0.0
    %2204 = vmatprep.subr.mxu0 0.0
    %2205 = vmatpush2.msra.mxu0 0.0
    %2206 = vmatprep.subr.mxu0 0.0
    %2207 = vmatpush2.msra.mxu0 0.0
    %2208 = vmatprep.subr.mxu0 0.0
    %2209 = vmatpush2.msra.mxu0 0.0
    %2210 = vmatprep.mubr.f32.mxu0 0.0
    %2211 = vmatmul.mubr.f32.gmra.mxu0 %v1123
    %v2212 = vpop.f32.mrf.mxu0
    %v2213 = vadd.f32 %v1118, %v2212
    %v2214 = vpop.f32.mrf.mxu0
    %v2215 = vadd.f32 %v1118, %v2214
    %2216 = vdwg.mxu0
    %v2217 = vadd.f32 %v2213, %v2136
    %v2218 = vadd.f32 %v2215, %v2138
    %s2219 = scalar_lea.vmem [#allocation2], 16
    %2220 = vst [vmem:[%s2219] sm:$0xff] %v2217
    %2221 = vst [vmem:[%s2219 + $0x8] sm:$0xff] %v2218
    // Predicated region
    $region30: #{tpu_custom_call.1} parent=1 // pred_check
      _
    $region31: #{tpu_custom_call.1} parent=1 // pred_check_branch
      %2223 = sbr.rel (0) target = $region33
    $region32: #{tpu_custom_call.1} parent=1 // pred_region
      %s2225 = ssub.s32 512, 512
      %2226 = vsyncadd [#allocation3], %s2225
      %s2227 = sshll.u32 [#allocation2], 4
      %s2228 = int_to_ptr.vmem [resolvable:$true] %s2227
      %2233 = dma.vmem_to_hbm [thread:$0]  %s2228, 512, %s7, [#allocation3], 256, 256, 16
    $region33: #{tpu_custom_call.1} parent=1 // pred_fallthru
      _
    // Predicated region
    $region34: #{tpu_custom_call.1} parent=1 // pred_check
      _
    $region35: #{tpu_custom_call.1} parent=1 // pred_check_branch
      %2235 = sbr.rel (0) target = $region37
    $region36: #{tpu_custom_call.1} parent=1 // pred_region
      %2236 = dma.done [#allocation3], 512
    $region37: #{tpu_custom_call.1} parent=1 // pred_fallthru
      _
    %2237 = vsyncpa [#allocation3], 1

</llo_original>
